<compile_context>
chip_gen: v7x
topology: tpu7x:2x2x1
jax: 0.10.0
libtpu: 0.0.40
codegen_flags: <defaults>
</compile_context>

<pallas_src>
import functools

import jax
import jax.numpy as jnp
from jax.experimental import pallas as pl
from jax.experimental.pallas import tpu as pltpu


# ---------------------------------------------------------------------------
# Fused kernel: conv1 -> conv2 -> conv3 (BN folded into weights), running max
# over points, then (last tile only) +b3 / ReLU and the fc1..fc3 tail.
# ---------------------------------------------------------------------------
def _stn_kernel(x_ref,
                w1_ref, b1_ref,
                w2_ref, b2_ref,
                w3_ref, b3_ref,
                wf1_ref, bf1_ref,
                wf2_ref, bf2_ref,
                wf3_ref, bf3_ref, ident_ref,
                out_ref,
                g_ref,
                *, n_points, n_tiles):
    bb, tn, k = x_ref.shape            # static block shape
    n_idx = pl.program_id(1)

    @pl.when(n_idx == 0)
    def _():
        # Pre-activation running max -> -inf is the identity.
        g_ref[...] = jnp.full_like(g_ref, -jnp.inf)

    # [bb, tn, k] -> [bb*tn, k]; x is already bf16 (cast fused with the
    # wrapper transpose).  All matmuls: bf16 inputs, f32 accumulation.
    x = x_ref[...].reshape(bb * tn, k)

    h = jnp.dot(x, w1_ref[...], preferred_element_type=jnp.float32)        # [R, 64]
    h = jnp.maximum(h + b1_ref[...], 0.0)

    h = jnp.dot(h.astype(jnp.bfloat16), w2_ref[...],
                preferred_element_type=jnp.float32)                        # [R, 128]
    h = jnp.maximum(h + b2_ref[...], 0.0)

    h = jnp.dot(h.astype(jnp.bfloat16), w3_ref[...],
                preferred_element_type=jnp.float32)                        # [R, 1024]
    # conv3 bias + ReLU are deferred past the max (applied in the finalize).
    h = h.reshape(bb, tn, -1)

    if n_points % tn != 0:
        # Ragged last point tile: mask invalid rows with -inf (pre-activation
        # values can be negative, so 0 is NOT a safe fill here).
        @pl.when(n_idx == n_tiles - 1)
        def _():
            t = jax.lax.broadcasted_iota(jnp.int32, (1, tn, 1), 1)
            valid = (n_idx * tn + t) < n_points
            masked = jnp.where(valid, h, -jnp.inf)
            g_ref[...] = jnp.maximum(g_ref[...], jnp.max(masked, axis=1))

        @pl.when(n_idx < n_tiles - 1)
        def _():
            g_ref[...] = jnp.maximum(g_ref[...], jnp.max(h, axis=1))
    else:
        g_ref[...] = jnp.maximum(g_ref[...], jnp.max(h, axis=1))

    # Finalize: conv3 bias + ReLU on the pooled features, then the fc tail.
    @pl.when(n_idx == n_tiles - 1)
    def _():
        g = jnp.maximum(g_ref[...] + b3_ref[...], 0.0)                     # [bb, 1024]

        f = jnp.dot(g.astype(jnp.bfloat16), wf1_ref[...],
                    preferred_element_type=jnp.float32)                    # [bb, 512]
        f = jnp.maximum(f + bf1_ref[...], 0.0)

        f = jnp.dot(f.astype(jnp.bfloat16), wf2_ref[...],
                    preferred_element_type=jnp.float32)                    # [bb, 256]
        f = jnp.maximum(f + bf2_ref[...], 0.0)

        f = jnp.dot(f.astype(jnp.bfloat16), wf3_ref[...],
                    preferred_element_type=jnp.float32)                    # [bb, k*k]
        out_ref[...] = f + bf3_ref[...] + ident_ref[...]


def _select_tiling(B, N):
    """Pick (bb, tn, vmem_limit) per TPU generation.

    v5e / v6e: 128 MiB physical VMEM -> bigger tiles (~4096 rows/step) and a
    generous scoped limit.  v7x: 64 MiB per TensorCore -> moderate tiles.
    """
    try:
        vmem_bytes = pltpu.get_tpu_info().vmem_capacity_bytes
    except Exception:  # conservative fallback
        vmem_bytes = 64 * 1024 * 1024

    if vmem_bytes >= 96 * 1024 * 1024:          # v5e / v6e
        bb, tn, vmem_limit = 16, 256, 80 * 1024 * 1024
    else:                                       # v7x (64 MiB per TC)
        bb, tn, vmem_limit = 8, 256, 48 * 1024 * 1024

    bb = min(bb, B)
    tn = min(tn, N)
    # Keep >= 2 batch blocks whenever B allows it, so the "parallel" axis can
    # be sharded across both TensorCores on v7x (harmless elsewhere).
    if B >= 16:
        bb = min(bb, max(8, ((B + 1) // 2 + 7) // 8 * 8))
    return bb, tn, vmem_limit


def stnkd_forward(x_bkn, params, k):
    """x_bkn: [B, k, N] float32 (PyTorch layout).  Returns [B, k, k] float32."""
    (w1, b1, w2, b2, w3, b3,
     wf1, bf1, wf2, bf2, wf3, bf3, ident) = params
    B, _, N = x_bkn.shape
    c3 = w3.shape[1]
    kk = k * k

    # Points-major layout (channels in the 128-lane minor dim), bf16 cast
    # fused with the transpose to halve x's HBM->VMEM DMA bytes.
    x_bnk = jnp.transpose(x_bkn, (0, 2, 1)).astype(jnp.bfloat16)           # [B, N, k]

    bb, tn, vmem_limit = _select_tiling(B, N)
    nb = pl.cdiv(B, bb)
    nn = pl.cdiv(N, tn)

    const = lambda b, n: (0, 0)   # weights / biases / identity: single block
    in_specs = [
        pl.BlockSpec((bb, tn, k), lambda b, n: (b, n, 0)),
        pl.BlockSpec(w1.shape, const), pl.BlockSpec(b1.shape, const),
        pl.BlockSpec(w2.shape, const), pl.BlockSpec(b2.shape, const),
        pl.BlockSpec(w3.shape, const), pl.BlockSpec(b3.shape, const),
        pl.BlockSpec(wf1.shape, const), pl.BlockSpec(bf1.shape, const),
        pl.BlockSpec(wf2.shape, const), pl.BlockSpec(bf2.shape, const),
        pl.BlockSpec(wf3.shape, const), pl.BlockSpec(bf3.shape, const),
        pl.BlockSpec(ident.shape, const),
    ]

    out = pl.pallas_call(
        functools.partial(_stn_kernel, n_points=N, n_tiles=nn),
        out_shape=jax.ShapeDtypeStruct((B, kk), jnp.float32),
        grid=(nb, nn),
        in_specs=in_specs,
        out_specs=pl.BlockSpec((bb, kk), lambda b, n: (b, 0)),
        scratch_shapes=[pltpu.VMEM((bb, c3), jnp.float32)],
        compiler_params=pltpu.CompilerParams(
            dimension_semantics=("parallel", "arbitrary"),
            vmem_limit_bytes=vmem_limit),
    )(x_bnk, w1, b1, w2, b2, w3, b3, wf1, bf1, wf2, bf2, wf3, bf3, ident)

    return out.reshape(B, k, k)


def make_params(key, k):
    """Deterministic synthetic parameters with eval-mode BatchNorm pre-folded.

      scale = gamma / sqrt(running_var + eps)   -> folded into the weight
      bias  = beta + (conv_bias - running_mean) * scale
    Weights are stored in bf16 (native MXU input dtype); biases / identity
    stay f32.
    """
    # TODO(synk): training-mode BatchNorm (batch statistics) is not modeled;
    # eval-mode folded affine is used, matching inference semantics.
    dims = [(k, 64), (64, 128), (128, 1024), (1024, 512), (512, 256), (256, k * k)]
    keys = jax.random.split(key, 3 * len(dims))
    params = []
    for i, (cin, cout) in enumerate(dims):
        kw, ks, kb = keys[3 * i], keys[3 * i + 1], keys[3 * i + 2]
        w = jax.random.normal(kw, (cin, cout), jnp.float32) * 0.05
        bias = 0.1 * jax.random.normal(kb, (1, cout), jnp.float32)
        if i < len(dims) - 1:
            scale = 1.0 + 0.1 * jax.random.normal(ks, (1, cout), jnp.float32)
            w = w * scale                       # fold BN scale into the weight
        params.append(w.astype(jnp.bfloat16))
        params.append(bias)
    ident = jnp.eye(k, dtype=jnp.float32).reshape(1, k * k)
    params.append(ident)
    return params


def stnkd_reference(x_bkn, params, k):
    """Pure-JAX (f32) reference using the same (bf16-rounded, BN-folded) weights."""
    (w1, b1, w2, b2, w3, b3,
     wf1, bf1, wf2, bf2, wf3, bf3, ident) = [p.astype(jnp.float32) for p in params]
    x = jnp.transpose(x_bkn, (0, 2, 1)).astype(jnp.float32)                # [B, N, k]
    h = jnp.maximum(x @ w1 + b1, 0.0)
    h = jnp.maximum(h @ w2 + b2, 0.0)
    h = jnp.maximum(h @ w3 + b3, 0.0)
    g = jnp.max(h, axis=1)                                                 # [B, 1024]
    f = jnp.maximum(g @ wf1 + bf1, 0.0)
    f = jnp.maximum(f @ wf2 + bf2, 0.0)
    f = f @ wf3 + bf3 + ident
    return f.reshape(-1, k, k)


if __name__ == "__main__":
    B, k, N = 2, 4, 16
    key = jax.random.PRNGKey(0)
    k_x, k_p = jax.random.split(key)
    x = jax.random.normal(k_x, (B, k, N), jnp.float32)                     # PyTorch [B, k, N]
    params = make_params(k_p, k)

    out = stnkd_forward(x, params, k)
    out = jax.block_until_ready(out)

    ref = stnkd_reference(x, params, k)
    assert out.shape == (B, k, k)
    # bf16 matmul operands in the kernel -> loosened tolerance vs f32 reference.
    assert jnp.allclose(out, ref, atol=5e-2, rtol=5e-2), "mismatch vs reference"
    print("KERNEL_OK")
</pallas_src>

<mosaic_0001>
module attributes {stable_mosaic.version = 11 : i64} {
  func.func @_stn_kernel(%arg0: i32, %arg1: i32, %arg2: memref<2x16x4xbf16, #tpu.memory_space<vmem>>, %arg3: memref<4x64xbf16, #tpu.memory_space<vmem>>, %arg4: memref<1x64xf32, #tpu.memory_space<vmem>>, %arg5: memref<64x128xbf16, #tpu.memory_space<vmem>>, %arg6: memref<1x128xf32, #tpu.memory_space<vmem>>, %arg7: memref<128x1024xbf16, #tpu.memory_space<vmem>>, %arg8: memref<1x1024xf32, #tpu.memory_space<vmem>>, %arg9: memref<1024x512xbf16, #tpu.memory_space<vmem>>, %arg10: memref<1x512xf32, #tpu.memory_space<vmem>>, %arg11: memref<512x256xbf16, #tpu.memory_space<vmem>>, %arg12: memref<1x256xf32, #tpu.memory_space<vmem>>, %arg13: memref<256x16xbf16, #tpu.memory_space<vmem>>, %arg14: memref<1x16xf32, #tpu.memory_space<vmem>>, %arg15: memref<1x16xf32, #tpu.memory_space<vmem>>, %arg16: memref<2x16xf32, #tpu.memory_space<vmem>>, %arg17: memref<2x1024xf32, #tpu.memory_space<vmem>>) attributes {dimension_semantics = [#tpu.dimension_semantics<parallel>, #tpu.dimension_semantics<arbitrary>], iteration_bounds = array<i64: 1, 1>, scalar_prefetch = 0 : i64, scratch_operands = 1 : i64, tpu.core_type = #tpu.core_type<tc>, window_params = [{transform_indices = @transform_0, window_bounds = array<i64: 2, 16, 4>}, {pipeline_mode = #tpu.pipeline_mode<synchronous>, transform_indices = @transform_1, window_bounds = array<i64: 4, 64>}, {pipeline_mode = #tpu.pipeline_mode<synchronous>, transform_indices = @transform_2, window_bounds = array<i64: 1, 64>}, {pipeline_mode = #tpu.pipeline_mode<synchronous>, transform_indices = @transform_3, window_bounds = array<i64: 64, 128>}, {pipeline_mode = #tpu.pipeline_mode<synchronous>, transform_indices = @transform_4, window_bounds = array<i64: 1, 128>}, {pipeline_mode = #tpu.pipeline_mode<synchronous>, transform_indices = @transform_5, window_bounds = array<i64: 128, 1024>}, {pipeline_mode = #tpu.pipeline_mode<synchronous>, transform_indices = @transform_6, window_bounds = array<i64: 1, 1024>}, {pipeline_mode = #tpu.pipeline_mode<synchronous>, transform_indices = @transform_7, window_bounds = array<i64: 1024, 512>}, {pipeline_mode = #tpu.pipeline_mode<synchronous>, transform_indices = @transform_8, window_bounds = array<i64: 1, 512>}, {pipeline_mode = #tpu.pipeline_mode<synchronous>, transform_indices = @transform_9, window_bounds = array<i64: 512, 256>}, {pipeline_mode = #tpu.pipeline_mode<synchronous>, transform_indices = @transform_10, window_bounds = array<i64: 1, 256>}, {pipeline_mode = #tpu.pipeline_mode<synchronous>, transform_indices = @transform_11, window_bounds = array<i64: 256, 16>}, {pipeline_mode = #tpu.pipeline_mode<synchronous>, transform_indices = @transform_12, window_bounds = array<i64: 1, 16>}, {pipeline_mode = #tpu.pipeline_mode<synchronous>, transform_indices = @transform_13, window_bounds = array<i64: 1, 16>}, {transform_indices = @transform_14, window_bounds = array<i64: 2, 16>}]} {
    %c0_i32 = arith.constant 0 : i32
    %0 = arith.cmpi eq, %arg1, %c0_i32 : i32
    %1 = arith.extui %0 : i1 to i32
    %c0_i32_0 = arith.constant 0 : i32
    %2 = arith.cmpi ne, %1, %c0_i32_0 : i32
    scf.if %2 {
      %cst_24 = arith.constant 0xFF800000 : f32
      %31 = vector.broadcast %cst_24 : f32 to vector<2x1024xf32>
      %c0_25 = arith.constant 0 : index
      %c0_26 = arith.constant 0 : index
      %32 = vector.load %arg17[%c0_25, %c0_26] : memref<2x1024xf32, #tpu.memory_space<vmem>>, vector<2x1024xf32>
      tpu.vector_store %arg17[%c0_25, %c0_26], %31 {strides = array<i32>} : memref<2x1024xf32, #tpu.memory_space<vmem>>, vector<2x1024xf32>,
    } else {
    }
    %c0 = arith.constant 0 : index
    %c0_1 = arith.constant 0 : index
    %c0_2 = arith.constant 0 : index
    %3 = vector.load %arg2[%c0, %c0_1, %c0_2] : memref<2x16x4xbf16, #tpu.memory_space<vmem>>, vector<2x16x4xbf16>
    %4 = vector.shape_cast %3 : vector<2x16x4xbf16> to vector<32x4xbf16>
    %c0_3 = arith.constant 0 : index
    %c0_4 = arith.constant 0 : index
    %5 = vector.load %arg3[%c0_3, %c0_4] : memref<4x64xbf16, #tpu.memory_space<vmem>>, vector<4x64xbf16>
    %cst = arith.constant dense<0.000000e+00> : vector<32x64xf32>
    %6 = tpu.matmul %4, %5, %cst {dimension_numbers = #tpu.dot_dimension_numbers<[1], [0], [0], [1], [0, 0, 1, 1], [], []>} : vector<32x4xbf16>, vector<4x64xbf16>, vector<32x64xf32> -> vector<32x64xf32>
    %c0_5 = arith.constant 0 : index
    %c0_6 = arith.constant 0 : index
    %7 = vector.load %arg4[%c0_5, %c0_6] : memref<1x64xf32, #tpu.memory_space<vmem>>, vector<1x64xf32>
    %8 = vector.broadcast %7 : vector<1x64xf32> to vector<32x64xf32>
    %9 = arith.addf %6, %8 : vector<32x64xf32>
    %cst_7 = arith.constant 0.000000e+00 : f32
    %10 = vector.broadcast %cst_7 : f32 to vector<32x64xf32>
    %11 = arith.maximumf %9, %10 : vector<32x64xf32>
    %12 = arith.truncf %11 : vector<32x64xf32> to vector<32x64xbf16>
    %c0_8 = arith.constant 0 : index
    %c0_9 = arith.constant 0 : index
    %13 = vector.load %arg5[%c0_8, %c0_9] : memref<64x128xbf16, #tpu.memory_space<vmem>>, vector<64x128xbf16>
    %cst_10 = arith.constant dense<0.000000e+00> : vector<32x128xf32>
    %14 = tpu.matmul %12, %13, %cst_10 {dimension_numbers = #tpu.dot_dimension_numbers<[1], [0], [0], [1], [0, 0, 1, 1], [], []>} : vector<32x64xbf16>, vector<64x128xbf16>, vector<32x128xf32> -> vector<32x128xf32>
    %c0_11 = arith.constant 0 : index
    %c0_12 = arith.constant 0 : index
    %15 = vector.load %arg6[%c0_11, %c0_12] : memref<1x128xf32, #tpu.memory_space<vmem>>, vector<1x128xf32>
    %16 = vector.broadcast %15 : vector<1x128xf32> to vector<32x128xf32>
    %17 = arith.addf %14, %16 : vector<32x128xf32>
    %cst_13 = arith.constant 0.000000e+00 : f32
    %18 = vector.broadcast %cst_13 : f32 to vector<32x128xf32>
    %19 = arith.maximumf %17, %18 : vector<32x128xf32>
    %20 = arith.truncf %19 : vector<32x128xf32> to vector<32x128xbf16>
    %c0_14 = arith.constant 0 : index
    %c0_15 = arith.constant 0 : index
    %21 = vector.load %arg7[%c0_14, %c0_15] : memref<128x1024xbf16, #tpu.memory_space<vmem>>, vector<128x1024xbf16>
    %cst_16 = arith.constant dense<0.000000e+00> : vector<32x1024xf32>
    %22 = tpu.matmul %20, %21, %cst_16 {dimension_numbers = #tpu.dot_dimension_numbers<[1], [0], [0], [1], [0, 0, 1, 1], [], []>} : vector<32x128xbf16>, vector<128x1024xbf16>, vector<32x1024xf32> -> vector<32x1024xf32>
    %23 = vector.shape_cast %22 : vector<32x1024xf32> to vector<2x16x1024xf32>
    %c0_17 = arith.constant 0 : index
    %c0_18 = arith.constant 0 : index
    %24 = vector.load %arg17[%c0_17, %c0_18] : memref<2x1024xf32, #tpu.memory_space<vmem>>, vector<2x1024xf32>
    %cst_19 = arith.constant dense<0xFF800000> : vector<2x1024xf32>
    %25 = vector.multi_reduction <maximumf>, %23, %cst_19 [1] : vector<2x16x1024xf32> to vector<2x1024xf32>
    %26 = arith.maximumf %24, %25 : vector<2x1024xf32>
    %c0_20 = arith.constant 0 : index
    %c0_21 = arith.constant 0 : index
    %27 = vector.load %arg17[%c0_20, %c0_21] : memref<2x1024xf32, #tpu.memory_space<vmem>>, vector<2x1024xf32>
    tpu.vector_store %arg17[%c0_20, %c0_21], %26 {strides = array<i32>} : memref<2x1024xf32, #tpu.memory_space<vmem>>, vector<2x1024xf32>,
    %c0_i32_22 = arith.constant 0 : i32
    %28 = arith.cmpi eq, %arg1, %c0_i32_22 : i32
    %29 = arith.extui %28 : i1 to i32
    %c0_i32_23 = arith.constant 0 : i32
    %30 = arith.cmpi ne, %29, %c0_i32_23 : i32
    scf.if %30 {
      %c0_24 = arith.constant 0 : index
      %c0_25 = arith.constant 0 : index
      %31 = vector.load %arg17[%c0_24, %c0_25] : memref<2x1024xf32, #tpu.memory_space<vmem>>, vector<2x1024xf32>
      %c0_26 = arith.constant 0 : index
      %c0_27 = arith.constant 0 : index
      %32 = vector.load %arg8[%c0_26, %c0_27] : memref<1x1024xf32, #tpu.memory_space<vmem>>, vector<1x1024xf32>
      %33 = vector.broadcast %32 : vector<1x1024xf32> to vector<2x1024xf32>
      %34 = arith.addf %31, %33 : vector<2x1024xf32>
      %cst_28 = arith.constant 0.000000e+00 : f32
      %35 = vector.broadcast %cst_28 : f32 to vector<2x1024xf32>
      %36 = arith.maximumf %34, %35 : vector<2x1024xf32>
      %37 = arith.truncf %36 : vector<2x1024xf32> to vector<2x1024xbf16>
      %c0_29 = arith.constant 0 : index
      %c0_30 = arith.constant 0 : index
      %38 = vector.load %arg9[%c0_29, %c0_30] : memref<1024x512xbf16, #tpu.memory_space<vmem>>, vector<1024x512xbf16>
      %cst_31 = arith.constant dense<0.000000e+00> : vector<2x512xf32>
      %39 = tpu.matmul %37, %38, %cst_31 {dimension_numbers = #tpu.dot_dimension_numbers<[1], [0], [0], [1], [0, 0, 1, 1], [], []>} : vector<2x1024xbf16>, vector<1024x512xbf16>, vector<2x512xf32> -> vector<2x512xf32>
      %c0_32 = arith.constant 0 : index
      %c0_33 = arith.constant 0 : index
      %40 = vector.load %arg10[%c0_32, %c0_33] : memref<1x512xf32, #tpu.memory_space<vmem>>, vector<1x512xf32>
      %41 = vector.broadcast %40 : vector<1x512xf32> to vector<2x512xf32>
      %42 = arith.addf %39, %41 : vector<2x512xf32>
      %cst_34 = arith.constant 0.000000e+00 : f32
      %43 = vector.broadcast %cst_34 : f32 to vector<2x512xf32>
      %44 = arith.maximumf %42, %43 : vector<2x512xf32>
      %45 = arith.truncf %44 : vector<2x512xf32> to vector<2x512xbf16>
      %c0_35 = arith.constant 0 : index
      %c0_36 = arith.constant 0 : index
      %46 = vector.load %arg11[%c0_35, %c0_36] : memref<512x256xbf16, #tpu.memory_space<vmem>>, vector<512x256xbf16>
      %cst_37 = arith.constant dense<0.000000e+00> : vector<2x256xf32>
      %47 = tpu.matmul %45, %46, %cst_37 {dimension_numbers = #tpu.dot_dimension_numbers<[1], [0], [0], [1], [0, 0, 1, 1], [], []>} : vector<2x512xbf16>, vector<512x256xbf16>, vector<2x256xf32> -> vector<2x256xf32>
      %c0_38 = arith.constant 0 : index
      %c0_39 = arith.constant 0 : index
      %48 = vector.load %arg12[%c0_38, %c0_39] : memref<1x256xf32, #tpu.memory_space<vmem>>, vector<1x256xf32>
      %49 = vector.broadcast %48 : vector<1x256xf32> to vector<2x256xf32>
      %50 = arith.addf %47, %49 : vector<2x256xf32>
      %cst_40 = arith.constant 0.000000e+00 : f32
      %51 = vector.broadcast %cst_40 : f32 to vector<2x256xf32>
      %52 = arith.maximumf %50, %51 : vector<2x256xf32>
      %53 = arith.truncf %52 : vector<2x256xf32> to vector<2x256xbf16>
      %c0_41 = arith.constant 0 : index
      %c0_42 = arith.constant 0 : index
      %54 = vector.load %arg13[%c0_41, %c0_42] : memref<256x16xbf16, #tpu.memory_space<vmem>>, vector<256x16xbf16>
      %cst_43 = arith.constant dense<0.000000e+00> : vector<2x16xf32>
      %55 = tpu.matmul %53, %54, %cst_43 {dimension_numbers = #tpu.dot_dimension_numbers<[1], [0], [0], [1], [0, 0, 1, 1], [], []>} : vector<2x256xbf16>, vector<256x16xbf16>, vector<2x16xf32> -> vector<2x16xf32>
      %c0_44 = arith.constant 0 : index
      %c0_45 = arith.constant 0 : index
      %56 = vector.load %arg14[%c0_44, %c0_45] : memref<1x16xf32, #tpu.memory_space<vmem>>, vector<1x16xf32>
      %57 = vector.broadcast %56 : vector<1x16xf32> to vector<2x16xf32>
      %58 = arith.addf %55, %57 : vector<2x16xf32>
      %c0_46 = arith.constant 0 : index
      %c0_47 = arith.constant 0 : index
      %59 = vector.load %arg15[%c0_46, %c0_47] : memref<1x16xf32, #tpu.memory_space<vmem>>, vector<1x16xf32>
      %60 = vector.broadcast %59 : vector<1x16xf32> to vector<2x16xf32>
      %61 = arith.addf %58, %60 : vector<2x16xf32>
      %c0_48 = arith.constant 0 : index
      %c0_49 = arith.constant 0 : index
      %62 = vector.load %arg16[%c0_48, %c0_49] : memref<2x16xf32, #tpu.memory_space<vmem>>, vector<2x16xf32>
      tpu.vector_store %arg16[%c0_48, %c0_49], %61 {strides = array<i32>} : memref<2x16xf32, #tpu.memory_space<vmem>>, vector<2x16xf32>,
    } else {
    }
    return
  }
  func.func @transform_0(%arg0: i32, %arg1: i32) -> (i32, i32, i32) {
    %c0_i32 = arith.constant 0 : i32
    %c0_i32_0 = arith.constant 0 : i32
    return %arg0, %arg1, %c0_i32 : i32, i32, i32
  }
  func.func @transform_1(%arg0: i32, %arg1: i32) -> (i32, i32) {
    %c0_i32 = arith.constant 0 : i32
    %c0_i32_0 = arith.constant 0 : i32
    %c0_i32_1 = arith.constant 0 : i32
    return %c0_i32, %c0_i32_0 : i32, i32
  }
  func.func @transform_2(%arg0: i32, %arg1: i32) -> (i32, i32) {
    %c0_i32 = arith.constant 0 : i32
    %c0_i32_0 = arith.constant 0 : i32
    %c0_i32_1 = arith.constant 0 : i32
    return %c0_i32, %c0_i32_0 : i32, i32
  }
  func.func @transform_3(%arg0: i32, %arg1: i32) -> (i32, i32) {
    %c0_i32 = arith.constant 0 : i32
    %c0_i32_0 = arith.constant 0 : i32
    %c0_i32_1 = arith.constant 0 : i32
    return %c0_i32, %c0_i32_0 : i32, i32
  }
  func.func @transform_4(%arg0: i32, %arg1: i32) -> (i32, i32) {
    %c0_i32 = arith.constant 0 : i32
    %c0_i32_0 = arith.constant 0 : i32
    %c0_i32_1 = arith.constant 0 : i32
    return %c0_i32, %c0_i32_0 : i32, i32
  }
  func.func @transform_5(%arg0: i32, %arg1: i32) -> (i32, i32) {
    %c0_i32 = arith.constant 0 : i32
    %c0_i32_0 = arith.constant 0 : i32
    %c0_i32_1 = arith.constant 0 : i32
    return %c0_i32, %c0_i32_0 : i32, i32
  }
  func.func @transform_6(%arg0: i32, %arg1: i32) -> (i32, i32) {
    %c0_i32 = arith.constant 0 : i32
    %c0_i32_0 = arith.constant 0 : i32
    %c0_i32_1 = arith.constant 0 : i32
    return %c0_i32, %c0_i32_0 : i32, i32
  }
  func.func @transform_7(%arg0: i32, %arg1: i32) -> (i32, i32) {
    %c0_i32 = arith.constant 0 : i32
    %c0_i32_0 = arith.constant 0 : i32
    %c0_i32_1 = arith.constant 0 : i32
    return %c0_i32, %c0_i32_0 : i32, i32
  }
  func.func @transform_8(%arg0: i32, %arg1: i32) -> (i32, i32) {
    %c0_i32 = arith.constant 0 : i32
    %c0_i32_0 = arith.constant 0 : i32
    %c0_i32_1 = arith.constant 0 : i32
    return %c0_i32, %c0_i32_0 : i32, i32
  }
  func.func @transform_9(%arg0: i32, %arg1: i32) -> (i32, i32) {
    %c0_i32 = arith.constant 0 : i32
    %c0_i32_0 = arith.constant 0 : i32
    %c0_i32_1 = arith.constant 0 : i32
    return %c0_i32, %c0_i32_0 : i32, i32
  }
  func.func @transform_10(%arg0: i32, %arg1: i32) -> (i32, i32) {
    %c0_i32 = arith.constant 0 : i32
    %c0_i32_0 = arith.constant 0 : i32
    %c0_i32_1 = arith.constant 0 : i32
    return %c0_i32, %c0_i32_0 : i32, i32
  }
  func.func @transform_11(%arg0: i32, %arg1: i32) -> (i32, i32) {
    %c0_i32 = arith.constant 0 : i32
    %c0_i32_0 = arith.constant 0 : i32
    %c0_i32_1 = arith.constant 0 : i32
    return %c0_i32, %c0_i32_0 : i32, i32
  }
  func.func @transform_12(%arg0: i32, %arg1: i32) -> (i32, i32) {
    %c0_i32 = arith.constant 0 : i32
    %c0_i32_0 = arith.constant 0 : i32
    %c0_i32_1 = arith.constant 0 : i32
    return %c0_i32, %c0_i32_0 : i32, i32
  }
  func.func @transform_13(%arg0: i32, %arg1: i32) -> (i32, i32) {
    %c0_i32 = arith.constant 0 : i32
    %c0_i32_0 = arith.constant 0 : i32
    %c0_i32_1 = arith.constant 0 : i32
    return %c0_i32, %c0_i32_0 : i32, i32
  }
  func.func @transform_14(%arg0: i32, %arg1: i32) -> (i32, i32) {
    %c0_i32 = arith.constant 0 : i32
    %c0_i32_0 = arith.constant 0 : i32
    return %arg0, %c0_i32 : i32, i32
  }
}

</mosaic_0001>

<llo_original>
// kernel: tpu_custom_call.1
$region0: #{tpu_custom_call.1}
  #allocation0 [shape = 'u32[]', space=smem, size = 0x4, offset = 0x4, fixed_abs, tag = 'smem constant byte address 0x4 - core index']
  #allocation1 [shape = 'u32[144,128]{1,0:T(1,128)}', space=vmem, size = 0x12000, scoped, tag = 'internal scratch']
  #allocation2 [shape = 'f32[2,1024]{1,0:T(2,128)}', space=vmem, size = 0x2000, scoped, tag = 'scratch operand']
  %s0 = inlined_call_operand.vmem [shape: bf16[2,16,4], index: 0, kind: input, shape index: {}]
  %s1 = inlined_call_operand.vmem [shape: bf16[4,64], index: 1, kind: input, shape index: {}]
  %s2 = inlined_call_operand.vmem [shape: f32[1,64], index: 2, kind: input, shape index: {}]
  %s3 = inlined_call_operand.vmem [shape: bf16[64,128], index: 3, kind: input, shape index: {}]
  %s4 = inlined_call_operand.vmem [shape: f32[1,128], index: 4, kind: input, shape index: {}]
  %s5 = inlined_call_operand.hbm [shape: bf16[128,1024], index: 5, kind: input, shape index: {}]
  %s6 = inlined_call_operand.vmem [shape: f32[1,1024], index: 6, kind: input, shape index: {}]
  %s7 = inlined_call_operand.hbm [shape: bf16[1024,512], index: 7, kind: input, shape index: {}]
  %s8 = inlined_call_operand.vmem [shape: f32[1,512], index: 8, kind: input, shape index: {}]
  %s9 = inlined_call_operand.hbm [shape: bf16[512,256], index: 9, kind: input, shape index: {}]
  %s10 = inlined_call_operand.vmem [shape: f32[1,256], index: 10, kind: input, shape index: {}]
  %s11 = inlined_call_operand.vmem [shape: bf16[256,16], index: 11, kind: input, shape index: {}]
  %s12 = inlined_call_operand.vmem [shape: f32[1,16], index: 12, kind: input, shape index: {}]
  %s13 = inlined_call_operand.vmem [shape: f32[1,16], index: 13, kind: input, shape index: {}]
  %s14 = inlined_call_operand.hbm [shape: f32[2,16], index: 14, kind: output, shape index: {}]
  %s15 = sld [smem:[#allocation0]]
  $region86: #{tpu_custom_call.1} parent=0
    _
  %s17 = ssub.s32 1, %s15
  %s18 = scalar_select 0, %s17, %s15
  $region1: #{tpu_custom_call.1} parent=0
    #allocation3 [shape = 'u8[262144]{0}', space=vmem, size = 0x40000, scoped, tag = 'input window, operand 5, single buffered']
    #allocation4 [shape = 's32[1]{0}', space=sflag, size = 0x4, scoped, tag = 'scoped memory for tpu_custom_call.1']
    #allocation5 [shape = 's32[1]{0}', space=sflag, size = 0x4, scoped, tag = 'scoped memory for tpu_custom_call.1']
    #allocation6 [shape = 'u8[1048576]{0}', space=vmem, size = 0x100000, scoped, tag = 'input window, operand 7, single buffered']
    #allocation7 [shape = 's32[1]{0}', space=sflag, size = 0x4, scoped, tag = 'scoped memory for tpu_custom_call.1']
    #allocation8 [shape = 'u8[262144]{0}', space=vmem, size = 0x40000, scoped, tag = 'input window, operand 9, single buffered']
    #allocation9 [shape = 'u8[1024]{0}', space=vmem, size = 0x400, scoped, tag = 'output window, operand 0, single buffered']
    %19 = vsyncpa [#allocation4], 0
    %20 = vsyncpa [#allocation7], 0
    %21 = vsyncpa [#allocation5], 0
    // Predicated region
    $region2: #{tpu_custom_call.1} parent=1 // pred_check
      _
    $region3: #{tpu_custom_call.1} parent=1 // pred_check_branch
      %23 = sbr.rel (0) target = $region5
    $region4: #{tpu_custom_call.1} parent=1 // pred_region
      _
    $region5: #{tpu_custom_call.1} parent=1 // pred_fallthru
      _
    // Predicated region
    $region6: #{tpu_custom_call.1} parent=1 // pred_check
      _
    $region7: #{tpu_custom_call.1} parent=1 // pred_check_branch
      %25 = sbr.rel (0) target = $region9
    $region8: #{tpu_custom_call.1} parent=1 // pred_region
      _
    $region9: #{tpu_custom_call.1} parent=1 // pred_fallthru
      _
    // Predicated region
    $region10: #{tpu_custom_call.1} parent=1 // pred_check
      _
    $region11: #{tpu_custom_call.1} parent=1 // pred_check_branch
      %27 = sbr.rel (0) target = $region13
    $region12: #{tpu_custom_call.1} parent=1 // pred_region
      _
    $region13: #{tpu_custom_call.1} parent=1 // pred_fallthru
      _
    // Predicated region
    $region14: #{tpu_custom_call.1} parent=1 // pred_check
      _
    $region15: #{tpu_custom_call.1} parent=1 // pred_check_branch
      %29 = sbr.rel (0) target = $region17
    $region16: #{tpu_custom_call.1} parent=1 // pred_region
      _
    $region17: #{tpu_custom_call.1} parent=1 // pred_fallthru
      _
    // Predicated region
    $region18: #{tpu_custom_call.1} parent=1 // pred_check
      _
    $region19: #{tpu_custom_call.1} parent=1 // pred_check_branch
      %31 = sbr.rel (0) target = $region21
    $region20: #{tpu_custom_call.1} parent=1 // pred_region
      _
    $region21: #{tpu_custom_call.1} parent=1 // pred_fallthru
      _
    // Predicated region
    $region22: #{tpu_custom_call.1} parent=1 // pred_check
      _
    $region23: #{tpu_custom_call.1} parent=1 // pred_check_branch
      %33 = sbr.rel (0) target = $region25
    $region24: #{tpu_custom_call.1} parent=1 // pred_region
      %s35 = ssub.s32 8192, 8192
      %36 = vsyncadd [#allocation4], %s35
      %s37 = sshll.u32 [#allocation3], 4
      %s38 = int_to_ptr.vmem [resolvable:$true] %s37
      %43 = dma.hbm_to_vmem [thread:$0]  %s5, 8192, %s38, [#allocation4], 512, 512, 32
    $region25: #{tpu_custom_call.1} parent=1 // pred_fallthru
      _
    // Predicated region
    $region26: #{tpu_custom_call.1} parent=1 // pred_check
      _
    $region27: #{tpu_custom_call.1} parent=1 // pred_check_branch
      %45 = sbr.rel (0) target = $region29
    $region28: #{tpu_custom_call.1} parent=1 // pred_region
      _
    $region29: #{tpu_custom_call.1} parent=1 // pred_fallthru
      _
    // Predicated region
    $region30: #{tpu_custom_call.1} parent=1 // pred_check
      _
    $region31: #{tpu_custom_call.1} parent=1 // pred_check_branch
      %47 = sbr.rel (0) target = $region33
    $region32: #{tpu_custom_call.1} parent=1 // pred_region
      %s49 = ssub.s32 32768, 32768
      %50 = vsyncadd [#allocation7], %s49
      %s51 = sshll.u32 [#allocation6], 4
      %s52 = int_to_ptr.vmem [resolvable:$true] %s51
      %57 = dma.hbm_to_vmem [thread:$0]  %s7, 32768, %s52, [#allocation7], 256, 256, 16
    $region33: #{tpu_custom_call.1} parent=1 // pred_fallthru
      _
    // Predicated region
    $region34: #{tpu_custom_call.1} parent=1 // pred_check
      _
    $region35: #{tpu_custom_call.1} parent=1 // pred_check_branch
      %59 = sbr.rel (0) target = $region37
    $region36: #{tpu_custom_call.1} parent=1 // pred_region
      _
    $region37: #{tpu_custom_call.1} parent=1 // pred_fallthru
      _
    // Predicated region
    $region38: #{tpu_custom_call.1} parent=1 // pred_check
      _
    $region39: #{tpu_custom_call.1} parent=1 // pred_check_branch
      %61 = sbr.rel (0) target = $region41
    $region40: #{tpu_custom_call.1} parent=1 // pred_region
      %s63 = ssub.s32 8192, 8192
      %64 = vsyncadd [#allocation7], %s63
      %s65 = sshll.u32 [#allocation8], 4
      %s66 = int_to_ptr.vmem [resolvable:$true] %s65
      %71 = dma.hbm_to_vmem [thread:$0]  %s9, 8192, %s66, [#allocation7], 128, 128, 8
    $region41: #{tpu_custom_call.1} parent=1 // pred_fallthru
      _
    // Predicated region
    $region42: #{tpu_custom_call.1} parent=1 // pred_check
      _
    $region43: #{tpu_custom_call.1} parent=1 // pred_check_branch
      %73 = sbr.rel (0) target = $region45
    $region44: #{tpu_custom_call.1} parent=1 // pred_region
      _
    $region45: #{tpu_custom_call.1} parent=1 // pred_fallthru
      _
    // Predicated region
    $region46: #{tpu_custom_call.1} parent=1 // pred_check
      _
    $region47: #{tpu_custom_call.1} parent=1 // pred_check_branch
      %75 = sbr.rel (0) target = $region49
    $region48: #{tpu_custom_call.1} parent=1 // pred_region
      _
    $region49: #{tpu_custom_call.1} parent=1 // pred_fallthru
      _
    // Predicated region
    $region50: #{tpu_custom_call.1} parent=1 // pred_check
      _
    $region51: #{tpu_custom_call.1} parent=1 // pred_check_branch
      %77 = sbr.rel (0) target = $region53
    $region52: #{tpu_custom_call.1} parent=1 // pred_region
      _
    $region53: #{tpu_custom_call.1} parent=1 // pred_fallthru
      _
    // Predicated region
    $region54: #{tpu_custom_call.1} parent=1 // pred_check
      _
    $region55: #{tpu_custom_call.1} parent=1 // pred_check_branch
      %79 = sbr.rel (0) target = $region57
    $region56: #{tpu_custom_call.1} parent=1 // pred_region
      _
    $region57: #{tpu_custom_call.1} parent=1 // pred_fallthru
      _
    // Predicated region
    $region58: #{tpu_custom_call.1} parent=1 // pred_check
      _
    $region59: #{tpu_custom_call.1} parent=1 // pred_check_branch
      %81 = sbr.rel (0) target = $region61
    $region60: #{tpu_custom_call.1} parent=1 // pred_region
      %82 = dma.done [#allocation4], 8192
    $region61: #{tpu_custom_call.1} parent=1 // pred_fallthru
      _
    // Predicated region
    $region62: #{tpu_custom_call.1} parent=1 // pred_check
      _
    $region63: #{tpu_custom_call.1} parent=1 // pred_check_branch
      %84 = sbr.rel (0) target = $region65
    $region64: #{tpu_custom_call.1} parent=1 // pred_region
      %85 = dma.done [#allocation7], 32768
    $region65: #{tpu_custom_call.1} parent=1 // pred_fallthru
      _
    // Predicated region
    $region66: #{tpu_custom_call.1} parent=1 // pred_check
      _
    $region67: #{tpu_custom_call.1} parent=1 // pred_check_branch
      %87 = sbr.rel (0) target = $region69
    $region68: #{tpu_custom_call.1} parent=1 // pred_region
      %88 = dma.done [#allocation7], 8192
    $region69: #{tpu_custom_call.1} parent=1 // pred_fallthru
      _
    %p90 = scmp.eq.s32.totalorder 0, 0
    // Predicated region
    $region70: #{tpu_custom_call.1} parent=1 // pred_check
      %p91 = pneg %p90
    $region71: #{tpu_custom_call.1} parent=1 // pred_check_branch
      %93 = sbr.rel (%p91) target = $region73
    $region72: #{tpu_custom_call.1} parent=1 // pred_region
      %94 = vst [vmem:[#allocation2] sm:$0xff] -inf
      %95 = vst [vmem:[#allocation2 + $0x8] sm:$0xff] -inf
    $region73: #{tpu_custom_call.1} parent=1 // pred_fallthru
      _
    %v96 = vld [vmem:[%s0] sm:$0xf]
    %v97 = vld [vmem:[%s0 + $0x4] sm:$0xf]
    %v98 = vld [vmem:[%s0 + $0x8] sm:$0xf]
    %v99 = vld [vmem:[%s0 + $0xc] sm:$0xf]
    %v100 = vld [vmem:[%s1] sm:$0x3]
    %v101 = vld [vmem:[%s2] sm:$0x1]
    %v103 = vlaneseq
    %v104 = vshrl.u32 %v103, 7
    %v105 = vsub.s32 0, %v104
    %v106 = vrot.slane %v101, %v105
    %v112 = vunpack.c.l.b16 %v96
    %v113 = vunpack.c.l.b16 %v97
    %v114 = vunpack.c.l.b16 %v98
    %v115 = vunpack.c.l.b16 %v99
    %v116 = vpack.c.b16 %v113, %v112
    %v117 = vpack.c.b16 %v115, %v114
    %vm118 = vcmask 31744
    %v120 = vsel %vm118, %v116, 0
    %v123 = vsel %vm118, %v117, 0
    %vm125 = vcmask 1041408
    %v127 = vsel %vm125, %v100, 0
    %129 = vmatprep.subr.bf16.mxu0 0
    %130 = vmatpush1.bf16.msra.mxu0 %v127
    %131 = vmatprep.subr.bf16.mxu0 0
    %132 = vmatpush1.bf16.msra.mxu0 0
    %133 = vmatprep.subr.bf16.mxu0 0
    %134 = vmatpush1.bf16.msra.mxu0 0
    %135 = vmatprep.subr.bf16.mxu0 0
    %136 = vmatpush1.bf16.msra.mxu0 0
    %137 = vmatprep.subr.bf16.mxu0 0
    %138 = vmatpush1.bf16.msra.mxu0 0
    %139 = vmatprep.subr.bf16.mxu0 0
    %140 = vmatpush1.bf16.msra.mxu0 0
    %141 = vmatprep.subr.bf16.mxu0 0
    %142 = vmatpush1.bf16.msra.mxu0 0
    %143 = vmatprep.subr.bf16.mxu0 0
    %144 = vmatpush1.bf16.msra.mxu0 0
    %145 = vmatprep.subr.bf16.mxu0 0
    %146 = vmatpush1.bf16.msra.mxu0 0
    %147 = vmatprep.subr.bf16.mxu0 0
    %148 = vmatpush1.bf16.msra.mxu0 0
    %149 = vmatprep.subr.bf16.mxu0 0
    %150 = vmatpush1.bf16.msra.mxu0 0
    %151 = vmatprep.subr.bf16.mxu0 0
    %152 = vmatpush1.bf16.msra.mxu0 0
    %153 = vmatprep.subr.bf16.mxu0 0
    %154 = vmatpush1.bf16.msra.mxu0 0
    %155 = vmatprep.subr.bf16.mxu0 0
    %156 = vmatpush1.bf16.msra.mxu0 0
    %157 = vmatprep.subr.bf16.mxu0 0
    %158 = vmatpush1.bf16.msra.mxu0 0
    %159 = vmatprep.subr.bf16.mxu0 0
    %160 = vmatpush1.bf16.msra.mxu0 0
    %161 = vmatprep.mubr.bf16.mxu0 0
    %162 = vmatmul.mubr.bf16.gmra.mrb[0].mxu0 %v120
    %v163 = vpop.f32.mrb[0].mxu0
    %v164 = vadd.f32 %v106, %v163
    %v165 = vpop.f32.mrb[0].mxu0
    %v166 = vpop.f32.mrb[0].mxu0
    %v167 = vadd.f32 %v106, %v166
    %v168 = vpop.f32.mrb[0].mxu0
    %169 = vmatprep.mubr.bf16.mxu0 0
    %170 = vmatmul.mubr.bf16.gmra.mrb[0].mxu0 %v123
    %v171 = vpop.f32.mrb[0].mxu0
    %v172 = vadd.f32 %v106, %v171
    %v173 = vpop.f32.mrb[0].mxu0
    %v174 = vpop.f32.mrb[0].mxu0
    %v175 = vadd.f32 %v106, %v174
    %v176 = vpop.f32.mrb[0].mxu0
    %177 = vdwg.mxu0
    %v178 = vmax.f32 %v164, 0.0
    %v179 = vmax.f32 %v167, 0.0
    %v180 = vmax.f32 %v172, 0.0
    %v181 = vmax.f32 %v175, 0.0
    %v182 = vpack.c.bf16 %v179, %v178
    %v183 = vpack.c.bf16 %v181, %v180
    %v184 = vld [vmem:[%s3] sm:$0xf]
    %v185 = vld [vmem:[%s3 + $0x4] sm:$0xf]
    %v186 = vld [vmem:[%s3 + $0x8] sm:$0xf]
    %v187 = vld [vmem:[%s3 + $0xc] sm:$0xf]
    %v188 = vld [vmem:[%s3 + $0x10] sm:$0xf]
    %v189 = vld [vmem:[%s3 + $0x14] sm:$0xf]
    %v190 = vld [vmem:[%s3 + $0x18] sm:$0xf]
    %v191 = vld [vmem:[%s3 + $0x1c] sm:$0xf]
    %v192 = vld [vmem:[%s4] sm:$0x1]
    %v194 = vlaneseq
    %v195 = vshrl.u32 %v194, 7
    %v196 = vsub.s32 0, %v195
    %v197 = vrot.slane %v192, %v196
    %v207 = vunpack.c.l.b16 %v184
    %v208 = vunpack.c.l.b16 %v185
    %v209 = vunpack.c.l.b16 %v186
    %v210 = vunpack.c.l.b16 %v187
    %v211 = vunpack.c.l.b16 %v188
    %v212 = vunpack.c.l.b16 %v189
    %v213 = vunpack.c.l.b16 %v190
    %v214 = vunpack.c.l.b16 %v191
    %v215 = vpack.c.b16 %v208, %v207
    %v216 = vpack.c.b16 %v210, %v209
    %v217 = vpack.c.b16 %v212, %v211
    %v218 = vpack.c.b16 %v214, %v213
    %vm223 = vcmask 523264
    %v225 = vsel %vm223, %v182, 0
    %v228 = vsel %vm223, %v183, 0
    %230 = vmatprep.subr.bf16.mxu0 0
    %231 = vmatpush1.bf16.msra.mxu0 %v215
    %232 = vmatprep.subr.bf16.mxu0 0
    %233 = vmatpush1.bf16.msra.mxu0 %v216
    %234 = vmatprep.subr.bf16.mxu0 0
    %235 = vmatpush1.bf16.msra.mxu0 %v217
    %236 = vmatprep.subr.bf16.mxu0 0
    %237 = vmatpush1.bf16.msra.mxu0 %v218
    %238 = vmatprep.subr.bf16.mxu0 0
    %239 = vmatpush1.bf16.msra.mxu0 0
    %240 = vmatprep.subr.bf16.mxu0 0
    %241 = vmatpush1.bf16.msra.mxu0 0
    %242 = vmatprep.subr.bf16.mxu0 0
    %243 = vmatpush1.bf16.msra.mxu0 0
    %244 = vmatprep.subr.bf16.mxu0 0
    %245 = vmatpush1.bf16.msra.mxu0 0
    %246 = vmatprep.subr.bf16.mxu0 0
    %247 = vmatpush1.bf16.msra.mxu0 0
    %248 = vmatprep.subr.bf16.mxu0 0
    %249 = vmatpush1.bf16.msra.mxu0 0
    %250 = vmatprep.subr.bf16.mxu0 0
    %251 = vmatpush1.bf16.msra.mxu0 0
    %252 = vmatprep.subr.bf16.mxu0 0
    %253 = vmatpush1.bf16.msra.mxu0 0
    %254 = vmatprep.subr.bf16.mxu0 0
    %255 = vmatpush1.bf16.msra.mxu0 0
    %256 = vmatprep.subr.bf16.mxu0 0
    %257 = vmatpush1.bf16.msra.mxu0 0
    %258 = vmatprep.subr.bf16.mxu0 0
    %259 = vmatpush1.bf16.msra.mxu0 0
    %260 = vmatprep.subr.bf16.mxu0 0
    %261 = vmatpush1.bf16.msra.mxu0 0
    %262 = vmatprep.mubr.bf16.mxu0 0
    %263 = vmatmul.mubr.bf16.gmra.mrb[0].mxu0 %v225
    %v264 = vpop.f32.mrb[0].mxu0
    %v265 = vadd.f32 %v197, %v264
    %v266 = vpop.f32.mrb[0].mxu0
    %v267 = vpop.f32.mrb[0].mxu0
    %v268 = vadd.f32 %v197, %v267
    %v269 = vpop.f32.mrb[0].mxu0
    %270 = vmatprep.mubr.bf16.mxu0 0
    %271 = vmatmul.mubr.bf16.gmra.mrb[0].mxu0 %v228
    %v272 = vpop.f32.mrb[0].mxu0
    %v273 = vadd.f32 %v197, %v272
    %v274 = vpop.f32.mrb[0].mxu0
    %v275 = vpop.f32.mrb[0].mxu0
    %v276 = vadd.f32 %v197, %v275
    %v277 = vpop.f32.mrb[0].mxu0
    %278 = vdwg.mxu0
    %v279 = vmax.f32 %v265, 0.0
    %v280 = vmax.f32 %v268, 0.0
    %v281 = vmax.f32 %v273, 0.0
    %v282 = vmax.f32 %v276, 0.0
    %v283 = vpack.c.bf16 %v280, %v279
    %v284 = vpack.c.bf16 %v282, %v281
    %v285 = vld [vmem:[#allocation3] sm:$0xff]
    %v286 = vld [vmem:[#allocation3 + $0x8] sm:$0xff]
    %v287 = vld [vmem:[#allocation3 + $0x10] sm:$0xff]
    %v288 = vld [vmem:[#allocation3 + $0x18] sm:$0xff]
    %v289 = vld [vmem:[#allocation3 + $0x20] sm:$0xff]
    %v290 = vld [vmem:[#allocation3 + $0x28] sm:$0xff]
    %v291 = vld [vmem:[#allocation3 + $0x30] sm:$0xff]
    %v292 = vld [vmem:[#allocation3 + $0x38] sm:$0xff]
    %v293 = vld [vmem:[#allocation3 + $0x40] sm:$0xff]
    %v294 = vld [vmem:[#allocation3 + $0x48] sm:$0xff]
    %v295 = vld [vmem:[#allocation3 + $0x50] sm:$0xff]
    %v296 = vld [vmem:[#allocation3 + $0x58] sm:$0xff]
    %v297 = vld [vmem:[#allocation3 + $0x60] sm:$0xff]
    %v298 = vld [vmem:[#allocation3 + $0x68] sm:$0xff]
    %v299 = vld [vmem:[#allocation3 + $0x70] sm:$0xff]
    %v300 = vld [vmem:[#allocation3 + $0x78] sm:$0xff]
    %v301 = vld [vmem:[#allocation3 + $0x80] sm:$0xff]
    %v302 = vld [vmem:[#allocation3 + $0x88] sm:$0xff]
    %v303 = vld [vmem:[#allocation3 + $0x90] sm:$0xff]
    %v304 = vld [vmem:[#allocation3 + $0x98] sm:$0xff]
    %v305 = vld [vmem:[#allocation3 + $0xa0] sm:$0xff]
    %v306 = vld [vmem:[#allocation3 + $0xa8] sm:$0xff]
    %v307 = vld [vmem:[#allocation3 + $0xb0] sm:$0xff]
    %v308 = vld [vmem:[#allocation3 + $0xb8] sm:$0xff]
    %v309 = vld [vmem:[#allocation3 + $0xc0] sm:$0xff]
    %v310 = vld [vmem:[#allocation3 + $0xc8] sm:$0xff]
    %v311 = vld [vmem:[#allocation3 + $0xd0] sm:$0xff]
    %v312 = vld [vmem:[#allocation3 + $0xd8] sm:$0xff]
    %v313 = vld [vmem:[#allocation3 + $0xe0] sm:$0xff]
    %v314 = vld [vmem:[#allocation3 + $0xe8] sm:$0xff]
    %v315 = vld [vmem:[#allocation3 + $0xf0] sm:$0xff]
    %v316 = vld [vmem:[#allocation3 + $0xf8] sm:$0xff]
    %v317 = vld [vmem:[#allocation3 + $0x100] sm:$0xff]
    %v318 = vld [vmem:[#allocation3 + $0x108] sm:$0xff]
    %v319 = vld [vmem:[#allocation3 + $0x110] sm:$0xff]
    %v320 = vld [vmem:[#allocation3 + $0x118] sm:$0xff]
    %v321 = vld [vmem:[#allocation3 + $0x120] sm:$0xff]
    %v322 = vld [vmem:[#allocation3 + $0x128] sm:$0xff]
    %v323 = vld [vmem:[#allocation3 + $0x130] sm:$0xff]
    %v324 = vld [vmem:[#allocation3 + $0x138] sm:$0xff]
    %v325 = vld [vmem:[#allocation3 + $0x140] sm:$0xff]
    %v326 = vld [vmem:[#allocation3 + $0x148] sm:$0xff]
    %v327 = vld [vmem:[#allocation3 + $0x150] sm:$0xff]
    %v328 = vld [vmem:[#allocation3 + $0x158] sm:$0xff]
    %v329 = vld [vmem:[#allocation3 + $0x160] sm:$0xff]
    %v330 = vld [vmem:[#allocation3 + $0x168] sm:$0xff]
    %v331 = vld [vmem:[#allocation3 + $0x170] sm:$0xff]
    %v332 = vld [vmem:[#allocation3 + $0x178] sm:$0xff]
    %v333 = vld [vmem:[#allocation3 + $0x180] sm:$0xff]
    %v334 = vld [vmem:[#allocation3 + $0x188] sm:$0xff]
    %v335 = vld [vmem:[#allocation3 + $0x190] sm:$0xff]
    %v336 = vld [vmem:[#allocation3 + $0x198] sm:$0xff]
    %v337 = vld [vmem:[#allocation3 + $0x1a0] sm:$0xff]
    %v338 = vld [vmem:[#allocation3 + $0x1a8] sm:$0xff]
    %v339 = vld [vmem:[#allocation3 + $0x1b0] sm:$0xff]
    %v340 = vld [vmem:[#allocation3 + $0x1b8] sm:$0xff]
    %v341 = vld [vmem:[#allocation3 + $0x1c0] sm:$0xff]
    %v342 = vld [vmem:[#allocation3 + $0x1c8] sm:$0xff]
    %v343 = vld [vmem:[#allocation3 + $0x1d0] sm:$0xff]
    %v344 = vld [vmem:[#allocation3 + $0x1d8] sm:$0xff]
    %v345 = vld [vmem:[#allocation3 + $0x1e0] sm:$0xff]
    %v346 = vld [vmem:[#allocation3 + $0x1e8] sm:$0xff]
    %v347 = vld [vmem:[#allocation3 + $0x1f0] sm:$0xff]
    %v348 = vld [vmem:[#allocation3 + $0x1f8] sm:$0xff]
    %v413 = vunpack.c.l.b16 %v285
    %v414 = vunpack.c.h.b16 %v285
    %v415 = vunpack.c.l.b16 %v286
    %v416 = vunpack.c.h.b16 %v286
    %v417 = vunpack.c.l.b16 %v287
    %v418 = vunpack.c.h.b16 %v287
    %v419 = vunpack.c.l.b16 %v288
    %v420 = vunpack.c.h.b16 %v288
    %v421 = vunpack.c.l.b16 %v289
    %v422 = vunpack.c.h.b16 %v289
    %v423 = vunpack.c.l.b16 %v290
    %v424 = vunpack.c.h.b16 %v290
    %v425 = vunpack.c.l.b16 %v291
    %v426 = vunpack.c.h.b16 %v291
    %v427 = vunpack.c.l.b16 %v292
    %v428 = vunpack.c.h.b16 %v292
    %v429 = vunpack.c.l.b16 %v293
    %v430 = vunpack.c.h.b16 %v293
    %v431 = vunpack.c.l.b16 %v294
    %v432 = vunpack.c.h.b16 %v294
    %v433 = vunpack.c.l.b16 %v295
    %v434 = vunpack.c.h.b16 %v295
    %v435 = vunpack.c.l.b16 %v296
    %v436 = vunpack.c.h.b16 %v296
    %v437 = vunpack.c.l.b16 %v297
    %v438 = vunpack.c.h.b16 %v297
    %v439 = vunpack.c.l.b16 %v298
    %v440 = vunpack.c.h.b16 %v298
    %v441 = vunpack.c.l.b16 %v299
    %v442 = vunpack.c.h.b16 %v299
    %v443 = vunpack.c.l.b16 %v300
    %v444 = vunpack.c.h.b16 %v300
    %v445 = vunpack.c.l.b16 %v301
    %v446 = vunpack.c.h.b16 %v301
    %v447 = vunpack.c.l.b16 %v302
    %v448 = vunpack.c.h.b16 %v302
    %v449 = vunpack.c.l.b16 %v303
    %v450 = vunpack.c.h.b16 %v303
    %v451 = vunpack.c.l.b16 %v304
    %v452 = vunpack.c.h.b16 %v304
    %v453 = vunpack.c.l.b16 %v305
    %v454 = vunpack.c.h.b16 %v305
    %v455 = vunpack.c.l.b16 %v306
    %v456 = vunpack.c.h.b16 %v306
    %v457 = vunpack.c.l.b16 %v307
    %v458 = vunpack.c.h.b16 %v307
    %v459 = vunpack.c.l.b16 %v308
    %v460 = vunpack.c.h.b16 %v308
    %v461 = vunpack.c.l.b16 %v309
    %v462 = vunpack.c.h.b16 %v309
    %v463 = vunpack.c.l.b16 %v310
    %v464 = vunpack.c.h.b16 %v310
    %v465 = vunpack.c.l.b16 %v311
    %v466 = vunpack.c.h.b16 %v311
    %v467 = vunpack.c.l.b16 %v312
    %v468 = vunpack.c.h.b16 %v312
    %v469 = vunpack.c.l.b16 %v313
    %v470 = vunpack.c.h.b16 %v313
    %v471 = vunpack.c.l.b16 %v314
    %v472 = vunpack.c.h.b16 %v314
    %v473 = vunpack.c.l.b16 %v315
    %v474 = vunpack.c.h.b16 %v315
    %v475 = vunpack.c.l.b16 %v316
    %v476 = vunpack.c.h.b16 %v316
    %v477 = vunpack.c.l.b16 %v317
    %v478 = vunpack.c.h.b16 %v317
    %v479 = vunpack.c.l.b16 %v318
    %v480 = vunpack.c.h.b16 %v318
    %v481 = vunpack.c.l.b16 %v319
    %v482 = vunpack.c.h.b16 %v319
    %v483 = vunpack.c.l.b16 %v320
    %v484 = vunpack.c.h.b16 %v320
    %v485 = vunpack.c.l.b16 %v321
    %v486 = vunpack.c.h.b16 %v321
    %v487 = vunpack.c.l.b16 %v322
    %v488 = vunpack.c.h.b16 %v322
    %v489 = vunpack.c.l.b16 %v323
    %v490 = vunpack.c.h.b16 %v323
    %v491 = vunpack.c.l.b16 %v324
    %v492 = vunpack.c.h.b16 %v324
    %v493 = vunpack.c.l.b16 %v325
    %v494 = vunpack.c.h.b16 %v325
    %v495 = vunpack.c.l.b16 %v326
    %v496 = vunpack.c.h.b16 %v326
    %v497 = vunpack.c.l.b16 %v327
    %v498 = vunpack.c.h.b16 %v327
    %v499 = vunpack.c.l.b16 %v328
    %v500 = vunpack.c.h.b16 %v328
    %v501 = vunpack.c.l.b16 %v329
    %v502 = vunpack.c.h.b16 %v329
    %v503 = vunpack.c.l.b16 %v330
    %v504 = vunpack.c.h.b16 %v330
    %v505 = vunpack.c.l.b16 %v331
    %v506 = vunpack.c.h.b16 %v331
    %v507 = vunpack.c.l.b16 %v332
    %v508 = vunpack.c.h.b16 %v332
    %v509 = vunpack.c.l.b16 %v333
    %v510 = vunpack.c.h.b16 %v333
    %v511 = vunpack.c.l.b16 %v334
    %v512 = vunpack.c.h.b16 %v334
    %v513 = vunpack.c.l.b16 %v335
    %v514 = vunpack.c.h.b16 %v335
    %v515 = vunpack.c.l.b16 %v336
    %v516 = vunpack.c.h.b16 %v336
    %v517 = vunpack.c.l.b16 %v337
    %v518 = vunpack.c.h.b16 %v337
    %v519 = vunpack.c.l.b16 %v338
    %v520 = vunpack.c.h.b16 %v338
    %v521 = vunpack.c.l.b16 %v339
    %v522 = vunpack.c.h.b16 %v339
    %v523 = vunpack.c.l.b16 %v340
    %v524 = vunpack.c.h.b16 %v340
    %v525 = vunpack.c.l.b16 %v341
    %v526 = vunpack.c.h.b16 %v341
    %v527 = vunpack.c.l.b16 %v342
    %v528 = vunpack.c.h.b16 %v342
    %v529 = vunpack.c.l.b16 %v343
    %v530 = vunpack.c.h.b16 %v343
    %v531 = vunpack.c.l.b16 %v344
    %v532 = vunpack.c.h.b16 %v344
    %v533 = vunpack.c.l.b16 %v345
    %v534 = vunpack.c.h.b16 %v345
    %v535 = vunpack.c.l.b16 %v346
    %v536 = vunpack.c.h.b16 %v346
    %v537 = vunpack.c.l.b16 %v347
    %v538 = vunpack.c.h.b16 %v347
    %v539 = vunpack.c.l.b16 %v348
    %v540 = vunpack.c.h.b16 %v348
    %v541 = vpack.c.b16 %v421, %v413
    %v542 = vpack.c.b16 %v422, %v414
    %v543 = vpack.c.b16 %v423, %v415
    %v544 = vpack.c.b16 %v424, %v416
    %v545 = vpack.c.b16 %v425, %v417
    %v546 = vpack.c.b16 %v426, %v418
    %v547 = vpack.c.b16 %v427, %v419
    %v548 = vpack.c.b16 %v428, %v420
    %v549 = vpack.c.b16 %v437, %v429
    %v550 = vpack.c.b16 %v438, %v430
    %v551 = vpack.c.b16 %v439, %v431
    %v552 = vpack.c.b16 %v440, %v432
    %v553 = vpack.c.b16 %v441, %v433
    %v554 = vpack.c.b16 %v442, %v434
    %v555 = vpack.c.b16 %v443, %v435
    %v556 = vpack.c.b16 %v444, %v436
    %v557 = vpack.c.b16 %v453, %v445
    %v558 = vpack.c.b16 %v454, %v446
    %v559 = vpack.c.b16 %v455, %v447
    %v560 = vpack.c.b16 %v456, %v448
    %v561 = vpack.c.b16 %v457, %v449
    %v562 = vpack.c.b16 %v458, %v450
    %v563 = vpack.c.b16 %v459, %v451
    %v564 = vpack.c.b16 %v460, %v452
    %v565 = vpack.c.b16 %v469, %v461
    %v566 = vpack.c.b16 %v470, %v462
    %v567 = vpack.c.b16 %v471, %v463
    %v568 = vpack.c.b16 %v472, %v464
    %v569 = vpack.c.b16 %v473, %v465
    %v570 = vpack.c.b16 %v474, %v466
    %v571 = vpack.c.b16 %v475, %v467
    %v572 = vpack.c.b16 %v476, %v468
    %v573 = vpack.c.b16 %v485, %v477
    %v574 = vpack.c.b16 %v486, %v478
    %v575 = vpack.c.b16 %v487, %v479
    %v576 = vpack.c.b16 %v488, %v480
    %v577 = vpack.c.b16 %v489, %v481
    %v578 = vpack.c.b16 %v490, %v482
    %v579 = vpack.c.b16 %v491, %v483
    %v580 = vpack.c.b16 %v492, %v484
    %v581 = vpack.c.b16 %v501, %v493
    %v582 = vpack.c.b16 %v502, %v494
    %v583 = vpack.c.b16 %v503, %v495
    %v584 = vpack.c.b16 %v504, %v496
    %v585 = vpack.c.b16 %v505, %v497
    %v586 = vpack.c.b16 %v506, %v498
    %v587 = vpack.c.b16 %v507, %v499
    %v588 = vpack.c.b16 %v508, %v500
    %v589 = vpack.c.b16 %v517, %v509
    %v590 = vpack.c.b16 %v518, %v510
    %v591 = vpack.c.b16 %v519, %v511
    %v592 = vpack.c.b16 %v520, %v512
    %v593 = vpack.c.b16 %v521, %v513
    %v594 = vpack.c.b16 %v522, %v514
    %v595 = vpack.c.b16 %v523, %v515
    %v596 = vpack.c.b16 %v524, %v516
    %v597 = vpack.c.b16 %v533, %v525
    %v598 = vpack.c.b16 %v534, %v526
    %v599 = vpack.c.b16 %v535, %v527
    %v600 = vpack.c.b16 %v536, %v528
    %v601 = vpack.c.b16 %v537, %v529
    %v602 = vpack.c.b16 %v538, %v530
    %v603 = vpack.c.b16 %v539, %v531
    %v604 = vpack.c.b16 %v540, %v532
    %669 = vmatprep.subr.bf16.mxu0 %v542
    %670 = vmatpush1.bf16.msra.mxu0 %v541
    %671 = vmatprep.subr.bf16.mxu0 %v550
    %672 = vmatpush1.bf16.msra.mxu0 %v549
    %673 = vmatprep.subr.bf16.mxu0 %v558
    %674 = vmatpush1.bf16.msra.mxu0 %v557
    %675 = vmatprep.subr.bf16.mxu0 %v566
    %676 = vmatpush1.bf16.msra.mxu0 %v565
    %677 = vmatprep.subr.bf16.mxu0 %v574
    %678 = vmatpush1.bf16.msra.mxu0 %v573
    %679 = vmatprep.subr.bf16.mxu0 %v582
    %680 = vmatpush1.bf16.msra.mxu0 %v581
    %681 = vmatprep.subr.bf16.mxu0 %v590
    %682 = vmatpush1.bf16.msra.mxu0 %v589
    %683 = vmatprep.subr.bf16.mxu0 %v598
    %684 = vmatpush1.bf16.msra.mxu0 %v597
    %685 = vmatprep.subr.bf16.mxu0 0
    %686 = vmatpush1.bf16.msra.mxu0 0
    %687 = vmatprep.subr.bf16.mxu0 0
    %688 = vmatpush1.bf16.msra.mxu0 0
    %689 = vmatprep.subr.bf16.mxu0 0
    %690 = vmatpush1.bf16.msra.mxu0 0
    %691 = vmatprep.subr.bf16.mxu0 0
    %692 = vmatpush1.bf16.msra.mxu0 0
    %693 = vmatprep.subr.bf16.mxu0 0
    %694 = vmatpush1.bf16.msra.mxu0 0
    %695 = vmatprep.subr.bf16.mxu0 0
    %696 = vmatpush1.bf16.msra.mxu0 0
    %697 = vmatprep.subr.bf16.mxu0 0
    %698 = vmatpush1.bf16.msra.mxu0 0
    %699 = vmatprep.subr.bf16.mxu0 0
    %700 = vmatpush1.bf16.msra.mxu0 0
    %701 = vmatprep.mubr.bf16.mxu0 0
    %702 = vmatmul.mubr.bf16.gmra.mrb[0].mxu0 %v283
    %v703 = vpop.f32.mrb[0].mxu0
    %v704 = vadd.f32 0.0, %v703
    %v705 = vpop.f32.mrb[0].mxu0
    %v706 = vadd.f32 0.0, %v705
    %v707 = vpop.f32.mrb[0].mxu0
    %v708 = vadd.f32 0.0, %v707
    %v709 = vpop.f32.mrb[0].mxu0
    %v710 = vadd.f32 0.0, %v709
    %711 = vmatprep.mubr.bf16.mxu0 0
    %712 = vmatmul.mubr.bf16.gmra.mrb[0].mxu0 %v284
    %v713 = vpop.f32.mrb[0].mxu0
    %v714 = vadd.f32 0.0, %v713
    %v715 = vpop.f32.mrb[0].mxu0
    %v716 = vadd.f32 0.0, %v715
    %v717 = vpop.f32.mrb[0].mxu0
    %v718 = vadd.f32 0.0, %v717
    %v719 = vpop.f32.mrb[0].mxu0
    %v720 = vadd.f32 0.0, %v719
    %721 = vdwg.mxu0
    %722 = vmatprep.subr.bf16.mxu0 %v544
    %723 = vmatpush1.bf16.msra.mxu0 %v543
    %724 = vmatprep.subr.bf16.mxu0 %v552
    %725 = vmatpush1.bf16.msra.mxu0 %v551
    %726 = vmatprep.subr.bf16.mxu0 %v560
    %727 = vmatpush1.bf16.msra.mxu0 %v559
    %728 = vmatprep.subr.bf16.mxu0 %v568
    %729 = vmatpush1.bf16.msra.mxu0 %v567
    %730 = vmatprep.subr.bf16.mxu0 %v576
    %731 = vmatpush1.bf16.msra.mxu0 %v575
    %732 = vmatprep.subr.bf16.mxu0 %v584
    %733 = vmatpush1.bf16.msra.mxu0 %v583
    %734 = vmatprep.subr.bf16.mxu0 %v592
    %735 = vmatpush1.bf16.msra.mxu0 %v591
    %736 = vmatprep.subr.bf16.mxu0 %v600
    %737 = vmatpush1.bf16.msra.mxu0 %v599
    %738 = vmatprep.subr.bf16.mxu0 0
    %739 = vmatpush1.bf16.msra.mxu0 0
    %740 = vmatprep.subr.bf16.mxu0 0
    %741 = vmatpush1.bf16.msra.mxu0 0
    %742 = vmatprep.subr.bf16.mxu0 0
    %743 = vmatpush1.bf16.msra.mxu0 0
    %744 = vmatprep.subr.bf16.mxu0 0
    %745 = vmatpush1.bf16.msra.mxu0 0
    %746 = vmatprep.subr.bf16.mxu0 0
    %747 = vmatpush1.bf16.msra.mxu0 0
    %748 = vmatprep.subr.bf16.mxu0 0
    %749 = vmatpush1.bf16.msra.mxu0 0
    %750 = vmatprep.subr.bf16.mxu0 0
    %751 = vmatpush1.bf16.msra.mxu0 0
    %752 = vmatprep.subr.bf16.mxu0 0
    %753 = vmatpush1.bf16.msra.mxu0 0
    %754 = vmatprep.mubr.bf16.mxu0 0
    %755 = vmatmul.mubr.bf16.gmra.mrb[0].mxu0 %v283
    %v756 = vpop.f32.mrb[0].mxu0
    %v757 = vadd.f32 0.0, %v756
    %v758 = vpop.f32.mrb[0].mxu0
    %v759 = vadd.f32 0.0, %v758
    %v760 = vpop.f32.mrb[0].mxu0
    %v761 = vadd.f32 0.0, %v760
    %v762 = vpop.f32.mrb[0].mxu0
    %v763 = vadd.f32 0.0, %v762
    %764 = vmatprep.mubr.bf16.mxu0 0
    %765 = vmatmul.mubr.bf16.gmra.mrb[0].mxu0 %v284
    %v766 = vpop.f32.mrb[0].mxu0
    %v767 = vadd.f32 0.0, %v766
    %v768 = vpop.f32.mrb[0].mxu0
    %v769 = vadd.f32 0.0, %v768
    %v770 = vpop.f32.mrb[0].mxu0
    %v771 = vadd.f32 0.0, %v770
    %v772 = vpop.f32.mrb[0].mxu0
    %v773 = vadd.f32 0.0, %v772
    %774 = vdwg.mxu0
    %775 = vmatprep.subr.bf16.mxu0 %v546
    %776 = vmatpush1.bf16.msra.mxu0 %v545
    %777 = vmatprep.subr.bf16.mxu0 %v554
    %778 = vmatpush1.bf16.msra.mxu0 %v553
    %779 = vmatprep.subr.bf16.mxu0 %v562
    %780 = vmatpush1.bf16.msra.mxu0 %v561
    %781 = vmatprep.subr.bf16.mxu0 %v570
    %782 = vmatpush1.bf16.msra.mxu0 %v569
    %783 = vmatprep.subr.bf16.mxu0 %v578
    %784 = vmatpush1.bf16.msra.mxu0 %v577
    %785 = vmatprep.subr.bf16.mxu0 %v586
    %786 = vmatpush1.bf16.msra.mxu0 %v585
    %787 = vmatprep.subr.bf16.mxu0 %v594
    %788 = vmatpush1.bf16.msra.mxu0 %v593
    %789 = vmatprep.subr.bf16.mxu0 %v602
    %790 = vmatpush1.bf16.msra.mxu0 %v601
    %791 = vmatprep.subr.bf16.mxu0 0
    %792 = vmatpush1.bf16.msra.mxu0 0
    %793 = vmatprep.subr.bf16.mxu0 0
    %794 = vmatpush1.bf16.msra.mxu0 0
    %795 = vmatprep.subr.bf16.mxu0 0
    %796 = vmatpush1.bf16.msra.mxu0 0
    %797 = vmatprep.subr.bf16.mxu0 0
    %798 = vmatpush1.bf16.msra.mxu0 0
    %799 = vmatprep.subr.bf16.mxu0 0
    %800 = vmatpush1.bf16.msra.mxu0 0
    %801 = vmatprep.subr.bf16.mxu0 0
    %802 = vmatpush1.bf16.msra.mxu0 0
    %803 = vmatprep.subr.bf16.mxu0 0
    %804 = vmatpush1.bf16.msra.mxu0 0
    %805 = vmatprep.subr.bf16.mxu0 0
    %806 = vmatpush1.bf16.msra.mxu0 0
    %807 = vmatprep.mubr.bf16.mxu0 0
    %808 = vmatmul.mubr.bf16.gmra.mrb[0].mxu0 %v283
    %v809 = vpop.f32.mrb[0].mxu0
    %v810 = vadd.f32 0.0, %v809
    %v811 = vpop.f32.mrb[0].mxu0
    %v812 = vadd.f32 0.0, %v811
    %v813 = vpop.f32.mrb[0].mxu0
    %v814 = vadd.f32 0.0, %v813
    %v815 = vpop.f32.mrb[0].mxu0
    %v816 = vadd.f32 0.0, %v815
    %817 = vmatprep.mubr.bf16.mxu0 0
    %818 = vmatmul.mubr.bf16.gmra.mrb[0].mxu0 %v284
    %v819 = vpop.f32.mrb[0].mxu0
    %v820 = vadd.f32 0.0, %v819
    %v821 = vpop.f32.mrb[0].mxu0
    %v822 = vadd.f32 0.0, %v821
    %v823 = vpop.f32.mrb[0].mxu0
    %v824 = vadd.f32 0.0, %v823
    %v825 = vpop.f32.mrb[0].mxu0
    %v826 = vadd.f32 0.0, %v825
    %827 = vdwg.mxu0
    %828 = vmatprep.subr.bf16.mxu0 %v548
    %829 = vmatpush1.bf16.msra.mxu0 %v547
    %830 = vmatprep.subr.bf16.mxu0 %v556
    %831 = vmatpush1.bf16.msra.mxu0 %v555
    %832 = vmatprep.subr.bf16.mxu0 %v564
    %833 = vmatpush1.bf16.msra.mxu0 %v563
    %834 = vmatprep.subr.bf16.mxu0 %v572
    %835 = vmatpush1.bf16.msra.mxu0 %v571
    %836 = vmatprep.subr.bf16.mxu0 %v580
    %837 = vmatpush1.bf16.msra.mxu0 %v579
    %838 = vmatprep.subr.bf16.mxu0 %v588
    %839 = vmatpush1.bf16.msra.mxu0 %v587
    %840 = vmatprep.subr.bf16.mxu0 %v596
    %841 = vmatpush1.bf16.msra.mxu0 %v595
    %842 = vmatprep.subr.bf16.mxu0 %v604
    %843 = vmatpush1.bf16.msra.mxu0 %v603
    %844 = vmatprep.subr.bf16.mxu0 0
    %845 = vmatpush1.bf16.msra.mxu0 0
    %846 = vmatprep.subr.bf16.mxu0 0
    %847 = vmatpush1.bf16.msra.mxu0 0
    %848 = vmatprep.subr.bf16.mxu0 0
    %849 = vmatpush1.bf16.msra.mxu0 0
    %850 = vmatprep.subr.bf16.mxu0 0
    %851 = vmatpush1.bf16.msra.mxu0 0
    %852 = vmatprep.subr.bf16.mxu0 0
    %853 = vmatpush1.bf16.msra.mxu0 0
    %854 = vmatprep.subr.bf16.mxu0 0
    %855 = vmatpush1.bf16.msra.mxu0 0
    %856 = vmatprep.subr.bf16.mxu0 0
    %857 = vmatpush1.bf16.msra.mxu0 0
    %858 = vmatprep.subr.bf16.mxu0 0
    %859 = vmatpush1.bf16.msra.mxu0 0
    %860 = vmatprep.mubr.bf16.mxu0 0
    %861 = vmatmul.mubr.bf16.gmra.mrb[0].mxu0 %v283
    %v862 = vpop.f32.mrb[0].mxu0
    %v863 = vadd.f32 0.0, %v862
    %v864 = vpop.f32.mrb[0].mxu0
    %v865 = vadd.f32 0.0, %v864
    %v866 = vpop.f32.mrb[0].mxu0
    %v867 = vadd.f32 0.0, %v866
    %v868 = vpop.f32.mrb[0].mxu0
    %v869 = vadd.f32 0.0, %v868
    %870 = vmatprep.mubr.bf16.mxu0 0
    %871 = vmatmul.mubr.bf16.gmra.mrb[0].mxu0 %v284
    %v872 = vpop.f32.mrb[0].mxu0
    %v873 = vadd.f32 0.0, %v872
    %v874 = vpop.f32.mrb[0].mxu0
    %v875 = vadd.f32 0.0, %v874
    %v876 = vpop.f32.mrb[0].mxu0
    %v877 = vadd.f32 0.0, %v876
    %v878 = vpop.f32.mrb[0].mxu0
    %v879 = vadd.f32 0.0, %v878
    %880 = vdwg.mxu0
    %v881 = vld [vmem:[#allocation2] sm:$0xff]
    %v882 = vld [vmem:[#allocation2 + $0x8] sm:$0xff]
    %v883 = vmax.f32 %v704, %v708
    %v884 = vrot.slane %v883, 4
    %v885 = vmax.f32 %v883, %v884
    %v886 = vrot.slane %v885, 2
    %v887 = vmax.f32 %v885, %v886
    %v888 = vrot.slane %v887, 1
    %v889 = vmax.f32 %v887, %v888
    %v890 = vmax.f32 %v706, %v710
    %v891 = vrot.slane %v890, 4
    %v892 = vmax.f32 %v890, %v891
    %v893 = vrot.slane %v892, 2
    %v894 = vmax.f32 %v892, %v893
    %v895 = vrot.slane %v894, 1
    %v896 = vmax.f32 %v894, %v895
    %v897 = vmax.f32 %v757, %v761
    %v898 = vrot.slane %v897, 4
    %v899 = vmax.f32 %v897, %v898
    %v900 = vrot.slane %v899, 2
    %v901 = vmax.f32 %v899, %v900
    %v902 = vrot.slane %v901, 1
    %v903 = vmax.f32 %v901, %v902
    %v904 = vmax.f32 %v759, %v763
    %v905 = vrot.slane %v904, 4
    %v906 = vmax.f32 %v904, %v905
    %v907 = vrot.slane %v906, 2
    %v908 = vmax.f32 %v906, %v907
    %v909 = vrot.slane %v908, 1
    %v910 = vmax.f32 %v908, %v909
    %v911 = vmax.f32 %v810, %v814
    %v912 = vrot.slane %v911, 4
    %v913 = vmax.f32 %v911, %v912
    %v914 = vrot.slane %v913, 2
    %v915 = vmax.f32 %v913, %v914
    %v916 = vrot.slane %v915, 1
    %v917 = vmax.f32 %v915, %v916
    %v918 = vmax.f32 %v812, %v816
    %v919 = vrot.slane %v918, 4
    %v920 = vmax.f32 %v918, %v919
    %v921 = vrot.slane %v920, 2
    %v922 = vmax.f32 %v920, %v921
    %v923 = vrot.slane %v922, 1
    %v924 = vmax.f32 %v922, %v923
    %v925 = vmax.f32 %v863, %v867
    %v926 = vrot.slane %v925, 4
    %v927 = vmax.f32 %v925, %v926
    %v928 = vrot.slane %v927, 2
    %v929 = vmax.f32 %v927, %v928
    %v930 = vrot.slane %v929, 1
    %v931 = vmax.f32 %v929, %v930
    %v932 = vmax.f32 %v865, %v869
    %v933 = vrot.slane %v932, 4
    %v934 = vmax.f32 %v932, %v933
    %v935 = vrot.slane %v934, 2
    %v936 = vmax.f32 %v934, %v935
    %v937 = vrot.slane %v936, 1
    %v938 = vmax.f32 %v936, %v937
    %v939 = vmax.f32 %v714, %v718
    %v940 = vrot.slane %v939, 4
    %v941 = vmax.f32 %v939, %v940
    %v942 = vrot.slane %v941, 2
    %v943 = vmax.f32 %v941, %v942
    %v944 = vrot.slane %v943, 1
    %v945 = vmax.f32 %v943, %v944
    %v946 = vmax.f32 %v716, %v720
    %v947 = vrot.slane %v946, 4
    %v948 = vmax.f32 %v946, %v947
    %v949 = vrot.slane %v948, 2
    %v950 = vmax.f32 %v948, %v949
    %v951 = vrot.slane %v950, 1
    %v952 = vmax.f32 %v950, %v951
    %v953 = vmax.f32 %v767, %v771
    %v954 = vrot.slane %v953, 4
    %v955 = vmax.f32 %v953, %v954
    %v956 = vrot.slane %v955, 2
    %v957 = vmax.f32 %v955, %v956
    %v958 = vrot.slane %v957, 1
    %v959 = vmax.f32 %v957, %v958
    %v960 = vmax.f32 %v769, %v773
    %v961 = vrot.slane %v960, 4
    %v962 = vmax.f32 %v960, %v961
    %v963 = vrot.slane %v962, 2
    %v964 = vmax.f32 %v962, %v963
    %v965 = vrot.slane %v964, 1
    %v966 = vmax.f32 %v964, %v965
    %v967 = vmax.f32 %v820, %v824
    %v968 = vrot.slane %v967, 4
    %v969 = vmax.f32 %v967, %v968
    %v970 = vrot.slane %v969, 2
    %v971 = vmax.f32 %v969, %v970
    %v972 = vrot.slane %v971, 1
    %v973 = vmax.f32 %v971, %v972
    %v974 = vmax.f32 %v822, %v826
    %v975 = vrot.slane %v974, 4
    %v976 = vmax.f32 %v974, %v975
    %v977 = vrot.slane %v976, 2
    %v978 = vmax.f32 %v976, %v977
    %v979 = vrot.slane %v978, 1
    %v980 = vmax.f32 %v978, %v979
    %v981 = vmax.f32 %v873, %v877
    %v982 = vrot.slane %v981, 4
    %v983 = vmax.f32 %v981, %v982
    %v984 = vrot.slane %v983, 2
    %v985 = vmax.f32 %v983, %v984
    %v986 = vrot.slane %v985, 1
    %v987 = vmax.f32 %v985, %v986
    %v988 = vmax.f32 %v875, %v879
    %v989 = vrot.slane %v988, 4
    %v990 = vmax.f32 %v988, %v989
    %v991 = vrot.slane %v990, 2
    %v992 = vmax.f32 %v990, %v991
    %v993 = vrot.slane %v992, 1
    %v994 = vmax.f32 %v992, %v993
    %v1011 = vcombine.low %v889, %v896
    %v1012 = vcombine.low %v903, %v910
    %v1014 = vunpack.c.l.s4 1983009808
    %v1015 = vunpack.c.0.s8 %v1014
    %v1016 = vlaneseq
    %v1017 = vshrl.u32 %v1016, 7
    %v1018 = vsub.s32 %v1015, %v1017
    %v1019 = vrot.slane %v1011, %v1018
    %v1021 = vunpack.c.l.s4 1983009808
    %v1022 = vunpack.c.0.s8 %v1021
    %v1023 = vlaneseq
    %v1024 = vshrl.u32 %v1023, 7
    %v1025 = vsub.s32 %v1022, %v1024
    %v1026 = vrot.slane %v1012, %v1025
    %v1027 = vcombine.low %v1019, %v1026
    %v1028 = vcombine.low %v917, %v924
    %v1029 = vcombine.low %v931, %v938
    %v1031 = vunpack.c.l.s4 1983009808
    %v1032 = vunpack.c.0.s8 %v1031
    %v1033 = vlaneseq
    %v1034 = vshrl.u32 %v1033, 7
    %v1035 = vsub.s32 %v1032, %v1034
    %v1036 = vrot.slane %v1028, %v1035
    %v1038 = vunpack.c.l.s4 1983009808
    %v1039 = vunpack.c.0.s8 %v1038
    %v1040 = vlaneseq
    %v1041 = vshrl.u32 %v1040, 7
    %v1042 = vsub.s32 %v1039, %v1041
    %v1043 = vrot.slane %v1029, %v1042
    %v1044 = vcombine.low %v1036, %v1043
    %v1045 = vcombine.low %v945, %v952
    %v1046 = vcombine.low %v959, %v966
    %v1048 = vunpack.c.l.s4 1983009808
    %v1049 = vunpack.c.0.s8 %v1048
    %v1050 = vlaneseq
    %v1051 = vshrl.u32 %v1050, 7
    %v1052 = vsub.s32 %v1049, %v1051
    %v1053 = vrot.slane %v1045, %v1052
    %v1055 = vunpack.c.l.s4 1983009808
    %v1056 = vunpack.c.0.s8 %v1055
    %v1057 = vlaneseq
    %v1058 = vshrl.u32 %v1057, 7
    %v1059 = vsub.s32 %v1056, %v1058
    %v1060 = vrot.slane %v1046, %v1059
    %v1061 = vcombine.low %v1053, %v1060
    %v1062 = vcombine.low %v973, %v980
    %v1063 = vcombine.low %v987, %v994
    %v1065 = vunpack.c.l.s4 1983009808
    %v1066 = vunpack.c.0.s8 %v1065
    %v1067 = vlaneseq
    %v1068 = vshrl.u32 %v1067, 7
    %v1069 = vsub.s32 %v1066, %v1068
    %v1070 = vrot.slane %v1062, %v1069
    %v1072 = vunpack.c.l.s4 1983009808
    %v1073 = vunpack.c.0.s8 %v1072
    %v1074 = vlaneseq
    %v1075 = vshrl.u32 %v1074, 7
    %v1076 = vsub.s32 %v1073, %v1075
    %v1077 = vrot.slane %v1063, %v1076
    %v1078 = vcombine.low %v1070, %v1077
    %vm1079 = vcmask 1044484
    %v1080 = vsel %vm1079, %v1027, %v1027
    %vm1081 = vcmask 1046534
    %v1082 = vsel %vm1081, %v1027, %v1080
    %v1083 = vrot.slane %v1061, 7
    %vm1084 = vcmask 1041409
    %v1085 = vsel %vm1084, %v1083, %v1082
    %vm1086 = vcmask 1043459
    %v1087 = vsel %vm1086, %v1083, %v1085
    %vm1088 = vcmask 1045509
    %v1089 = vsel %vm1088, %v1083, %v1087
    %vm1090 = vcmask 1047559
    %v1091 = vsel %vm1090, %v1083, %v1089
    %v1092 = vsel %vm1079, %v1044, %v1044
    %v1093 = vsel %vm1081, %v1044, %v1092
    %v1094 = vrot.slane %v1078, 7
    %v1095 = vsel %vm1084, %v1094, %v1093
    %v1096 = vsel %vm1086, %v1094, %v1095
    %v1097 = vsel %vm1088, %v1094, %v1096
    %v1098 = vsel %vm1090, %v1094, %v1097
    %v1101 = vmax.f32 %v881, %v1091
    %v1102 = vmax.f32 %v882, %v1098
    %1103 = vst [vmem:[#allocation2] sm:$0xff] %v1101
    %1104 = vst [vmem:[#allocation2 + $0x8] sm:$0xff] %v1102
    // Predicated region
    $region74: #{tpu_custom_call.1} parent=1 // pred_check
      %p1105 = pneg %p90
    $region75: #{tpu_custom_call.1} parent=1 // pred_check_branch
      %1107 = sbr.rel (%p1105) target = $region77
    $region76: #{tpu_custom_call.1} parent=1 // pred_region
      %v1108 = vld [vmem:[#allocation2] sm:$0xff]
      %v1109 = vld [vmem:[#allocation2 + $0x8] sm:$0xff]
      %v1110 = vld [vmem:[%s6] sm:$0xff]
      %v1112 = vlaneseq
      %v1113 = vshrl.u32 %v1112, 7
      %v1114 = vsub.s32 0, %v1113
      %v1115 = vrot.slane %v1110, %v1114
      %v1116 = vlaneseq
      %v1117 = vshrl.u32 %v1116, 7
      %v1118 = vsub.s32 1, %v1117
      %v1119 = vrot.slane %v1110, %v1118
      %v1120 = vlaneseq
      %v1121 = vshrl.u32 %v1120, 7
      %v1122 = vsub.s32 2, %v1121
      %v1123 = vrot.slane %v1110, %v1122
      %v1124 = vlaneseq
      %v1125 = vshrl.u32 %v1124, 7
      %v1126 = vsub.s32 3, %v1125
      %v1127 = vrot.slane %v1110, %v1126
      %v1128 = vlaneseq
      %v1129 = vshrl.u32 %v1128, 7
      %v1130 = vsub.s32 4, %v1129
      %v1131 = vrot.slane %v1110, %v1130
      %v1132 = vlaneseq
      %v1133 = vshrl.u32 %v1132, 7
      %v1134 = vsub.s32 5, %v1133
      %v1135 = vrot.slane %v1110, %v1134
      %v1136 = vlaneseq
      %v1137 = vshrl.u32 %v1136, 7
      %v1138 = vsub.s32 6, %v1137
      %v1139 = vrot.slane %v1110, %v1138
      %v1140 = vlaneseq
      %v1141 = vshrl.u32 %v1140, 7
      %v1142 = vsub.s32 7, %v1141
      %v1143 = vrot.slane %v1110, %v1142
      %v1144 = vcombine.low %v1115, %v1119
      %v1145 = vcombine.low %v1123, %v1127
      %v1147 = vunpack.c.l.s4 1983009808
      %v1148 = vunpack.c.0.s8 %v1147
      %v1149 = vlaneseq
      %v1150 = vshrl.u32 %v1149, 7
      %v1151 = vsub.s32 %v1148, %v1150
      %v1152 = vrot.slane %v1144, %v1151
      %v1154 = vunpack.c.l.s4 1983009808
      %v1155 = vunpack.c.0.s8 %v1154
      %v1156 = vlaneseq
      %v1157 = vshrl.u32 %v1156, 7
      %v1158 = vsub.s32 %v1155, %v1157
      %v1159 = vrot.slane %v1145, %v1158
      %v1160 = vcombine.low %v1152, %v1159
      %v1161 = vcombine.low %v1131, %v1135
      %v1162 = vcombine.low %v1139, %v1143
      %v1164 = vunpack.c.l.s4 1983009808
      %v1165 = vunpack.c.0.s8 %v1164
      %v1166 = vlaneseq
      %v1167 = vshrl.u32 %v1166, 7
      %v1168 = vsub.s32 %v1165, %v1167
      %v1169 = vrot.slane %v1161, %v1168
      %v1171 = vunpack.c.l.s4 1983009808
      %v1172 = vunpack.c.0.s8 %v1171
      %v1173 = vlaneseq
      %v1174 = vshrl.u32 %v1173, 7
      %v1175 = vsub.s32 %v1172, %v1174
      %v1176 = vrot.slane %v1162, %v1175
      %v1177 = vcombine.low %v1169, %v1176
      %v1180 = vadd.f32 %v1108, %v1160
      %v1181 = vadd.f32 %v1109, %v1177
      %v1182 = vmax.f32 %v1180, 0.0
      %v1183 = vmax.f32 %v1181, 0.0
      %v1186 = vcombine.high %v1182, %v1182
      %v1188 = vunpack.c.l.s4 1983009808
      %v1189 = vunpack.c.0.s8 %v1188
      %v1190 = vlaneseq
      %v1191 = vshrl.u32 %v1190, 7
      %v1192 = vsub.s32 %v1189, %v1191
      %v1193 = vrot.slane %v1182, %v1192
      %v1195 = vunpack.c.l.s4 1983009808
      %v1196 = vunpack.c.0.s8 %v1195
      %v1197 = vlaneseq
      %v1198 = vshrl.u32 %v1197, 7
      %v1199 = vsub.s32 %v1196, %v1198
      %v1200 = vrot.slane %v1186, %v1199
      %v1201 = vcombine.high %v1193, %v1193
      %v1202 = vcombine.high %v1200, %v1200
      %v1203 = vcombine.high %v1183, %v1183
      %v1205 = vunpack.c.l.s4 1983009808
      %v1206 = vunpack.c.0.s8 %v1205
      %v1207 = vlaneseq
      %v1208 = vshrl.u32 %v1207, 7
      %v1209 = vsub.s32 %v1206, %v1208
      %v1210 = vrot.slane %v1183, %v1209
      %v1212 = vunpack.c.l.s4 1983009808
      %v1213 = vunpack.c.0.s8 %v1212
      %v1214 = vlaneseq
      %v1215 = vshrl.u32 %v1214, 7
      %v1216 = vsub.s32 %v1213, %v1215
      %v1217 = vrot.slane %v1203, %v1216
      %v1218 = vcombine.high %v1210, %v1210
      %v1219 = vcombine.high %v1217, %v1217
      %v1228 = vpack.c.bf16 %v1193, %v1193
      %v1229 = vpack.c.bf16 %v1201, %v1201
      %v1230 = vpack.c.bf16 %v1200, %v1200
      %v1231 = vpack.c.bf16 %v1202, %v1202
      %v1232 = vpack.c.bf16 %v1210, %v1210
      %v1233 = vpack.c.bf16 %v1218, %v1218
      %v1234 = vpack.c.bf16 %v1217, %v1217
      %v1235 = vpack.c.bf16 %v1219, %v1219
      %v1236 = vld [vmem:[#allocation6] sm:$0xff]
      %v1237 = vld [vmem:[#allocation6 + $0x8] sm:$0xff]
      %v1238 = vld [vmem:[#allocation6 + $0x10] sm:$0xff]
      %v1239 = vld [vmem:[#allocation6 + $0x18] sm:$0xff]
      %v1240 = vld [vmem:[#allocation6 + $0x20] sm:$0xff]
      %v1241 = vld [vmem:[#allocation6 + $0x28] sm:$0xff]
      %v1242 = vld [vmem:[#allocation6 + $0x30] sm:$0xff]
      %v1243 = vld [vmem:[#allocation6 + $0x38] sm:$0xff]
      %v1244 = vld [vmem:[#allocation6 + $0x40] sm:$0xff]
      %v1245 = vld [vmem:[#allocation6 + $0x48] sm:$0xff]
      %v1246 = vld [vmem:[#allocation6 + $0x50] sm:$0xff]
      %v1247 = vld [vmem:[#allocation6 + $0x58] sm:$0xff]
      %v1248 = vld [vmem:[#allocation6 + $0x60] sm:$0xff]
      %v1249 = vld [vmem:[#allocation6 + $0x68] sm:$0xff]
      %v1250 = vld [vmem:[#allocation6 + $0x70] sm:$0xff]
      %v1251 = vld [vmem:[#allocation6 + $0x78] sm:$0xff]
      %v1252 = vld [vmem:[#allocation6 + $0x80] sm:$0xff]
      %v1253 = vld [vmem:[#allocation6 + $0x88] sm:$0xff]
      %v1254 = vld [vmem:[#allocation6 + $0x90] sm:$0xff]
      %v1255 = vld [vmem:[#allocation6 + $0x98] sm:$0xff]
      %v1256 = vld [vmem:[#allocation6 + $0xa0] sm:$0xff]
      %v1257 = vld [vmem:[#allocation6 + $0xa8] sm:$0xff]
      %v1258 = vld [vmem:[#allocation6 + $0xb0] sm:$0xff]
      %v1259 = vld [vmem:[#allocation6 + $0xb8] sm:$0xff]
      %v1260 = vld [vmem:[#allocation6 + $0xc0] sm:$0xff]
      %v1261 = vld [vmem:[#allocation6 + $0xc8] sm:$0xff]
      %v1262 = vld [vmem:[#allocation6 + $0xd0] sm:$0xff]
      %v1263 = vld [vmem:[#allocation6 + $0xd8] sm:$0xff]
      %v1264 = vld [vmem:[#allocation6 + $0xe0] sm:$0xff]
      %v1265 = vld [vmem:[#allocation6 + $0xe8] sm:$0xff]
      %v1266 = vld [vmem:[#allocation6 + $0xf0] sm:$0xff]
      %v1267 = vld [vmem:[#allocation6 + $0xf8] sm:$0xff]
      %v1268 = vld [vmem:[#allocation6 + $0x100] sm:$0xff]
      %v1269 = vld [vmem:[#allocation6 + $0x108] sm:$0xff]
      %v1270 = vld [vmem:[#allocation6 + $0x110] sm:$0xff]
      %v1271 = vld [vmem:[#allocation6 + $0x118] sm:$0xff]
      %v1272 = vld [vmem:[#allocation6 + $0x120] sm:$0xff]
      %v1273 = vld [vmem:[#allocation6 + $0x128] sm:$0xff]
      %v1274 = vld [vmem:[#allocation6 + $0x130] sm:$0xff]
      %v1275 = vld [vmem:[#allocation6 + $0x138] sm:$0xff]
      %v1276 = vld [vmem:[#allocation6 + $0x140] sm:$0xff]
      %v1277 = vld [vmem:[#allocation6 + $0x148] sm:$0xff]
      %v1278 = vld [vmem:[#allocation6 + $0x150] sm:$0xff]
      %v1279 = vld [vmem:[#allocation6 + $0x158] sm:$0xff]
      %v1280 = vld [vmem:[#allocation6 + $0x160] sm:$0xff]
      %v1281 = vld [vmem:[#allocation6 + $0x168] sm:$0xff]
      %v1282 = vld [vmem:[#allocation6 + $0x170] sm:$0xff]
      %v1283 = vld [vmem:[#allocation6 + $0x178] sm:$0xff]
      %v1284 = vld [vmem:[#allocation6 + $0x180] sm:$0xff]
      %v1285 = vld [vmem:[#allocation6 + $0x188] sm:$0xff]
      %v1286 = vld [vmem:[#allocation6 + $0x190] sm:$0xff]
      %v1287 = vld [vmem:[#allocation6 + $0x198] sm:$0xff]
      %v1288 = vld [vmem:[#allocation6 + $0x1a0] sm:$0xff]
      %v1289 = vld [vmem:[#allocation6 + $0x1a8] sm:$0xff]
      %v1290 = vld [vmem:[#allocation6 + $0x1b0] sm:$0xff]
      %v1291 = vld [vmem:[#allocation6 + $0x1b8] sm:$0xff]
      %v1292 = vld [vmem:[#allocation6 + $0x1c0] sm:$0xff]
      %v1293 = vld [vmem:[#allocation6 + $0x1c8] sm:$0xff]
      %v1294 = vld [vmem:[#allocation6 + $0x1d0] sm:$0xff]
      %v1295 = vld [vmem:[#allocation6 + $0x1d8] sm:$0xff]
      %v1296 = vld [vmem:[#allocation6 + $0x1e0] sm:$0xff]
      %v1297 = vld [vmem:[#allocation6 + $0x1e8] sm:$0xff]
      %v1298 = vld [vmem:[#allocation6 + $0x1f0] sm:$0xff]
      %v1299 = vld [vmem:[#allocation6 + $0x1f8] sm:$0xff]
      %v1300 = vld [vmem:[#allocation6 + $0x200] sm:$0xff]
      %v1301 = vld [vmem:[#allocation6 + $0x208] sm:$0xff]
      %v1302 = vld [vmem:[#allocation6 + $0x210] sm:$0xff]
      %v1303 = vld [vmem:[#allocation6 + $0x218] sm:$0xff]
      %v1304 = vld [vmem:[#allocation6 + $0x220] sm:$0xff]
      %v1305 = vld [vmem:[#allocation6 + $0x228] sm:$0xff]
      %v1306 = vld [vmem:[#allocation6 + $0x230] sm:$0xff]
      %v1307 = vld [vmem:[#allocation6 + $0x238] sm:$0xff]
      %v1308 = vld [vmem:[#allocation6 + $0x240] sm:$0xff]
      %v1309 = vld [vmem:[#allocation6 + $0x248] sm:$0xff]
      %v1310 = vld [vmem:[#allocation6 + $0x250] sm:$0xff]
      %v1311 = vld [vmem:[#allocation6 + $0x258] sm:$0xff]
      %v1312 = vld [vmem:[#allocation6 + $0x260] sm:$0xff]
      %v1313 = vld [vmem:[#allocation6 + $0x268] sm:$0xff]
      %v1314 = vld [vmem:[#allocation6 + $0x270] sm:$0xff]
      %v1315 = vld [vmem:[#allocation6 + $0x278] sm:$0xff]
      %v1316 = vld [vmem:[#allocation6 + $0x280] sm:$0xff]
      %v1317 = vld [vmem:[#allocation6 + $0x288] sm:$0xff]
      %v1318 = vld [vmem:[#allocation6 + $0x290] sm:$0xff]
      %v1319 = vld [vmem:[#allocation6 + $0x298] sm:$0xff]
      %v1320 = vld [vmem:[#allocation6 + $0x2a0] sm:$0xff]
      %v1321 = vld [vmem:[#allocation6 + $0x2a8] sm:$0xff]
      %v1322 = vld [vmem:[#allocation6 + $0x2b0] sm:$0xff]
      %v1323 = vld [vmem:[#allocation6 + $0x2b8] sm:$0xff]
      %v1324 = vld [vmem:[#allocation6 + $0x2c0] sm:$0xff]
      %v1325 = vld [vmem:[#allocation6 + $0x2c8] sm:$0xff]
      %v1326 = vld [vmem:[#allocation6 + $0x2d0] sm:$0xff]
      %v1327 = vld [vmem:[#allocation6 + $0x2d8] sm:$0xff]
      %v1328 = vld [vmem:[#allocation6 + $0x2e0] sm:$0xff]
      %v1329 = vld [vmem:[#allocation6 + $0x2e8] sm:$0xff]
      %v1330 = vld [vmem:[#allocation6 + $0x2f0] sm:$0xff]
      %v1331 = vld [vmem:[#allocation6 + $0x2f8] sm:$0xff]
      %v1332 = vld [vmem:[#allocation6 + $0x300] sm:$0xff]
      %v1333 = vld [vmem:[#allocation6 + $0x308] sm:$0xff]
      %v1334 = vld [vmem:[#allocation6 + $0x310] sm:$0xff]
      %v1335 = vld [vmem:[#allocation6 + $0x318] sm:$0xff]
      %v1336 = vld [vmem:[#allocation6 + $0x320] sm:$0xff]
      %v1337 = vld [vmem:[#allocation6 + $0x328] sm:$0xff]
      %v1338 = vld [vmem:[#allocation6 + $0x330] sm:$0xff]
      %v1339 = vld [vmem:[#allocation6 + $0x338] sm:$0xff]
      %v1340 = vld [vmem:[#allocation6 + $0x340] sm:$0xff]
      %v1341 = vld [vmem:[#allocation6 + $0x348] sm:$0xff]
      %v1342 = vld [vmem:[#allocation6 + $0x350] sm:$0xff]
      %v1343 = vld [vmem:[#allocation6 + $0x358] sm:$0xff]
      %v1344 = vld [vmem:[#allocation6 + $0x360] sm:$0xff]
      %v1345 = vld [vmem:[#allocation6 + $0x368] sm:$0xff]
      %v1346 = vld [vmem:[#allocation6 + $0x370] sm:$0xff]
      %v1347 = vld [vmem:[#allocation6 + $0x378] sm:$0xff]
      %v1348 = vld [vmem:[#allocation6 + $0x380] sm:$0xff]
      %v1349 = vld [vmem:[#allocation6 + $0x388] sm:$0xff]
      %v1350 = vld [vmem:[#allocation6 + $0x390] sm:$0xff]
      %v1351 = vld [vmem:[#allocation6 + $0x398] sm:$0xff]
      %v1352 = vld [vmem:[#allocation6 + $0x3a0] sm:$0xff]
      %v1353 = vld [vmem:[#allocation6 + $0x3a8] sm:$0xff]
      %v1354 = vld [vmem:[#allocation6 + $0x3b0] sm:$0xff]
      %v1355 = vld [vmem:[#allocation6 + $0x3b8] sm:$0xff]
      %v1356 = vld [vmem:[#allocation6 + $0x3c0] sm:$0xff]
      %v1357 = vld [vmem:[#allocation6 + $0x3c8] sm:$0xff]
      %v1358 = vld [vmem:[#allocation6 + $0x3d0] sm:$0xff]
      %v1359 = vld [vmem:[#allocation6 + $0x3d8] sm:$0xff]
      %v1360 = vld [vmem:[#allocation6 + $0x3e0] sm:$0xff]
      %v1361 = vld [vmem:[#allocation6 + $0x3e8] sm:$0xff]
      %v1362 = vld [vmem:[#allocation6 + $0x3f0] sm:$0xff]
      %v1363 = vld [vmem:[#allocation6 + $0x3f8] sm:$0xff]
      %v1364 = vld [vmem:[#allocation6 + $0x400] sm:$0xff]
      %v1365 = vld [vmem:[#allocation6 + $0x408] sm:$0xff]
      %v1366 = vld [vmem:[#allocation6 + $0x410] sm:$0xff]
      %v1367 = vld [vmem:[#allocation6 + $0x418] sm:$0xff]
      %v1368 = vld [vmem:[#allocation6 + $0x420] sm:$0xff]
      %v1369 = vld [vmem:[#allocation6 + $0x428] sm:$0xff]
      %v1370 = vld [vmem:[#allocation6 + $0x430] sm:$0xff]
      %v1371 = vld [vmem:[#allocation6 + $0x438] sm:$0xff]
      %v1372 = vld [vmem:[#allocation6 + $0x440] sm:$0xff]
      %v1373 = vld [vmem:[#allocation6 + $0x448] sm:$0xff]
      %v1374 = vld [vmem:[#allocation6 + $0x450] sm:$0xff]
      %v1375 = vld [vmem:[#allocation6 + $0x458] sm:$0xff]
      %v1376 = vld [vmem:[#allocation6 + $0x460] sm:$0xff]
      %v1377 = vld [vmem:[#allocation6 + $0x468] sm:$0xff]
      %v1378 = vld [vmem:[#allocation6 + $0x470] sm:$0xff]
      %v1379 = vld [vmem:[#allocation6 + $0x478] sm:$0xff]
      %v1380 = vld [vmem:[#allocation6 + $0x480] sm:$0xff]
      %v1381 = vld [vmem:[#allocation6 + $0x488] sm:$0xff]
      %v1382 = vld [vmem:[#allocation6 + $0x490] sm:$0xff]
      %v1383 = vld [vmem:[#allocation6 + $0x498] sm:$0xff]
      %v1384 = vld [vmem:[#allocation6 + $0x4a0] sm:$0xff]
      %v1385 = vld [vmem:[#allocation6 + $0x4a8] sm:$0xff]
      %v1386 = vld [vmem:[#allocation6 + $0x4b0] sm:$0xff]
      %v1387 = vld [vmem:[#allocation6 + $0x4b8] sm:$0xff]
      %v1388 = vld [vmem:[#allocation6 + $0x4c0] sm:$0xff]
      %v1389 = vld [vmem:[#allocation6 + $0x4c8] sm:$0xff]
      %v1390 = vld [vmem:[#allocation6 + $0x4d0] sm:$0xff]
      %v1391 = vld [vmem:[#allocation6 + $0x4d8] sm:$0xff]
      %v1392 = vld [vmem:[#allocation6 + $0x4e0] sm:$0xff]
      %v1393 = vld [vmem:[#allocation6 + $0x4e8] sm:$0xff]
      %v1394 = vld [vmem:[#allocation6 + $0x4f0] sm:$0xff]
      %v1395 = vld [vmem:[#allocation6 + $0x4f8] sm:$0xff]
      %v1396 = vld [vmem:[#allocation6 + $0x500] sm:$0xff]
      %v1397 = vld [vmem:[#allocation6 + $0x508] sm:$0xff]
      %v1398 = vld [vmem:[#allocation6 + $0x510] sm:$0xff]
      %v1399 = vld [vmem:[#allocation6 + $0x518] sm:$0xff]
      %v1400 = vld [vmem:[#allocation6 + $0x520] sm:$0xff]
      %v1401 = vld [vmem:[#allocation6 + $0x528] sm:$0xff]
      %v1402 = vld [vmem:[#allocation6 + $0x530] sm:$0xff]
      %v1403 = vld [vmem:[#allocation6 + $0x538] sm:$0xff]
      %v1404 = vld [vmem:[#allocation6 + $0x540] sm:$0xff]
      %v1405 = vld [vmem:[#allocation6 + $0x548] sm:$0xff]
      %v1406 = vld [vmem:[#allocation6 + $0x550] sm:$0xff]
      %v1407 = vld [vmem:[#allocation6 + $0x558] sm:$0xff]
      %v1408 = vld [vmem:[#allocation6 + $0x560] sm:$0xff]
      %v1409 = vld [vmem:[#allocation6 + $0x568] sm:$0xff]
      %v1410 = vld [vmem:[#allocation6 + $0x570] sm:$0xff]
      %v1411 = vld [vmem:[#allocation6 + $0x578] sm:$0xff]
      %v1412 = vld [vmem:[#allocation6 + $0x580] sm:$0xff]
      %v1413 = vld [vmem:[#allocation6 + $0x588] sm:$0xff]
      %v1414 = vld [vmem:[#allocation6 + $0x590] sm:$0xff]
      %v1415 = vld [vmem:[#allocation6 + $0x598] sm:$0xff]
      %v1416 = vld [vmem:[#allocation6 + $0x5a0] sm:$0xff]
      %v1417 = vld [vmem:[#allocation6 + $0x5a8] sm:$0xff]
      %v1418 = vld [vmem:[#allocation6 + $0x5b0] sm:$0xff]
      %v1419 = vld [vmem:[#allocation6 + $0x5b8] sm:$0xff]
      %v1420 = vld [vmem:[#allocation6 + $0x5c0] sm:$0xff]
      %v1421 = vld [vmem:[#allocation6 + $0x5c8] sm:$0xff]
      %v1422 = vld [vmem:[#allocation6 + $0x5d0] sm:$0xff]
      %v1423 = vld [vmem:[#allocation6 + $0x5d8] sm:$0xff]
      %v1424 = vld [vmem:[#allocation6 + $0x5e0] sm:$0xff]
      %v1425 = vld [vmem:[#allocation6 + $0x5e8] sm:$0xff]
      %v1426 = vld [vmem:[#allocation6 + $0x5f0] sm:$0xff]
      %v1427 = vld [vmem:[#allocation6 + $0x5f8] sm:$0xff]
      %v1428 = vld [vmem:[#allocation6 + $0x600] sm:$0xff]
      %v1429 = vld [vmem:[#allocation6 + $0x608] sm:$0xff]
      %v1430 = vld [vmem:[#allocation6 + $0x610] sm:$0xff]
      %v1431 = vld [vmem:[#allocation6 + $0x618] sm:$0xff]
      %v1432 = vld [vmem:[#allocation6 + $0x620] sm:$0xff]
      %v1433 = vld [vmem:[#allocation6 + $0x628] sm:$0xff]
      %v1434 = vld [vmem:[#allocation6 + $0x630] sm:$0xff]
      %v1435 = vld [vmem:[#allocation6 + $0x638] sm:$0xff]
      %v1436 = vld [vmem:[#allocation6 + $0x640] sm:$0xff]
      %v1437 = vld [vmem:[#allocation6 + $0x648] sm:$0xff]
      %v1438 = vld [vmem:[#allocation6 + $0x650] sm:$0xff]
      %v1439 = vld [vmem:[#allocation6 + $0x658] sm:$0xff]
      %v1440 = vld [vmem:[#allocation6 + $0x660] sm:$0xff]
      %v1441 = vld [vmem:[#allocation6 + $0x668] sm:$0xff]
      %v1442 = vld [vmem:[#allocation6 + $0x670] sm:$0xff]
      %v1443 = vld [vmem:[#allocation6 + $0x678] sm:$0xff]
      %v1444 = vld [vmem:[#allocation6 + $0x680] sm:$0xff]
      %v1445 = vld [vmem:[#allocation6 + $0x688] sm:$0xff]
      %v1446 = vld [vmem:[#allocation6 + $0x690] sm:$0xff]
      %v1447 = vld [vmem:[#allocation6 + $0x698] sm:$0xff]
      %v1448 = vld [vmem:[#allocation6 + $0x6a0] sm:$0xff]
      %v1449 = vld [vmem:[#allocation6 + $0x6a8] sm:$0xff]
      %v1450 = vld [vmem:[#allocation6 + $0x6b0] sm:$0xff]
      %v1451 = vld [vmem:[#allocation6 + $0x6b8] sm:$0xff]
      %v1452 = vld [vmem:[#allocation6 + $0x6c0] sm:$0xff]
      %v1453 = vld [vmem:[#allocation6 + $0x6c8] sm:$0xff]
      %v1454 = vld [vmem:[#allocation6 + $0x6d0] sm:$0xff]
      %v1455 = vld [vmem:[#allocation6 + $0x6d8] sm:$0xff]
      %v1456 = vld [vmem:[#allocation6 + $0x6e0] sm:$0xff]
      %v1457 = vld [vmem:[#allocation6 + $0x6e8] sm:$0xff]
      %v1458 = vld [vmem:[#allocation6 + $0x6f0] sm:$0xff]
      %v1459 = vld [vmem:[#allocation6 + $0x6f8] sm:$0xff]
      %v1460 = vld [vmem:[#allocation6 + $0x700] sm:$0xff]
      %v1461 = vld [vmem:[#allocation6 + $0x708] sm:$0xff]
      %v1462 = vld [vmem:[#allocation6 + $0x710] sm:$0xff]
      %v1463 = vld [vmem:[#allocation6 + $0x718] sm:$0xff]
      %v1464 = vld [vmem:[#allocation6 + $0x720] sm:$0xff]
      %v1465 = vld [vmem:[#allocation6 + $0x728] sm:$0xff]
      %v1466 = vld [vmem:[#allocation6 + $0x730] sm:$0xff]
      %v1467 = vld [vmem:[#allocation6 + $0x738] sm:$0xff]
      %v1468 = vld [vmem:[#allocation6 + $0x740] sm:$0xff]
      %v1469 = vld [vmem:[#allocation6 + $0x748] sm:$0xff]
      %v1470 = vld [vmem:[#allocation6 + $0x750] sm:$0xff]
      %v1471 = vld [vmem:[#allocation6 + $0x758] sm:$0xff]
      %v1472 = vld [vmem:[#allocation6 + $0x760] sm:$0xff]
      %v1473 = vld [vmem:[#allocation6 + $0x768] sm:$0xff]
      %v1474 = vld [vmem:[#allocation6 + $0x770] sm:$0xff]
      %v1475 = vld [vmem:[#allocation6 + $0x778] sm:$0xff]
      %v1476 = vld [vmem:[#allocation6 + $0x780] sm:$0xff]
      %v1477 = vld [vmem:[#allocation6 + $0x788] sm:$0xff]
      %v1478 = vld [vmem:[#allocation6 + $0x790] sm:$0xff]
      %v1479 = vld [vmem:[#allocation6 + $0x798] sm:$0xff]
      %v1480 = vld [vmem:[#allocation6 + $0x7a0] sm:$0xff]
      %v1481 = vld [vmem:[#allocation6 + $0x7a8] sm:$0xff]
      %v1482 = vld [vmem:[#allocation6 + $0x7b0] sm:$0xff]
      %v1483 = vld [vmem:[#allocation6 + $0x7b8] sm:$0xff]
      %v1484 = vld [vmem:[#allocation6 + $0x7c0] sm:$0xff]
      %v1485 = vld [vmem:[#allocation6 + $0x7c8] sm:$0xff]
      %v1486 = vld [vmem:[#allocation6 + $0x7d0] sm:$0xff]
      %v1487 = vld [vmem:[#allocation6 + $0x7d8] sm:$0xff]
      %v1488 = vld [vmem:[#allocation6 + $0x7e0] sm:$0xff]
      %v1489 = vld [vmem:[#allocation6 + $0x7e8] sm:$0xff]
      %v1490 = vld [vmem:[#allocation6 + $0x7f0] sm:$0xff]
      %v1491 = vld [vmem:[#allocation6 + $0x7f8] sm:$0xff]
      %v1492 = vld [vmem:[%s8] sm:$0xf]
      %v1494 = vlaneseq
      %v1495 = vshrl.u32 %v1494, 7
      %v1496 = vsub.s32 0, %v1495
      %v1497 = vrot.slane %v1492, %v1496
      %v1498 = vlaneseq
      %v1499 = vshrl.u32 %v1498, 7
      %v1500 = vsub.s32 1, %v1499
      %v1501 = vrot.slane %v1492, %v1500
      %v1502 = vlaneseq
      %v1503 = vshrl.u32 %v1502, 7
      %v1504 = vsub.s32 2, %v1503
      %v1505 = vrot.slane %v1492, %v1504
      %v1506 = vlaneseq
      %v1507 = vshrl.u32 %v1506, 7
      %v1508 = vsub.s32 3, %v1507
      %v1509 = vrot.slane %v1492, %v1508
      %v1770 = vunpack.c.l.b16 %v1236
      %v1771 = vunpack.c.h.b16 %v1236
      %v1772 = vunpack.c.l.b16 %v1237
      %v1773 = vunpack.c.h.b16 %v1237
      %v1774 = vunpack.c.l.b16 %v1238
      %v1775 = vunpack.c.h.b16 %v1238
      %v1776 = vunpack.c.l.b16 %v1239
      %v1777 = vunpack.c.h.b16 %v1239
      %v1778 = vunpack.c.l.b16 %v1240
      %v1779 = vunpack.c.h.b16 %v1240
      %v1780 = vunpack.c.l.b16 %v1241
      %v1781 = vunpack.c.h.b16 %v1241
      %v1782 = vunpack.c.l.b16 %v1242
      %v1783 = vunpack.c.h.b16 %v1242
      %v1784 = vunpack.c.l.b16 %v1243
      %v1785 = vunpack.c.h.b16 %v1243
      %v1786 = vunpack.c.l.b16 %v1244
      %v1787 = vunpack.c.h.b16 %v1244
      %v1788 = vunpack.c.l.b16 %v1245
      %v1789 = vunpack.c.h.b16 %v1245
      %v1790 = vunpack.c.l.b16 %v1246
      %v1791 = vunpack.c.h.b16 %v1246
      %v1792 = vunpack.c.l.b16 %v1247
      %v1793 = vunpack.c.h.b16 %v1247
      %v1794 = vunpack.c.l.b16 %v1248
      %v1795 = vunpack.c.h.b16 %v1248
      %v1796 = vunpack.c.l.b16 %v1249
      %v1797 = vunpack.c.h.b16 %v1249
      %v1798 = vunpack.c.l.b16 %v1250
      %v1799 = vunpack.c.h.b16 %v1250
      %v1800 = vunpack.c.l.b16 %v1251
      %v1801 = vunpack.c.h.b16 %v1251
      %v1802 = vunpack.c.l.b16 %v1252
      %v1803 = vunpack.c.h.b16 %v1252
      %v1804 = vunpack.c.l.b16 %v1253
      %v1805 = vunpack.c.h.b16 %v1253
      %v1806 = vunpack.c.l.b16 %v1254
      %v1807 = vunpack.c.h.b16 %v1254
      %v1808 = vunpack.c.l.b16 %v1255
      %v1809 = vunpack.c.h.b16 %v1255
      %v1810 = vunpack.c.l.b16 %v1256
      %v1811 = vunpack.c.h.b16 %v1256
      %v1812 = vunpack.c.l.b16 %v1257
      %v1813 = vunpack.c.h.b16 %v1257
      %v1814 = vunpack.c.l.b16 %v1258
      %v1815 = vunpack.c.h.b16 %v1258
      %v1816 = vunpack.c.l.b16 %v1259
      %v1817 = vunpack.c.h.b16 %v1259
      %v1818 = vunpack.c.l.b16 %v1260
      %v1819 = vunpack.c.h.b16 %v1260
      %v1820 = vunpack.c.l.b16 %v1261
      %v1821 = vunpack.c.h.b16 %v1261
      %v1822 = vunpack.c.l.b16 %v1262
      %v1823 = vunpack.c.h.b16 %v1262
      %v1824 = vunpack.c.l.b16 %v1263
      %v1825 = vunpack.c.h.b16 %v1263
      %v1826 = vunpack.c.l.b16 %v1264
      %v1827 = vunpack.c.h.b16 %v1264
      %v1828 = vunpack.c.l.b16 %v1265
      %v1829 = vunpack.c.h.b16 %v1265
      %v1830 = vunpack.c.l.b16 %v1266
      %v1831 = vunpack.c.h.b16 %v1266
      %v1832 = vunpack.c.l.b16 %v1267
      %v1833 = vunpack.c.h.b16 %v1267
      %v1834 = vunpack.c.l.b16 %v1268
      %v1835 = vunpack.c.h.b16 %v1268
      %v1836 = vunpack.c.l.b16 %v1269
      %v1837 = vunpack.c.h.b16 %v1269
      %v1838 = vunpack.c.l.b16 %v1270
      %v1839 = vunpack.c.h.b16 %v1270
      %v1840 = vunpack.c.l.b16 %v1271
      %v1841 = vunpack.c.h.b16 %v1271
      %v1842 = vunpack.c.l.b16 %v1272
      %v1843 = vunpack.c.h.b16 %v1272
      %v1844 = vunpack.c.l.b16 %v1273
      %v1845 = vunpack.c.h.b16 %v1273
      %v1846 = vunpack.c.l.b16 %v1274
      %v1847 = vunpack.c.h.b16 %v1274
      %v1848 = vunpack.c.l.b16 %v1275
      %v1849 = vunpack.c.h.b16 %v1275
      %v1850 = vunpack.c.l.b16 %v1276
      %v1851 = vunpack.c.h.b16 %v1276
      %v1852 = vunpack.c.l.b16 %v1277
      %v1853 = vunpack.c.h.b16 %v1277
      %v1854 = vunpack.c.l.b16 %v1278
      %v1855 = vunpack.c.h.b16 %v1278
      %v1856 = vunpack.c.l.b16 %v1279
      %v1857 = vunpack.c.h.b16 %v1279
      %v1858 = vunpack.c.l.b16 %v1280
      %v1859 = vunpack.c.h.b16 %v1280
      %v1860 = vunpack.c.l.b16 %v1281
      %v1861 = vunpack.c.h.b16 %v1281
      %v1862 = vunpack.c.l.b16 %v1282
      %v1863 = vunpack.c.h.b16 %v1282
      %v1864 = vunpack.c.l.b16 %v1283
      %v1865 = vunpack.c.h.b16 %v1283
      %v1866 = vunpack.c.l.b16 %v1284
      %v1867 = vunpack.c.h.b16 %v1284
      %v1868 = vunpack.c.l.b16 %v1285
      %v1869 = vunpack.c.h.b16 %v1285
      %v1870 = vunpack.c.l.b16 %v1286
      %v1871 = vunpack.c.h.b16 %v1286
      %v1872 = vunpack.c.l.b16 %v1287
      %v1873 = vunpack.c.h.b16 %v1287
      %v1874 = vunpack.c.l.b16 %v1288
      %v1875 = vunpack.c.h.b16 %v1288
      %v1876 = vunpack.c.l.b16 %v1289
      %v1877 = vunpack.c.h.b16 %v1289
      %v1878 = vunpack.c.l.b16 %v1290
      %v1879 = vunpack.c.h.b16 %v1290
      %v1880 = vunpack.c.l.b16 %v1291
      %v1881 = vunpack.c.h.b16 %v1291
      %v1882 = vunpack.c.l.b16 %v1292
      %v1883 = vunpack.c.h.b16 %v1292
      %v1884 = vunpack.c.l.b16 %v1293
      %v1885 = vunpack.c.h.b16 %v1293
      %v1886 = vunpack.c.l.b16 %v1294
      %v1887 = vunpack.c.h.b16 %v1294
      %v1888 = vunpack.c.l.b16 %v1295
      %v1889 = vunpack.c.h.b16 %v1295
      %v1890 = vunpack.c.l.b16 %v1296
      %v1891 = vunpack.c.h.b16 %v1296
      %v1892 = vunpack.c.l.b16 %v1297
      %v1893 = vunpack.c.h.b16 %v1297
      %v1894 = vunpack.c.l.b16 %v1298
      %v1895 = vunpack.c.h.b16 %v1298
      %v1896 = vunpack.c.l.b16 %v1299
      %v1897 = vunpack.c.h.b16 %v1299
      %v1898 = vunpack.c.l.b16 %v1300
      %v1899 = vunpack.c.h.b16 %v1300
      %v1900 = vunpack.c.l.b16 %v1301
      %v1901 = vunpack.c.h.b16 %v1301
      %v1902 = vunpack.c.l.b16 %v1302
      %v1903 = vunpack.c.h.b16 %v1302
      %v1904 = vunpack.c.l.b16 %v1303
      %v1905 = vunpack.c.h.b16 %v1303
      %v1906 = vunpack.c.l.b16 %v1304
      %v1907 = vunpack.c.h.b16 %v1304
      %v1908 = vunpack.c.l.b16 %v1305
      %v1909 = vunpack.c.h.b16 %v1305
      %v1910 = vunpack.c.l.b16 %v1306
      %v1911 = vunpack.c.h.b16 %v1306
      %v1912 = vunpack.c.l.b16 %v1307
      %v1913 = vunpack.c.h.b16 %v1307
      %v1914 = vunpack.c.l.b16 %v1308
      %v1915 = vunpack.c.h.b16 %v1308
      %v1916 = vunpack.c.l.b16 %v1309
      %v1917 = vunpack.c.h.b16 %v1309
      %v1918 = vunpack.c.l.b16 %v1310
      %v1919 = vunpack.c.h.b16 %v1310
      %v1920 = vunpack.c.l.b16 %v1311
      %v1921 = vunpack.c.h.b16 %v1311
      %v1922 = vunpack.c.l.b16 %v1312
      %v1923 = vunpack.c.h.b16 %v1312
      %v1924 = vunpack.c.l.b16 %v1313
      %v1925 = vunpack.c.h.b16 %v1313
      %v1926 = vunpack.c.l.b16 %v1314
      %v1927 = vunpack.c.h.b16 %v1314
      %v1928 = vunpack.c.l.b16 %v1315
      %v1929 = vunpack.c.h.b16 %v1315
      %v1930 = vunpack.c.l.b16 %v1316
      %v1931 = vunpack.c.h.b16 %v1316
      %v1932 = vunpack.c.l.b16 %v1317
      %v1933 = vunpack.c.h.b16 %v1317
      %v1934 = vunpack.c.l.b16 %v1318
      %v1935 = vunpack.c.h.b16 %v1318
      %v1936 = vunpack.c.l.b16 %v1319
      %v1937 = vunpack.c.h.b16 %v1319
      %v1938 = vunpack.c.l.b16 %v1320
      %v1939 = vunpack.c.h.b16 %v1320
      %v1940 = vunpack.c.l.b16 %v1321
      %v1941 = vunpack.c.h.b16 %v1321
      %v1942 = vunpack.c.l.b16 %v1322
      %v1943 = vunpack.c.h.b16 %v1322
      %v1944 = vunpack.c.l.b16 %v1323
      %v1945 = vunpack.c.h.b16 %v1323
      %v1946 = vunpack.c.l.b16 %v1324
      %v1947 = vunpack.c.h.b16 %v1324
      %v1948 = vunpack.c.l.b16 %v1325
      %v1949 = vunpack.c.h.b16 %v1325
      %v1950 = vunpack.c.l.b16 %v1326
      %v1951 = vunpack.c.h.b16 %v1326
      %v1952 = vunpack.c.l.b16 %v1327
      %v1953 = vunpack.c.h.b16 %v1327
      %v1954 = vunpack.c.l.b16 %v1328
      %v1955 = vunpack.c.h.b16 %v1328
      %v1956 = vunpack.c.l.b16 %v1329
      %v1957 = vunpack.c.h.b16 %v1329
      %v1958 = vunpack.c.l.b16 %v1330
      %v1959 = vunpack.c.h.b16 %v1330
      %v1960 = vunpack.c.l.b16 %v1331
      %v1961 = vunpack.c.h.b16 %v1331
      %v1962 = vunpack.c.l.b16 %v1332
      %v1963 = vunpack.c.h.b16 %v1332
      %v1964 = vunpack.c.l.b16 %v1333
      %v1965 = vunpack.c.h.b16 %v1333
      %v1966 = vunpack.c.l.b16 %v1334
      %v1967 = vunpack.c.h.b16 %v1334
      %v1968 = vunpack.c.l.b16 %v1335
      %v1969 = vunpack.c.h.b16 %v1335
      %v1970 = vunpack.c.l.b16 %v1336
      %v1971 = vunpack.c.h.b16 %v1336
      %v1972 = vunpack.c.l.b16 %v1337
      %v1973 = vunpack.c.h.b16 %v1337
      %v1974 = vunpack.c.l.b16 %v1338
      %v1975 = vunpack.c.h.b16 %v1338
      %v1976 = vunpack.c.l.b16 %v1339
      %v1977 = vunpack.c.h.b16 %v1339
      %v1978 = vunpack.c.l.b16 %v1340
      %v1979 = vunpack.c.h.b16 %v1340
      %v1980 = vunpack.c.l.b16 %v1341
      %v1981 = vunpack.c.h.b16 %v1341
      %v1982 = vunpack.c.l.b16 %v1342
      %v1983 = vunpack.c.h.b16 %v1342
      %v1984 = vunpack.c.l.b16 %v1343
      %v1985 = vunpack.c.h.b16 %v1343
      %v1986 = vunpack.c.l.b16 %v1344
      %v1987 = vunpack.c.h.b16 %v1344
      %v1988 = vunpack.c.l.b16 %v1345
      %v1989 = vunpack.c.h.b16 %v1345
      %v1990 = vunpack.c.l.b16 %v1346
      %v1991 = vunpack.c.h.b16 %v1346
      %v1992 = vunpack.c.l.b16 %v1347
      %v1993 = vunpack.c.h.b16 %v1347
      %v1994 = vunpack.c.l.b16 %v1348
      %v1995 = vunpack.c.h.b16 %v1348
      %v1996 = vunpack.c.l.b16 %v1349
      %v1997 = vunpack.c.h.b16 %v1349
      %v1998 = vunpack.c.l.b16 %v1350
      %v1999 = vunpack.c.h.b16 %v1350
      %v2000 = vunpack.c.l.b16 %v1351
      %v2001 = vunpack.c.h.b16 %v1351
      %v2002 = vunpack.c.l.b16 %v1352
      %v2003 = vunpack.c.h.b16 %v1352
      %v2004 = vunpack.c.l.b16 %v1353
      %v2005 = vunpack.c.h.b16 %v1353
      %v2006 = vunpack.c.l.b16 %v1354
      %v2007 = vunpack.c.h.b16 %v1354
      %v2008 = vunpack.c.l.b16 %v1355
      %v2009 = vunpack.c.h.b16 %v1355
      %v2010 = vunpack.c.l.b16 %v1356
      %v2011 = vunpack.c.h.b16 %v1356
      %v2012 = vunpack.c.l.b16 %v1357
      %v2013 = vunpack.c.h.b16 %v1357
      %v2014 = vunpack.c.l.b16 %v1358
      %v2015 = vunpack.c.h.b16 %v1358
      %v2016 = vunpack.c.l.b16 %v1359
      %v2017 = vunpack.c.h.b16 %v1359
      %v2018 = vunpack.c.l.b16 %v1360
      %v2019 = vunpack.c.h.b16 %v1360
      %v2020 = vunpack.c.l.b16 %v1361
      %v2021 = vunpack.c.h.b16 %v1361
      %v2022 = vunpack.c.l.b16 %v1362
      %v2023 = vunpack.c.h.b16 %v1362
      %v2024 = vunpack.c.l.b16 %v1363
      %v2025 = vunpack.c.h.b16 %v1363
      %v2026 = vunpack.c.l.b16 %v1364
      %v2027 = vunpack.c.h.b16 %v1364
      %v2028 = vunpack.c.l.b16 %v1365
      %v2029 = vunpack.c.h.b16 %v1365
      %v2030 = vunpack.c.l.b16 %v1366
      %v2031 = vunpack.c.h.b16 %v1366
      %v2032 = vunpack.c.l.b16 %v1367
      %v2033 = vunpack.c.h.b16 %v1367
      %v2034 = vunpack.c.l.b16 %v1368
      %v2035 = vunpack.c.h.b16 %v1368
      %v2036 = vunpack.c.l.b16 %v1369
      %v2037 = vunpack.c.h.b16 %v1369
      %v2038 = vunpack.c.l.b16 %v1370
      %v2039 = vunpack.c.h.b16 %v1370
      %v2040 = vunpack.c.l.b16 %v1371
      %v2041 = vunpack.c.h.b16 %v1371
      %v2042 = vunpack.c.l.b16 %v1372
      %v2043 = vunpack.c.h.b16 %v1372
      %v2044 = vunpack.c.l.b16 %v1373
      %v2045 = vunpack.c.h.b16 %v1373
      %v2046 = vunpack.c.l.b16 %v1374
      %v2047 = vunpack.c.h.b16 %v1374
      %v2048 = vunpack.c.l.b16 %v1375
      %v2049 = vunpack.c.h.b16 %v1375
      %v2050 = vunpack.c.l.b16 %v1376
      %v2051 = vunpack.c.h.b16 %v1376
      %v2052 = vunpack.c.l.b16 %v1377
      %v2053 = vunpack.c.h.b16 %v1377
      %v2054 = vunpack.c.l.b16 %v1378
      %v2055 = vunpack.c.h.b16 %v1378
      %v2056 = vunpack.c.l.b16 %v1379
      %v2057 = vunpack.c.h.b16 %v1379
      %v2058 = vunpack.c.l.b16 %v1380
      %v2059 = vunpack.c.h.b16 %v1380
      %v2060 = vunpack.c.l.b16 %v1381
      %v2061 = vunpack.c.h.b16 %v1381
      %v2062 = vunpack.c.l.b16 %v1382
      %v2063 = vunpack.c.h.b16 %v1382
      %v2064 = vunpack.c.l.b16 %v1383
      %v2065 = vunpack.c.h.b16 %v1383
      %v2066 = vunpack.c.l.b16 %v1384
      %v2067 = vunpack.c.h.b16 %v1384
      %v2068 = vunpack.c.l.b16 %v1385
      %v2069 = vunpack.c.h.b16 %v1385
      %v2070 = vunpack.c.l.b16 %v1386
      %v2071 = vunpack.c.h.b16 %v1386
      %v2072 = vunpack.c.l.b16 %v1387
      %v2073 = vunpack.c.h.b16 %v1387
      %v2074 = vunpack.c.l.b16 %v1388
      %v2075 = vunpack.c.h.b16 %v1388
      %v2076 = vunpack.c.l.b16 %v1389
      %v2077 = vunpack.c.h.b16 %v1389
      %v2078 = vunpack.c.l.b16 %v1390
      %v2079 = vunpack.c.h.b16 %v1390
      %v2080 = vunpack.c.l.b16 %v1391
      %v2081 = vunpack.c.h.b16 %v1391
      %v2082 = vunpack.c.l.b16 %v1392
      %v2083 = vunpack.c.h.b16 %v1392
      %v2084 = vunpack.c.l.b16 %v1393
      %v2085 = vunpack.c.h.b16 %v1393
      %v2086 = vunpack.c.l.b16 %v1394
      %v2087 = vunpack.c.h.b16 %v1394
      %v2088 = vunpack.c.l.b16 %v1395
      %v2089 = vunpack.c.h.b16 %v1395
      %v2090 = vunpack.c.l.b16 %v1396
      %v2091 = vunpack.c.h.b16 %v1396
      %v2092 = vunpack.c.l.b16 %v1397
      %v2093 = vunpack.c.h.b16 %v1397
      %v2094 = vunpack.c.l.b16 %v1398
      %v2095 = vunpack.c.h.b16 %v1398
      %v2096 = vunpack.c.l.b16 %v1399
      %v2097 = vunpack.c.h.b16 %v1399
      %v2098 = vunpack.c.l.b16 %v1400
      %v2099 = vunpack.c.h.b16 %v1400
      %v2100 = vunpack.c.l.b16 %v1401
      %v2101 = vunpack.c.h.b16 %v1401
      %v2102 = vunpack.c.l.b16 %v1402
      %v2103 = vunpack.c.h.b16 %v1402
      %v2104 = vunpack.c.l.b16 %v1403
      %v2105 = vunpack.c.h.b16 %v1403
      %v2106 = vunpack.c.l.b16 %v1404
      %v2107 = vunpack.c.h.b16 %v1404
      %v2108 = vunpack.c.l.b16 %v1405
      %v2109 = vunpack.c.h.b16 %v1405
      %v2110 = vunpack.c.l.b16 %v1406
      %v2111 = vunpack.c.h.b16 %v1406
      %v2112 = vunpack.c.l.b16 %v1407
      %v2113 = vunpack.c.h.b16 %v1407
      %v2114 = vunpack.c.l.b16 %v1408
      %v2115 = vunpack.c.h.b16 %v1408
      %v2116 = vunpack.c.l.b16 %v1409
      %v2117 = vunpack.c.h.b16 %v1409
      %v2118 = vunpack.c.l.b16 %v1410
      %v2119 = vunpack.c.h.b16 %v1410
      %v2120 = vunpack.c.l.b16 %v1411
      %v2121 = vunpack.c.h.b16 %v1411
      %v2122 = vunpack.c.l.b16 %v1412
      %v2123 = vunpack.c.h.b16 %v1412
      %v2124 = vunpack.c.l.b16 %v1413
      %v2125 = vunpack.c.h.b16 %v1413
      %v2126 = vunpack.c.l.b16 %v1414
      %v2127 = vunpack.c.h.b16 %v1414
      %v2128 = vunpack.c.l.b16 %v1415
      %v2129 = vunpack.c.h.b16 %v1415
      %v2130 = vunpack.c.l.b16 %v1416
      %v2131 = vunpack.c.h.b16 %v1416
      %v2132 = vunpack.c.l.b16 %v1417
      %v2133 = vunpack.c.h.b16 %v1417
      %v2134 = vunpack.c.l.b16 %v1418
      %v2135 = vunpack.c.h.b16 %v1418
      %v2136 = vunpack.c.l.b16 %v1419
      %v2137 = vunpack.c.h.b16 %v1419
      %v2138 = vunpack.c.l.b16 %v1420
      %v2139 = vunpack.c.h.b16 %v1420
      %v2140 = vunpack.c.l.b16 %v1421
      %v2141 = vunpack.c.h.b16 %v1421
      %v2142 = vunpack.c.l.b16 %v1422
      %v2143 = vunpack.c.h.b16 %v1422
      %v2144 = vunpack.c.l.b16 %v1423
      %v2145 = vunpack.c.h.b16 %v1423
      %v2146 = vunpack.c.l.b16 %v1424
      %v2147 = vunpack.c.h.b16 %v1424
      %v2148 = vunpack.c.l.b16 %v1425
      %v2149 = vunpack.c.h.b16 %v1425
      %v2150 = vunpack.c.l.b16 %v1426
      %v2151 = vunpack.c.h.b16 %v1426
      %v2152 = vunpack.c.l.b16 %v1427
      %v2153 = vunpack.c.h.b16 %v1427
      %v2154 = vunpack.c.l.b16 %v1428
      %v2155 = vunpack.c.h.b16 %v1428
      %v2156 = vunpack.c.l.b16 %v1429
      %v2157 = vunpack.c.h.b16 %v1429
      %v2158 = vunpack.c.l.b16 %v1430
      %v2159 = vunpack.c.h.b16 %v1430
      %v2160 = vunpack.c.l.b16 %v1431
      %v2161 = vunpack.c.h.b16 %v1431
      %v2162 = vunpack.c.l.b16 %v1432
      %v2163 = vunpack.c.h.b16 %v1432
      %v2164 = vunpack.c.l.b16 %v1433
      %v2165 = vunpack.c.h.b16 %v1433
      %v2166 = vunpack.c.l.b16 %v1434
      %v2167 = vunpack.c.h.b16 %v1434
      %v2168 = vunpack.c.l.b16 %v1435
      %v2169 = vunpack.c.h.b16 %v1435
      %v2170 = vunpack.c.l.b16 %v1436
      %v2171 = vunpack.c.h.b16 %v1436
      %v2172 = vunpack.c.l.b16 %v1437
      %v2173 = vunpack.c.h.b16 %v1437
      %v2174 = vunpack.c.l.b16 %v1438
      %v2175 = vunpack.c.h.b16 %v1438
      %v2176 = vunpack.c.l.b16 %v1439
      %v2177 = vunpack.c.h.b16 %v1439
      %v2178 = vunpack.c.l.b16 %v1440
      %v2179 = vunpack.c.h.b16 %v1440
      %v2180 = vunpack.c.l.b16 %v1441
      %v2181 = vunpack.c.h.b16 %v1441
      %v2182 = vunpack.c.l.b16 %v1442
      %v2183 = vunpack.c.h.b16 %v1442
      %v2184 = vunpack.c.l.b16 %v1443
      %v2185 = vunpack.c.h.b16 %v1443
      %v2186 = vunpack.c.l.b16 %v1444
      %v2187 = vunpack.c.h.b16 %v1444
      %v2188 = vunpack.c.l.b16 %v1445
      %v2189 = vunpack.c.h.b16 %v1445
      %v2190 = vunpack.c.l.b16 %v1446
      %v2191 = vunpack.c.h.b16 %v1446
      %v2192 = vunpack.c.l.b16 %v1447
      %v2193 = vunpack.c.h.b16 %v1447
      %v2194 = vunpack.c.l.b16 %v1448
      %v2195 = vunpack.c.h.b16 %v1448
      %v2196 = vunpack.c.l.b16 %v1449
      %v2197 = vunpack.c.h.b16 %v1449
      %v2198 = vunpack.c.l.b16 %v1450
      %v2199 = vunpack.c.h.b16 %v1450
      %v2200 = vunpack.c.l.b16 %v1451
      %v2201 = vunpack.c.h.b16 %v1451
      %v2202 = vunpack.c.l.b16 %v1452
      %v2203 = vunpack.c.h.b16 %v1452
      %v2204 = vunpack.c.l.b16 %v1453
      %v2205 = vunpack.c.h.b16 %v1453
      %v2206 = vunpack.c.l.b16 %v1454
      %v2207 = vunpack.c.h.b16 %v1454
      %v2208 = vunpack.c.l.b16 %v1455
      %v2209 = vunpack.c.h.b16 %v1455
      %v2210 = vunpack.c.l.b16 %v1456
      %v2211 = vunpack.c.h.b16 %v1456
      %v2212 = vunpack.c.l.b16 %v1457
      %v2213 = vunpack.c.h.b16 %v1457
      %v2214 = vunpack.c.l.b16 %v1458
      %v2215 = vunpack.c.h.b16 %v1458
      %v2216 = vunpack.c.l.b16 %v1459
      %v2217 = vunpack.c.h.b16 %v1459
      %v2218 = vunpack.c.l.b16 %v1460
      %v2219 = vunpack.c.h.b16 %v1460
      %v2220 = vunpack.c.l.b16 %v1461
      %v2221 = vunpack.c.h.b16 %v1461
      %v2222 = vunpack.c.l.b16 %v1462
      %v2223 = vunpack.c.h.b16 %v1462
      %v2224 = vunpack.c.l.b16 %v1463
      %v2225 = vunpack.c.h.b16 %v1463
      %v2226 = vunpack.c.l.b16 %v1464
      %v2227 = vunpack.c.h.b16 %v1464
      %v2228 = vunpack.c.l.b16 %v1465
      %v2229 = vunpack.c.h.b16 %v1465
      %v2230 = vunpack.c.l.b16 %v1466
      %v2231 = vunpack.c.h.b16 %v1466
      %v2232 = vunpack.c.l.b16 %v1467
      %v2233 = vunpack.c.h.b16 %v1467
      %v2234 = vunpack.c.l.b16 %v1468
      %v2235 = vunpack.c.h.b16 %v1468
      %v2236 = vunpack.c.l.b16 %v1469
      %v2237 = vunpack.c.h.b16 %v1469
      %v2238 = vunpack.c.l.b16 %v1470
      %v2239 = vunpack.c.h.b16 %v1470
      %v2240 = vunpack.c.l.b16 %v1471
      %v2241 = vunpack.c.h.b16 %v1471
      %v2242 = vunpack.c.l.b16 %v1472
      %v2243 = vunpack.c.h.b16 %v1472
      %v2244 = vunpack.c.l.b16 %v1473
      %v2245 = vunpack.c.h.b16 %v1473
      %v2246 = vunpack.c.l.b16 %v1474
      %v2247 = vunpack.c.h.b16 %v1474
      %v2248 = vunpack.c.l.b16 %v1475
      %v2249 = vunpack.c.h.b16 %v1475
      %v2250 = vunpack.c.l.b16 %v1476
      %v2251 = vunpack.c.h.b16 %v1476
      %v2252 = vunpack.c.l.b16 %v1477
      %v2253 = vunpack.c.h.b16 %v1477
      %v2254 = vunpack.c.l.b16 %v1478
      %v2255 = vunpack.c.h.b16 %v1478
      %v2256 = vunpack.c.l.b16 %v1479
      %v2257 = vunpack.c.h.b16 %v1479
      %v2258 = vunpack.c.l.b16 %v1480
      %v2259 = vunpack.c.h.b16 %v1480
      %v2260 = vunpack.c.l.b16 %v1481
      %v2261 = vunpack.c.h.b16 %v1481
      %v2262 = vunpack.c.l.b16 %v1482
      %v2263 = vunpack.c.h.b16 %v1482
      %v2264 = vunpack.c.l.b16 %v1483
      %v2265 = vunpack.c.h.b16 %v1483
      %v2266 = vunpack.c.l.b16 %v1484
      %v2267 = vunpack.c.h.b16 %v1484
      %v2268 = vunpack.c.l.b16 %v1485
      %v2269 = vunpack.c.h.b16 %v1485
      %v2270 = vunpack.c.l.b16 %v1486
      %v2271 = vunpack.c.h.b16 %v1486
      %v2272 = vunpack.c.l.b16 %v1487
      %v2273 = vunpack.c.h.b16 %v1487
      %v2274 = vunpack.c.l.b16 %v1488
      %v2275 = vunpack.c.h.b16 %v1488
      %v2276 = vunpack.c.l.b16 %v1489
      %v2277 = vunpack.c.h.b16 %v1489
      %v2278 = vunpack.c.l.b16 %v1490
      %v2279 = vunpack.c.h.b16 %v1490
      %v2280 = vunpack.c.l.b16 %v1491
      %v2281 = vunpack.c.h.b16 %v1491
      %v2282 = vpack.c.b16 %v1774, %v1770
      %v2283 = vpack.c.b16 %v1775, %v1771
      %v2284 = vpack.c.b16 %v1776, %v1772
      %v2285 = vpack.c.b16 %v1777, %v1773
      %v2286 = vpack.c.b16 %v1782, %v1778
      %v2287 = vpack.c.b16 %v1783, %v1779
      %v2288 = vpack.c.b16 %v1784, %v1780
      %v2289 = vpack.c.b16 %v1785, %v1781
      %v2290 = vpack.c.b16 %v1790, %v1786
      %v2291 = vpack.c.b16 %v1791, %v1787
      %v2292 = vpack.c.b16 %v1792, %v1788
      %v2293 = vpack.c.b16 %v1793, %v1789
      %v2294 = vpack.c.b16 %v1798, %v1794
      %v2295 = vpack.c.b16 %v1799, %v1795
      %v2296 = vpack.c.b16 %v1800, %v1796
      %v2297 = vpack.c.b16 %v1801, %v1797
      %v2298 = vpack.c.b16 %v1806, %v1802
      %v2299 = vpack.c.b16 %v1807, %v1803
      %v2300 = vpack.c.b16 %v1808, %v1804
      %v2301 = vpack.c.b16 %v1809, %v1805
      %v2302 = vpack.c.b16 %v1814, %v1810
      %v2303 = vpack.c.b16 %v1815, %v1811
      %v2304 = vpack.c.b16 %v1816, %v1812
      %v2305 = vpack.c.b16 %v1817, %v1813
      %v2306 = vpack.c.b16 %v1822, %v1818
      %v2307 = vpack.c.b16 %v1823, %v1819
      %v2308 = vpack.c.b16 %v1824, %v1820
      %v2309 = vpack.c.b16 %v1825, %v1821
      %v2310 = vpack.c.b16 %v1830, %v1826
      %v2311 = vpack.c.b16 %v1831, %v1827
      %v2312 = vpack.c.b16 %v1832, %v1828
      %v2313 = vpack.c.b16 %v1833, %v1829
      %v2314 = vpack.c.b16 %v1838, %v1834
      %v2315 = vpack.c.b16 %v1839, %v1835
      %v2316 = vpack.c.b16 %v1840, %v1836
      %v2317 = vpack.c.b16 %v1841, %v1837
      %v2318 = vpack.c.b16 %v1846, %v1842
      %v2319 = vpack.c.b16 %v1847, %v1843
      %v2320 = vpack.c.b16 %v1848, %v1844
      %v2321 = vpack.c.b16 %v1849, %v1845
      %v2322 = vpack.c.b16 %v1854, %v1850
      %v2323 = vpack.c.b16 %v1855, %v1851
      %v2324 = vpack.c.b16 %v1856, %v1852
      %v2325 = vpack.c.b16 %v1857, %v1853
      %v2326 = vpack.c.b16 %v1862, %v1858
      %v2327 = vpack.c.b16 %v1863, %v1859
      %v2328 = vpack.c.b16 %v1864, %v1860
      %v2329 = vpack.c.b16 %v1865, %v1861
      %v2330 = vpack.c.b16 %v1870, %v1866
      %v2331 = vpack.c.b16 %v1871, %v1867
      %v2332 = vpack.c.b16 %v1872, %v1868
      %v2333 = vpack.c.b16 %v1873, %v1869
      %v2334 = vpack.c.b16 %v1878, %v1874
      %v2335 = vpack.c.b16 %v1879, %v1875
      %v2336 = vpack.c.b16 %v1880, %v1876
      %v2337 = vpack.c.b16 %v1881, %v1877
      %v2338 = vpack.c.b16 %v1886, %v1882
      %v2339 = vpack.c.b16 %v1887, %v1883
      %v2340 = vpack.c.b16 %v1888, %v1884
      %v2341 = vpack.c.b16 %v1889, %v1885
      %v2342 = vpack.c.b16 %v1894, %v1890
      %v2343 = vpack.c.b16 %v1895, %v1891
      %v2344 = vpack.c.b16 %v1896, %v1892
      %v2345 = vpack.c.b16 %v1897, %v1893
      %v2346 = vpack.c.b16 %v1902, %v1898
      %v2347 = vpack.c.b16 %v1903, %v1899
      %v2348 = vpack.c.b16 %v1904, %v1900
      %v2349 = vpack.c.b16 %v1905, %v1901
      %v2350 = vpack.c.b16 %v1910, %v1906
      %v2351 = vpack.c.b16 %v1911, %v1907
      %v2352 = vpack.c.b16 %v1912, %v1908
      %v2353 = vpack.c.b16 %v1913, %v1909
      %v2354 = vpack.c.b16 %v1918, %v1914
      %v2355 = vpack.c.b16 %v1919, %v1915
      %v2356 = vpack.c.b16 %v1920, %v1916
      %v2357 = vpack.c.b16 %v1921, %v1917
      %v2358 = vpack.c.b16 %v1926, %v1922
      %v2359 = vpack.c.b16 %v1927, %v1923
      %v2360 = vpack.c.b16 %v1928, %v1924
      %v2361 = vpack.c.b16 %v1929, %v1925
      %v2362 = vpack.c.b16 %v1934, %v1930
      %v2363 = vpack.c.b16 %v1935, %v1931
      %v2364 = vpack.c.b16 %v1936, %v1932
      %v2365 = vpack.c.b16 %v1937, %v1933
      %v2366 = vpack.c.b16 %v1942, %v1938
      %v2367 = vpack.c.b16 %v1943, %v1939
      %v2368 = vpack.c.b16 %v1944, %v1940
      %v2369 = vpack.c.b16 %v1945, %v1941
      %v2370 = vpack.c.b16 %v1950, %v1946
      %v2371 = vpack.c.b16 %v1951, %v1947
      %v2372 = vpack.c.b16 %v1952, %v1948
      %v2373 = vpack.c.b16 %v1953, %v1949
      %v2374 = vpack.c.b16 %v1958, %v1954
      %v2375 = vpack.c.b16 %v1959, %v1955
      %v2376 = vpack.c.b16 %v1960, %v1956
      %v2377 = vpack.c.b16 %v1961, %v1957
      %v2378 = vpack.c.b16 %v1966, %v1962
      %v2379 = vpack.c.b16 %v1967, %v1963
      %v2380 = vpack.c.b16 %v1968, %v1964
      %v2381 = vpack.c.b16 %v1969, %v1965
      %v2382 = vpack.c.b16 %v1974, %v1970
      %v2383 = vpack.c.b16 %v1975, %v1971
      %v2384 = vpack.c.b16 %v1976, %v1972
      %v2385 = vpack.c.b16 %v1977, %v1973
      %v2386 = vpack.c.b16 %v1982, %v1978
      %v2387 = vpack.c.b16 %v1983, %v1979
      %v2388 = vpack.c.b16 %v1984, %v1980
      %v2389 = vpack.c.b16 %v1985, %v1981
      %v2390 = vpack.c.b16 %v1990, %v1986
      %v2391 = vpack.c.b16 %v1991, %v1987
      %v2392 = vpack.c.b16 %v1992, %v1988
      %v2393 = vpack.c.b16 %v1993, %v1989
      %v2394 = vpack.c.b16 %v1998, %v1994
      %v2395 = vpack.c.b16 %v1999, %v1995
      %v2396 = vpack.c.b16 %v2000, %v1996
      %v2397 = vpack.c.b16 %v2001, %v1997
      %v2398 = vpack.c.b16 %v2006, %v2002
      %v2399 = vpack.c.b16 %v2007, %v2003
      %v2400 = vpack.c.b16 %v2008, %v2004
      %v2401 = vpack.c.b16 %v2009, %v2005
      %v2402 = vpack.c.b16 %v2014, %v2010
      %v2403 = vpack.c.b16 %v2015, %v2011
      %v2404 = vpack.c.b16 %v2016, %v2012
      %v2405 = vpack.c.b16 %v2017, %v2013
      %v2406 = vpack.c.b16 %v2022, %v2018
      %v2407 = vpack.c.b16 %v2023, %v2019
      %v2408 = vpack.c.b16 %v2024, %v2020
      %v2409 = vpack.c.b16 %v2025, %v2021
      %v2410 = vpack.c.b16 %v2030, %v2026
      %v2411 = vpack.c.b16 %v2031, %v2027
      %v2412 = vpack.c.b16 %v2032, %v2028
      %v2413 = vpack.c.b16 %v2033, %v2029
      %v2414 = vpack.c.b16 %v2038, %v2034
      %v2415 = vpack.c.b16 %v2039, %v2035
      %v2416 = vpack.c.b16 %v2040, %v2036
      %v2417 = vpack.c.b16 %v2041, %v2037
      %v2418 = vpack.c.b16 %v2046, %v2042
      %v2419 = vpack.c.b16 %v2047, %v2043
      %v2420 = vpack.c.b16 %v2048, %v2044
      %v2421 = vpack.c.b16 %v2049, %v2045
      %v2422 = vpack.c.b16 %v2054, %v2050
      %v2423 = vpack.c.b16 %v2055, %v2051
      %v2424 = vpack.c.b16 %v2056, %v2052
      %v2425 = vpack.c.b16 %v2057, %v2053
      %v2426 = vpack.c.b16 %v2062, %v2058
      %v2427 = vpack.c.b16 %v2063, %v2059
      %v2428 = vpack.c.b16 %v2064, %v2060
      %v2429 = vpack.c.b16 %v2065, %v2061
      %v2430 = vpack.c.b16 %v2070, %v2066
      %v2431 = vpack.c.b16 %v2071, %v2067
      %v2432 = vpack.c.b16 %v2072, %v2068
      %v2433 = vpack.c.b16 %v2073, %v2069
      %v2434 = vpack.c.b16 %v2078, %v2074
      %v2435 = vpack.c.b16 %v2079, %v2075
      %v2436 = vpack.c.b16 %v2080, %v2076
      %v2437 = vpack.c.b16 %v2081, %v2077
      %v2438 = vpack.c.b16 %v2086, %v2082
      %v2439 = vpack.c.b16 %v2087, %v2083
      %v2440 = vpack.c.b16 %v2088, %v2084
      %v2441 = vpack.c.b16 %v2089, %v2085
      %v2442 = vpack.c.b16 %v2094, %v2090
      %v2443 = vpack.c.b16 %v2095, %v2091
      %v2444 = vpack.c.b16 %v2096, %v2092
      %v2445 = vpack.c.b16 %v2097, %v2093
      %v2446 = vpack.c.b16 %v2102, %v2098
      %v2447 = vpack.c.b16 %v2103, %v2099
      %v2448 = vpack.c.b16 %v2104, %v2100
      %v2449 = vpack.c.b16 %v2105, %v2101
      %v2450 = vpack.c.b16 %v2110, %v2106
      %v2451 = vpack.c.b16 %v2111, %v2107
      %v2452 = vpack.c.b16 %v2112, %v2108
      %v2453 = vpack.c.b16 %v2113, %v2109
      %v2454 = vpack.c.b16 %v2118, %v2114
      %v2455 = vpack.c.b16 %v2119, %v2115
      %v2456 = vpack.c.b16 %v2120, %v2116
      %v2457 = vpack.c.b16 %v2121, %v2117
      %v2458 = vpack.c.b16 %v2126, %v2122
      %v2459 = vpack.c.b16 %v2127, %v2123
      %v2460 = vpack.c.b16 %v2128, %v2124
      %v2461 = vpack.c.b16 %v2129, %v2125
      %v2462 = vpack.c.b16 %v2134, %v2130
      %v2463 = vpack.c.b16 %v2135, %v2131
      %v2464 = vpack.c.b16 %v2136, %v2132
      %v2465 = vpack.c.b16 %v2137, %v2133
      %v2466 = vpack.c.b16 %v2142, %v2138
      %v2467 = vpack.c.b16 %v2143, %v2139
      %v2468 = vpack.c.b16 %v2144, %v2140
      %v2469 = vpack.c.b16 %v2145, %v2141
      %v2470 = vpack.c.b16 %v2150, %v2146
      %v2471 = vpack.c.b16 %v2151, %v2147
      %v2472 = vpack.c.b16 %v2152, %v2148
      %v2473 = vpack.c.b16 %v2153, %v2149
      %v2474 = vpack.c.b16 %v2158, %v2154
      %v2475 = vpack.c.b16 %v2159, %v2155
      %v2476 = vpack.c.b16 %v2160, %v2156
      %v2477 = vpack.c.b16 %v2161, %v2157
      %v2478 = vpack.c.b16 %v2166, %v2162
      %v2479 = vpack.c.b16 %v2167, %v2163
      %v2480 = vpack.c.b16 %v2168, %v2164
      %v2481 = vpack.c.b16 %v2169, %v2165
      %v2482 = vpack.c.b16 %v2174, %v2170
      %v2483 = vpack.c.b16 %v2175, %v2171
      %v2484 = vpack.c.b16 %v2176, %v2172
      %v2485 = vpack.c.b16 %v2177, %v2173
      %v2486 = vpack.c.b16 %v2182, %v2178
      %v2487 = vpack.c.b16 %v2183, %v2179
      %v2488 = vpack.c.b16 %v2184, %v2180
      %v2489 = vpack.c.b16 %v2185, %v2181
      %v2490 = vpack.c.b16 %v2190, %v2186
      %v2491 = vpack.c.b16 %v2191, %v2187
      %v2492 = vpack.c.b16 %v2192, %v2188
      %v2493 = vpack.c.b16 %v2193, %v2189
      %v2494 = vpack.c.b16 %v2198, %v2194
      %v2495 = vpack.c.b16 %v2199, %v2195
      %v2496 = vpack.c.b16 %v2200, %v2196
      %v2497 = vpack.c.b16 %v2201, %v2197
      %v2498 = vpack.c.b16 %v2206, %v2202
      %v2499 = vpack.c.b16 %v2207, %v2203
      %v2500 = vpack.c.b16 %v2208, %v2204
      %v2501 = vpack.c.b16 %v2209, %v2205
      %v2502 = vpack.c.b16 %v2214, %v2210
      %v2503 = vpack.c.b16 %v2215, %v2211
      %v2504 = vpack.c.b16 %v2216, %v2212
      %v2505 = vpack.c.b16 %v2217, %v2213
      %v2506 = vpack.c.b16 %v2222, %v2218
      %v2507 = vpack.c.b16 %v2223, %v2219
      %v2508 = vpack.c.b16 %v2224, %v2220
      %v2509 = vpack.c.b16 %v2225, %v2221
      %v2510 = vpack.c.b16 %v2230, %v2226
      %v2511 = vpack.c.b16 %v2231, %v2227
      %v2512 = vpack.c.b16 %v2232, %v2228
      %v2513 = vpack.c.b16 %v2233, %v2229
      %v2514 = vpack.c.b16 %v2238, %v2234
      %v2515 = vpack.c.b16 %v2239, %v2235
      %v2516 = vpack.c.b16 %v2240, %v2236
      %v2517 = vpack.c.b16 %v2241, %v2237
      %v2518 = vpack.c.b16 %v2246, %v2242
      %v2519 = vpack.c.b16 %v2247, %v2243
      %v2520 = vpack.c.b16 %v2248, %v2244
      %v2521 = vpack.c.b16 %v2249, %v2245
      %v2522 = vpack.c.b16 %v2254, %v2250
      %v2523 = vpack.c.b16 %v2255, %v2251
      %v2524 = vpack.c.b16 %v2256, %v2252
      %v2525 = vpack.c.b16 %v2257, %v2253
      %v2526 = vpack.c.b16 %v2262, %v2258
      %v2527 = vpack.c.b16 %v2263, %v2259
      %v2528 = vpack.c.b16 %v2264, %v2260
      %v2529 = vpack.c.b16 %v2265, %v2261
      %v2530 = vpack.c.b16 %v2270, %v2266
      %v2531 = vpack.c.b16 %v2271, %v2267
      %v2532 = vpack.c.b16 %v2272, %v2268
      %v2533 = vpack.c.b16 %v2273, %v2269
      %v2534 = vpack.c.b16 %v2278, %v2274
      %v2535 = vpack.c.b16 %v2279, %v2275
      %v2536 = vpack.c.b16 %v2280, %v2276
      %v2537 = vpack.c.b16 %v2281, %v2277
      %2794 = vmatprep.subr.bf16.mxu0 %v2283
      %2795 = vmatpush1.bf16.msra.mxu0 %v2282
      %2796 = vmatprep.subr.bf16.mxu0 %v2287
      %2797 = vmatpush1.bf16.msra.mxu0 %v2286
      %2798 = vmatprep.subr.bf16.mxu0 %v2291
      %2799 = vmatpush1.bf16.msra.mxu0 %v2290
      %2800 = vmatprep.subr.bf16.mxu0 %v2295
      %2801 = vmatpush1.bf16.msra.mxu0 %v2294
      %2802 = vmatprep.subr.bf16.mxu0 %v2299
      %2803 = vmatpush1.bf16.msra.mxu0 %v2298
      %2804 = vmatprep.subr.bf16.mxu0 %v2303
      %2805 = vmatpush1.bf16.msra.mxu0 %v2302
      %2806 = vmatprep.subr.bf16.mxu0 %v2307
      %2807 = vmatpush1.bf16.msra.mxu0 %v2306
      %2808 = vmatprep.subr.bf16.mxu0 %v2311
      %2809 = vmatpush1.bf16.msra.mxu0 %v2310
      %2810 = vmatprep.subr.bf16.mxu0 %v2315
      %2811 = vmatpush1.bf16.msra.mxu0 %v2314
      %2812 = vmatprep.subr.bf16.mxu0 %v2319
      %2813 = vmatpush1.bf16.msra.mxu0 %v2318
      %2814 = vmatprep.subr.bf16.mxu0 %v2323
      %2815 = vmatpush1.bf16.msra.mxu0 %v2322
      %2816 = vmatprep.subr.bf16.mxu0 %v2327
      %2817 = vmatpush1.bf16.msra.mxu0 %v2326
      %2818 = vmatprep.subr.bf16.mxu0 %v2331
      %2819 = vmatpush1.bf16.msra.mxu0 %v2330
      %2820 = vmatprep.subr.bf16.mxu0 %v2335
      %2821 = vmatpush1.bf16.msra.mxu0 %v2334
      %2822 = vmatprep.subr.bf16.mxu0 %v2339
      %2823 = vmatpush1.bf16.msra.mxu0 %v2338
      %2824 = vmatprep.subr.bf16.mxu0 %v2343
      %2825 = vmatpush1.bf16.msra.mxu0 %v2342
      %2826 = vmatprep.mubr.bf16.mxu0 %v1229
      %2827 = vmatmul.mubr.bf16.gmra.mrb[0].mxu0 %v1228
      %v2828 = vpop.f32.mrb[0].mxu0
      %v2829 = vadd.f32 %v1497, %v2828
      %v2830 = vpop.f32.mrb[0].mxu0
      %v2831 = vadd.f32 %v1501, %v2830
      %v2832 = vpop.f32.mrb[0].mxu0
      %v2833 = vpop.f32.mrb[0].mxu0
      %2834 = vdwg.mxu0
      %2835 = vmatprep.subr.bf16.mxu0 %v2347
      %2836 = vmatpush1.bf16.msra.mxu0 %v2346
      %2837 = vmatprep.subr.bf16.mxu0 %v2351
      %2838 = vmatpush1.bf16.msra.mxu0 %v2350
      %2839 = vmatprep.subr.bf16.mxu0 %v2355
      %2840 = vmatpush1.bf16.msra.mxu0 %v2354
      %2841 = vmatprep.subr.bf16.mxu0 %v2359
      %2842 = vmatpush1.bf16.msra.mxu0 %v2358
      %2843 = vmatprep.subr.bf16.mxu0 %v2363
      %2844 = vmatpush1.bf16.msra.mxu0 %v2362
      %2845 = vmatprep.subr.bf16.mxu0 %v2367
      %2846 = vmatpush1.bf16.msra.mxu0 %v2366
      %2847 = vmatprep.subr.bf16.mxu0 %v2371
      %2848 = vmatpush1.bf16.msra.mxu0 %v2370
      %2849 = vmatprep.subr.bf16.mxu0 %v2375
      %2850 = vmatpush1.bf16.msra.mxu0 %v2374
      %2851 = vmatprep.subr.bf16.mxu0 %v2379
      %2852 = vmatpush1.bf16.msra.mxu0 %v2378
      %2853 = vmatprep.subr.bf16.mxu0 %v2383
      %2854 = vmatpush1.bf16.msra.mxu0 %v2382
      %2855 = vmatprep.subr.bf16.mxu0 %v2387
      %2856 = vmatpush1.bf16.msra.mxu0 %v2386
      %2857 = vmatprep.subr.bf16.mxu0 %v2391
      %2858 = vmatpush1.bf16.msra.mxu0 %v2390
      %2859 = vmatprep.subr.bf16.mxu0 %v2395
      %2860 = vmatpush1.bf16.msra.mxu0 %v2394
      %2861 = vmatprep.subr.bf16.mxu0 %v2399
      %2862 = vmatpush1.bf16.msra.mxu0 %v2398
      %2863 = vmatprep.subr.bf16.mxu0 %v2403
      %2864 = vmatpush1.bf16.msra.mxu0 %v2402
      %2865 = vmatprep.subr.bf16.mxu0 %v2407
      %2866 = vmatpush1.bf16.msra.mxu0 %v2406
      %2867 = vmatprep.mubr.bf16.mxu0 %v1231
      %2868 = vmatmul.mubr.bf16.gmra.mrb[0].mxu0 %v1230
      %v2869 = vpop.f32.mrb[0].mxu0
      %v2870 = vadd.f32 %v2829, %v2869
      %v2871 = vpop.f32.mrb[0].mxu0
      %v2872 = vadd.f32 %v2831, %v2871
      %v2873 = vpop.f32.mrb[0].mxu0
      %v2874 = vpop.f32.mrb[0].mxu0
      %2875 = vdwg.mxu0
      %2876 = vmatprep.subr.bf16.mxu0 %v2411
      %2877 = vmatpush1.bf16.msra.mxu0 %v2410
      %2878 = vmatprep.subr.bf16.mxu0 %v2415
      %2879 = vmatpush1.bf16.msra.mxu0 %v2414
      %2880 = vmatprep.subr.bf16.mxu0 %v2419
      %2881 = vmatpush1.bf16.msra.mxu0 %v2418
      %2882 = vmatprep.subr.bf16.mxu0 %v2423
      %2883 = vmatpush1.bf16.msra.mxu0 %v2422
      %2884 = vmatprep.subr.bf16.mxu0 %v2427
      %2885 = vmatpush1.bf16.msra.mxu0 %v2426
      %2886 = vmatprep.subr.bf16.mxu0 %v2431
      %2887 = vmatpush1.bf16.msra.mxu0 %v2430
      %2888 = vmatprep.subr.bf16.mxu0 %v2435
      %2889 = vmatpush1.bf16.msra.mxu0 %v2434
      %2890 = vmatprep.subr.bf16.mxu0 %v2439
      %2891 = vmatpush1.bf16.msra.mxu0 %v2438
      %2892 = vmatprep.subr.bf16.mxu0 %v2443
      %2893 = vmatpush1.bf16.msra.mxu0 %v2442
      %2894 = vmatprep.subr.bf16.mxu0 %v2447
      %2895 = vmatpush1.bf16.msra.mxu0 %v2446
      %2896 = vmatprep.subr.bf16.mxu0 %v2451
      %2897 = vmatpush1.bf16.msra.mxu0 %v2450
      %2898 = vmatprep.subr.bf16.mxu0 %v2455
      %2899 = vmatpush1.bf16.msra.mxu0 %v2454
      %2900 = vmatprep.subr.bf16.mxu0 %v2459
      %2901 = vmatpush1.bf16.msra.mxu0 %v2458
      %2902 = vmatprep.subr.bf16.mxu0 %v2463
      %2903 = vmatpush1.bf16.msra.mxu0 %v2462
      %2904 = vmatprep.subr.bf16.mxu0 %v2467
      %2905 = vmatpush1.bf16.msra.mxu0 %v2466
      %2906 = vmatprep.subr.bf16.mxu0 %v2471
      %2907 = vmatpush1.bf16.msra.mxu0 %v2470
      %2908 = vmatprep.mubr.bf16.mxu0 %v1233
      %2909 = vmatmul.mubr.bf16.gmra.mrb[0].mxu0 %v1232
      %v2910 = vpop.f32.mrb[0].mxu0
      %v2911 = vadd.f32 %v2870, %v2910
      %v2912 = vpop.f32.mrb[0].mxu0
      %v2913 = vadd.f32 %v2872, %v2912
      %v2914 = vpop.f32.mrb[0].mxu0
      %v2915 = vpop.f32.mrb[0].mxu0
      %2916 = vdwg.mxu0
      %2917 = vmatprep.subr.bf16.mxu0 %v2475
      %2918 = vmatpush1.bf16.msra.mxu0 %v2474
      %2919 = vmatprep.subr.bf16.mxu0 %v2479
      %2920 = vmatpush1.bf16.msra.mxu0 %v2478
      %2921 = vmatprep.subr.bf16.mxu0 %v2483
      %2922 = vmatpush1.bf16.msra.mxu0 %v2482
      %2923 = vmatprep.subr.bf16.mxu0 %v2487
      %2924 = vmatpush1.bf16.msra.mxu0 %v2486
      %2925 = vmatprep.subr.bf16.mxu0 %v2491
      %2926 = vmatpush1.bf16.msra.mxu0 %v2490
      %2927 = vmatprep.subr.bf16.mxu0 %v2495
      %2928 = vmatpush1.bf16.msra.mxu0 %v2494
      %2929 = vmatprep.subr.bf16.mxu0 %v2499
      %2930 = vmatpush1.bf16.msra.mxu0 %v2498
      %2931 = vmatprep.subr.bf16.mxu0 %v2503
      %2932 = vmatpush1.bf16.msra.mxu0 %v2502
      %2933 = vmatprep.subr.bf16.mxu0 %v2507
      %2934 = vmatpush1.bf16.msra.mxu0 %v2506
      %2935 = vmatprep.subr.bf16.mxu0 %v2511
      %2936 = vmatpush1.bf16.msra.mxu0 %v2510
      %2937 = vmatprep.subr.bf16.mxu0 %v2515
      %2938 = vmatpush1.bf16.msra.mxu0 %v2514
      %2939 = vmatprep.subr.bf16.mxu0 %v2519
      %2940 = vmatpush1.bf16.msra.mxu0 %v2518
      %2941 = vmatprep.subr.bf16.mxu0 %v2523
      %2942 = vmatpush1.bf16.msra.mxu0 %v2522
      %2943 = vmatprep.subr.bf16.mxu0 %v2527
      %2944 = vmatpush1.bf16.msra.mxu0 %v2526
      %2945 = vmatprep.subr.bf16.mxu0 %v2531
      %2946 = vmatpush1.bf16.msra.mxu0 %v2530
      %2947 = vmatprep.subr.bf16.mxu0 %v2535
      %2948 = vmatpush1.bf16.msra.mxu0 %v2534
      %2949 = vmatprep.mubr.bf16.mxu0 %v1235
      %2950 = vmatmul.mubr.bf16.gmra.mrb[0].mxu0 %v1234
      %v2951 = vpop.f32.mrb[0].mxu0
      %v2952 = vadd.f32 %v2911, %v2951
      %v2953 = vpop.f32.mrb[0].mxu0
      %v2954 = vadd.f32 %v2913, %v2953
      %v2955 = vpop.f32.mrb[0].mxu0
      %v2956 = vpop.f32.mrb[0].mxu0
      %2957 = vdwg.mxu0
      %2958 = vmatprep.subr.bf16.mxu0 %v2285
      %2959 = vmatpush1.bf16.msra.mxu0 %v2284
      %2960 = vmatprep.subr.bf16.mxu0 %v2289
      %2961 = vmatpush1.bf16.msra.mxu0 %v2288
      %2962 = vmatprep.subr.bf16.mxu0 %v2293
      %2963 = vmatpush1.bf16.msra.mxu0 %v2292
      %2964 = vmatprep.subr.bf16.mxu0 %v2297
      %2965 = vmatpush1.bf16.msra.mxu0 %v2296
      %2966 = vmatprep.subr.bf16.mxu0 %v2301
      %2967 = vmatpush1.bf16.msra.mxu0 %v2300
      %2968 = vmatprep.subr.bf16.mxu0 %v2305
      %2969 = vmatpush1.bf16.msra.mxu0 %v2304
      %2970 = vmatprep.subr.bf16.mxu0 %v2309
      %2971 = vmatpush1.bf16.msra.mxu0 %v2308
      %2972 = vmatprep.subr.bf16.mxu0 %v2313
      %2973 = vmatpush1.bf16.msra.mxu0 %v2312
      %2974 = vmatprep.subr.bf16.mxu0 %v2317
      %2975 = vmatpush1.bf16.msra.mxu0 %v2316
      %2976 = vmatprep.subr.bf16.mxu0 %v2321
      %2977 = vmatpush1.bf16.msra.mxu0 %v2320
      %2978 = vmatprep.subr.bf16.mxu0 %v2325
      %2979 = vmatpush1.bf16.msra.mxu0 %v2324
      %2980 = vmatprep.subr.bf16.mxu0 %v2329
      %2981 = vmatpush1.bf16.msra.mxu0 %v2328
      %2982 = vmatprep.subr.bf16.mxu0 %v2333
      %2983 = vmatpush1.bf16.msra.mxu0 %v2332
      %2984 = vmatprep.subr.bf16.mxu0 %v2337
      %2985 = vmatpush1.bf16.msra.mxu0 %v2336
      %2986 = vmatprep.subr.bf16.mxu0 %v2341
      %2987 = vmatpush1.bf16.msra.mxu0 %v2340
      %2988 = vmatprep.subr.bf16.mxu0 %v2345
      %2989 = vmatpush1.bf16.msra.mxu0 %v2344
      %2990 = vmatprep.mubr.bf16.mxu0 %v1229
      %2991 = vmatmul.mubr.bf16.gmra.mrb[0].mxu0 %v1228
      %v2992 = vpop.f32.mrb[0].mxu0
      %v2993 = vadd.f32 %v1505, %v2992
      %v2994 = vpop.f32.mrb[0].mxu0
      %v2995 = vadd.f32 %v1509, %v2994
      %v2996 = vpop.f32.mrb[0].mxu0
      %v2997 = vpop.f32.mrb[0].mxu0
      %2998 = vdwg.mxu0
      %2999 = vmatprep.subr.bf16.mxu0 %v2349
      %3000 = vmatpush1.bf16.msra.mxu0 %v2348
      %3001 = vmatprep.subr.bf16.mxu0 %v2353
      %3002 = vmatpush1.bf16.msra.mxu0 %v2352
      %3003 = vmatprep.subr.bf16.mxu0 %v2357
      %3004 = vmatpush1.bf16.msra.mxu0 %v2356
      %3005 = vmatprep.subr.bf16.mxu0 %v2361
      %3006 = vmatpush1.bf16.msra.mxu0 %v2360
      %3007 = vmatprep.subr.bf16.mxu0 %v2365
      %3008 = vmatpush1.bf16.msra.mxu0 %v2364
      %3009 = vmatprep.subr.bf16.mxu0 %v2369
      %3010 = vmatpush1.bf16.msra.mxu0 %v2368
      %3011 = vmatprep.subr.bf16.mxu0 %v2373
      %3012 = vmatpush1.bf16.msra.mxu0 %v2372
      %3013 = vmatprep.subr.bf16.mxu0 %v2377
      %3014 = vmatpush1.bf16.msra.mxu0 %v2376
      %3015 = vmatprep.subr.bf16.mxu0 %v2381
      %3016 = vmatpush1.bf16.msra.mxu0 %v2380
      %3017 = vmatprep.subr.bf16.mxu0 %v2385
      %3018 = vmatpush1.bf16.msra.mxu0 %v2384
      %3019 = vmatprep.subr.bf16.mxu0 %v2389
      %3020 = vmatpush1.bf16.msra.mxu0 %v2388
      %3021 = vmatprep.subr.bf16.mxu0 %v2393
      %3022 = vmatpush1.bf16.msra.mxu0 %v2392
      %3023 = vmatprep.subr.bf16.mxu0 %v2397
      %3024 = vmatpush1.bf16.msra.mxu0 %v2396
      %3025 = vmatprep.subr.bf16.mxu0 %v2401
      %3026 = vmatpush1.bf16.msra.mxu0 %v2400
      %3027 = vmatprep.subr.bf16.mxu0 %v2405
      %3028 = vmatpush1.bf16.msra.mxu0 %v2404
      %3029 = vmatprep.subr.bf16.mxu0 %v2409
      %3030 = vmatpush1.bf16.msra.mxu0 %v2408
      %3031 = vmatprep.mubr.bf16.mxu0 %v1231
      %3032 = vmatmul.mubr.bf16.gmra.mrb[0].mxu0 %v1230
      %v3033 = vpop.f32.mrb[0].mxu0
      %v3034 = vadd.f32 %v2993, %v3033
      %v3035 = vpop.f32.mrb[0].mxu0
      %v3036 = vadd.f32 %v2995, %v3035
      %v3037 = vpop.f32.mrb[0].mxu0
      %v3038 = vpop.f32.mrb[0].mxu0
      %3039 = vdwg.mxu0
      %3040 = vmatprep.subr.bf16.mxu0 %v2413
      %3041 = vmatpush1.bf16.msra.mxu0 %v2412
      %3042 = vmatprep.subr.bf16.mxu0 %v2417
      %3043 = vmatpush1.bf16.msra.mxu0 %v2416
      %3044 = vmatprep.subr.bf16.mxu0 %v2421
      %3045 = vmatpush1.bf16.msra.mxu0 %v2420
      %3046 = vmatprep.subr.bf16.mxu0 %v2425
      %3047 = vmatpush1.bf16.msra.mxu0 %v2424
      %3048 = vmatprep.subr.bf16.mxu0 %v2429
      %3049 = vmatpush1.bf16.msra.mxu0 %v2428
      %3050 = vmatprep.subr.bf16.mxu0 %v2433
      %3051 = vmatpush1.bf16.msra.mxu0 %v2432
      %3052 = vmatprep.subr.bf16.mxu0 %v2437
      %3053 = vmatpush1.bf16.msra.mxu0 %v2436
      %3054 = vmatprep.subr.bf16.mxu0 %v2441
      %3055 = vmatpush1.bf16.msra.mxu0 %v2440
      %3056 = vmatprep.subr.bf16.mxu0 %v2445
      %3057 = vmatpush1.bf16.msra.mxu0 %v2444
      %3058 = vmatprep.subr.bf16.mxu0 %v2449
      %3059 = vmatpush1.bf16.msra.mxu0 %v2448
      %3060 = vmatprep.subr.bf16.mxu0 %v2453
      %3061 = vmatpush1.bf16.msra.mxu0 %v2452
      %3062 = vmatprep.subr.bf16.mxu0 %v2457
      %3063 = vmatpush1.bf16.msra.mxu0 %v2456
      %3064 = vmatprep.subr.bf16.mxu0 %v2461
      %3065 = vmatpush1.bf16.msra.mxu0 %v2460
      %3066 = vmatprep.subr.bf16.mxu0 %v2465
      %3067 = vmatpush1.bf16.msra.mxu0 %v2464
      %3068 = vmatprep.subr.bf16.mxu0 %v2469
      %3069 = vmatpush1.bf16.msra.mxu0 %v2468
      %3070 = vmatprep.subr.bf16.mxu0 %v2473
      %3071 = vmatpush1.bf16.msra.mxu0 %v2472
      %3072 = vmatprep.mubr.bf16.mxu0 %v1233
      %3073 = vmatmul.mubr.bf16.gmra.mrb[0].mxu0 %v1232
      %v3074 = vpop.f32.mrb[0].mxu0
      %v3075 = vadd.f32 %v3034, %v3074
      %v3076 = vpop.f32.mrb[0].mxu0
      %v3077 = vadd.f32 %v3036, %v3076
      %v3078 = vpop.f32.mrb[0].mxu0
      %v3079 = vpop.f32.mrb[0].mxu0
      %3080 = vdwg.mxu0
      %3081 = vmatprep.subr.bf16.mxu0 %v2477
      %3082 = vmatpush1.bf16.msra.mxu0 %v2476
      %3083 = vmatprep.subr.bf16.mxu0 %v2481
      %3084 = vmatpush1.bf16.msra.mxu0 %v2480
      %3085 = vmatprep.subr.bf16.mxu0 %v2485
      %3086 = vmatpush1.bf16.msra.mxu0 %v2484
      %3087 = vmatprep.subr.bf16.mxu0 %v2489
      %3088 = vmatpush1.bf16.msra.mxu0 %v2488
      %3089 = vmatprep.subr.bf16.mxu0 %v2493
      %3090 = vmatpush1.bf16.msra.mxu0 %v2492
      %3091 = vmatprep.subr.bf16.mxu0 %v2497
      %3092 = vmatpush1.bf16.msra.mxu0 %v2496
      %3093 = vmatprep.subr.bf16.mxu0 %v2501
      %3094 = vmatpush1.bf16.msra.mxu0 %v2500
      %3095 = vmatprep.subr.bf16.mxu0 %v2505
      %3096 = vmatpush1.bf16.msra.mxu0 %v2504
      %3097 = vmatprep.subr.bf16.mxu0 %v2509
      %3098 = vmatpush1.bf16.msra.mxu0 %v2508
      %3099 = vmatprep.subr.bf16.mxu0 %v2513
      %3100 = vmatpush1.bf16.msra.mxu0 %v2512
      %3101 = vmatprep.subr.bf16.mxu0 %v2517
      %3102 = vmatpush1.bf16.msra.mxu0 %v2516
      %3103 = vmatprep.subr.bf16.mxu0 %v2521
      %3104 = vmatpush1.bf16.msra.mxu0 %v2520
      %3105 = vmatprep.subr.bf16.mxu0 %v2525
      %3106 = vmatpush1.bf16.msra.mxu0 %v2524
      %3107 = vmatprep.subr.bf16.mxu0 %v2529
      %3108 = vmatpush1.bf16.msra.mxu0 %v2528
      %3109 = vmatprep.subr.bf16.mxu0 %v2533
      %3110 = vmatpush1.bf16.msra.mxu0 %v2532
      %3111 = vmatprep.subr.bf16.mxu0 %v2537
      %3112 = vmatpush1.bf16.msra.mxu0 %v2536
      %3113 = vmatprep.mubr.bf16.mxu0 %v1235
      %3114 = vmatmul.mubr.bf16.gmra.mrb[0].mxu0 %v1234
      %v3115 = vpop.f32.mrb[0].mxu0
      %v3116 = vadd.f32 %v3075, %v3115
      %v3117 = vpop.f32.mrb[0].mxu0
      %v3118 = vadd.f32 %v3077, %v3117
      %v3119 = vpop.f32.mrb[0].mxu0
      %v3120 = vpop.f32.mrb[0].mxu0
      %3121 = vdwg.mxu0
      %v3122 = vmax.f32 %v2952, 0.0
      %v3123 = vmax.f32 %v2954, 0.0
      %v3124 = vmax.f32 %v3116, 0.0
      %v3125 = vmax.f32 %v3118, 0.0
      %v3126 = vpack.c.bf16 %v3122, %v3122
      %v3127 = vpack.c.bf16 %v3123, %v3123
      %v3128 = vpack.c.bf16 %v3124, %v3124
      %v3129 = vpack.c.bf16 %v3125, %v3125
      %v3130 = vld [vmem:[#allocation8] sm:$0xff]
      %v3131 = vld [vmem:[#allocation8 + $0x8] sm:$0xff]
      %v3132 = vld [vmem:[#allocation8 + $0x10] sm:$0xff]
      %v3133 = vld [vmem:[#allocation8 + $0x18] sm:$0xff]
      %v3134 = vld [vmem:[#allocation8 + $0x20] sm:$0xff]
      %v3135 = vld [vmem:[#allocation8 + $0x28] sm:$0xff]
      %v3136 = vld [vmem:[#allocation8 + $0x30] sm:$0xff]
      %v3137 = vld [vmem:[#allocation8 + $0x38] sm:$0xff]
      %v3138 = vld [vmem:[#allocation8 + $0x40] sm:$0xff]
      %v3139 = vld [vmem:[#allocation8 + $0x48] sm:$0xff]
      %v3140 = vld [vmem:[#allocation8 + $0x50] sm:$0xff]
      %v3141 = vld [vmem:[#allocation8 + $0x58] sm:$0xff]
      %v3142 = vld [vmem:[#allocation8 + $0x60] sm:$0xff]
      %v3143 = vld [vmem:[#allocation8 + $0x68] sm:$0xff]
      %v3144 = vld [vmem:[#allocation8 + $0x70] sm:$0xff]
      %v3145 = vld [vmem:[#allocation8 + $0x78] sm:$0xff]
      %v3146 = vld [vmem:[#allocation8 + $0x80] sm:$0xff]
      %v3147 = vld [vmem:[#allocation8 + $0x88] sm:$0xff]
      %v3148 = vld [vmem:[#allocation8 + $0x90] sm:$0xff]
      %v3149 = vld [vmem:[#allocation8 + $0x98] sm:$0xff]
      %v3150 = vld [vmem:[#allocation8 + $0xa0] sm:$0xff]
      %v3151 = vld [vmem:[#allocation8 + $0xa8] sm:$0xff]
      %v3152 = vld [vmem:[#allocation8 + $0xb0] sm:$0xff]
      %v3153 = vld [vmem:[#allocation8 + $0xb8] sm:$0xff]
      %v3154 = vld [vmem:[#allocation8 + $0xc0] sm:$0xff]
      %v3155 = vld [vmem:[#allocation8 + $0xc8] sm:$0xff]
      %v3156 = vld [vmem:[#allocation8 + $0xd0] sm:$0xff]
      %v3157 = vld [vmem:[#allocation8 + $0xd8] sm:$0xff]
      %v3158 = vld [vmem:[#allocation8 + $0xe0] sm:$0xff]
      %v3159 = vld [vmem:[#allocation8 + $0xe8] sm:$0xff]
      %v3160 = vld [vmem:[#allocation8 + $0xf0] sm:$0xff]
      %v3161 = vld [vmem:[#allocation8 + $0xf8] sm:$0xff]
      %v3162 = vld [vmem:[#allocation8 + $0x100] sm:$0xff]
      %v3163 = vld [vmem:[#allocation8 + $0x108] sm:$0xff]
      %v3164 = vld [vmem:[#allocation8 + $0x110] sm:$0xff]
      %v3165 = vld [vmem:[#allocation8 + $0x118] sm:$0xff]
      %v3166 = vld [vmem:[#allocation8 + $0x120] sm:$0xff]
      %v3167 = vld [vmem:[#allocation8 + $0x128] sm:$0xff]
      %v3168 = vld [vmem:[#allocation8 + $0x130] sm:$0xff]
      %v3169 = vld [vmem:[#allocation8 + $0x138] sm:$0xff]
      %v3170 = vld [vmem:[#allocation8 + $0x140] sm:$0xff]
      %v3171 = vld [vmem:[#allocation8 + $0x148] sm:$0xff]
      %v3172 = vld [vmem:[#allocation8 + $0x150] sm:$0xff]
      %v3173 = vld [vmem:[#allocation8 + $0x158] sm:$0xff]
      %v3174 = vld [vmem:[#allocation8 + $0x160] sm:$0xff]
      %v3175 = vld [vmem:[#allocation8 + $0x168] sm:$0xff]
      %v3176 = vld [vmem:[#allocation8 + $0x170] sm:$0xff]
      %v3177 = vld [vmem:[#allocation8 + $0x178] sm:$0xff]
      %v3178 = vld [vmem:[#allocation8 + $0x180] sm:$0xff]
      %v3179 = vld [vmem:[#allocation8 + $0x188] sm:$0xff]
      %v3180 = vld [vmem:[#allocation8 + $0x190] sm:$0xff]
      %v3181 = vld [vmem:[#allocation8 + $0x198] sm:$0xff]
      %v3182 = vld [vmem:[#allocation8 + $0x1a0] sm:$0xff]
      %v3183 = vld [vmem:[#allocation8 + $0x1a8] sm:$0xff]
      %v3184 = vld [vmem:[#allocation8 + $0x1b0] sm:$0xff]
      %v3185 = vld [vmem:[#allocation8 + $0x1b8] sm:$0xff]
      %v3186 = vld [vmem:[#allocation8 + $0x1c0] sm:$0xff]
      %v3187 = vld [vmem:[#allocation8 + $0x1c8] sm:$0xff]
      %v3188 = vld [vmem:[#allocation8 + $0x1d0] sm:$0xff]
      %v3189 = vld [vmem:[#allocation8 + $0x1d8] sm:$0xff]
      %v3190 = vld [vmem:[#allocation8 + $0x1e0] sm:$0xff]
      %v3191 = vld [vmem:[#allocation8 + $0x1e8] sm:$0xff]
      %v3192 = vld [vmem:[#allocation8 + $0x1f0] sm:$0xff]
      %v3193 = vld [vmem:[#allocation8 + $0x1f8] sm:$0xff]
      %v3194 = vld [vmem:[%s10] sm:$0x3]
      %v3196 = vlaneseq
      %v3197 = vshrl.u32 %v3196, 7
      %v3198 = vsub.s32 0, %v3197
      %v3199 = vrot.slane %v3194, %v3198
      %v3200 = vlaneseq
      %v3201 = vshrl.u32 %v3200, 7
      %v3202 = vsub.s32 1, %v3201
      %v3203 = vrot.slane %v3194, %v3202
      %v3270 = vunpack.c.l.b16 %v3130
      %v3271 = vunpack.c.h.b16 %v3130
      %v3272 = vunpack.c.l.b16 %v3131
      %v3273 = vunpack.c.h.b16 %v3131
      %v3274 = vunpack.c.l.b16 %v3132
      %v3275 = vunpack.c.h.b16 %v3132
      %v3276 = vunpack.c.l.b16 %v3133
      %v3277 = vunpack.c.h.b16 %v3133
      %v3278 = vunpack.c.l.b16 %v3134
      %v3279 = vunpack.c.h.b16 %v3134
      %v3280 = vunpack.c.l.b16 %v3135
      %v3281 = vunpack.c.h.b16 %v3135
      %v3282 = vunpack.c.l.b16 %v3136
      %v3283 = vunpack.c.h.b16 %v3136
      %v3284 = vunpack.c.l.b16 %v3137
      %v3285 = vunpack.c.h.b16 %v3137
      %v3286 = vunpack.c.l.b16 %v3138
      %v3287 = vunpack.c.h.b16 %v3138
      %v3288 = vunpack.c.l.b16 %v3139
      %v3289 = vunpack.c.h.b16 %v3139
      %v3290 = vunpack.c.l.b16 %v3140
      %v3291 = vunpack.c.h.b16 %v3140
      %v3292 = vunpack.c.l.b16 %v3141
      %v3293 = vunpack.c.h.b16 %v3141
      %v3294 = vunpack.c.l.b16 %v3142
      %v3295 = vunpack.c.h.b16 %v3142
      %v3296 = vunpack.c.l.b16 %v3143
      %v3297 = vunpack.c.h.b16 %v3143
      %v3298 = vunpack.c.l.b16 %v3144
      %v3299 = vunpack.c.h.b16 %v3144
      %v3300 = vunpack.c.l.b16 %v3145
      %v3301 = vunpack.c.h.b16 %v3145
      %v3302 = vunpack.c.l.b16 %v3146
      %v3303 = vunpack.c.h.b16 %v3146
      %v3304 = vunpack.c.l.b16 %v3147
      %v3305 = vunpack.c.h.b16 %v3147
      %v3306 = vunpack.c.l.b16 %v3148
      %v3307 = vunpack.c.h.b16 %v3148
      %v3308 = vunpack.c.l.b16 %v3149
      %v3309 = vunpack.c.h.b16 %v3149
      %v3310 = vunpack.c.l.b16 %v3150
      %v3311 = vunpack.c.h.b16 %v3150
      %v3312 = vunpack.c.l.b16 %v3151
      %v3313 = vunpack.c.h.b16 %v3151
      %v3314 = vunpack.c.l.b16 %v3152
      %v3315 = vunpack.c.h.b16 %v3152
      %v3316 = vunpack.c.l.b16 %v3153
      %v3317 = vunpack.c.h.b16 %v3153
      %v3318 = vunpack.c.l.b16 %v3154
      %v3319 = vunpack.c.h.b16 %v3154
      %v3320 = vunpack.c.l.b16 %v3155
      %v3321 = vunpack.c.h.b16 %v3155
      %v3322 = vunpack.c.l.b16 %v3156
      %v3323 = vunpack.c.h.b16 %v3156
      %v3324 = vunpack.c.l.b16 %v3157
      %v3325 = vunpack.c.h.b16 %v3157
      %v3326 = vunpack.c.l.b16 %v3158
      %v3327 = vunpack.c.h.b16 %v3158
      %v3328 = vunpack.c.l.b16 %v3159
      %v3329 = vunpack.c.h.b16 %v3159
      %v3330 = vunpack.c.l.b16 %v3160
      %v3331 = vunpack.c.h.b16 %v3160
      %v3332 = vunpack.c.l.b16 %v3161
      %v3333 = vunpack.c.h.b16 %v3161
      %v3334 = vunpack.c.l.b16 %v3162
      %v3335 = vunpack.c.h.b16 %v3162
      %v3336 = vunpack.c.l.b16 %v3163
      %v3337 = vunpack.c.h.b16 %v3163
      %v3338 = vunpack.c.l.b16 %v3164
      %v3339 = vunpack.c.h.b16 %v3164
      %v3340 = vunpack.c.l.b16 %v3165
      %v3341 = vunpack.c.h.b16 %v3165
      %v3342 = vunpack.c.l.b16 %v3166
      %v3343 = vunpack.c.h.b16 %v3166
      %v3344 = vunpack.c.l.b16 %v3167
      %v3345 = vunpack.c.h.b16 %v3167
      %v3346 = vunpack.c.l.b16 %v3168
      %v3347 = vunpack.c.h.b16 %v3168
      %v3348 = vunpack.c.l.b16 %v3169
      %v3349 = vunpack.c.h.b16 %v3169
      %v3350 = vunpack.c.l.b16 %v3170
      %v3351 = vunpack.c.h.b16 %v3170
      %v3352 = vunpack.c.l.b16 %v3171
      %v3353 = vunpack.c.h.b16 %v3171
      %v3354 = vunpack.c.l.b16 %v3172
      %v3355 = vunpack.c.h.b16 %v3172
      %v3356 = vunpack.c.l.b16 %v3173
      %v3357 = vunpack.c.h.b16 %v3173
      %v3358 = vunpack.c.l.b16 %v3174
      %v3359 = vunpack.c.h.b16 %v3174
      %v3360 = vunpack.c.l.b16 %v3175
      %v3361 = vunpack.c.h.b16 %v3175
      %v3362 = vunpack.c.l.b16 %v3176
      %v3363 = vunpack.c.h.b16 %v3176
      %v3364 = vunpack.c.l.b16 %v3177
      %v3365 = vunpack.c.h.b16 %v3177
      %v3366 = vunpack.c.l.b16 %v3178
      %v3367 = vunpack.c.h.b16 %v3178
      %v3368 = vunpack.c.l.b16 %v3179
      %v3369 = vunpack.c.h.b16 %v3179
      %v3370 = vunpack.c.l.b16 %v3180
      %v3371 = vunpack.c.h.b16 %v3180
      %v3372 = vunpack.c.l.b16 %v3181
      %v3373 = vunpack.c.h.b16 %v3181
      %v3374 = vunpack.c.l.b16 %v3182
      %v3375 = vunpack.c.h.b16 %v3182
      %v3376 = vunpack.c.l.b16 %v3183
      %v3377 = vunpack.c.h.b16 %v3183
      %v3378 = vunpack.c.l.b16 %v3184
      %v3379 = vunpack.c.h.b16 %v3184
      %v3380 = vunpack.c.l.b16 %v3185
      %v3381 = vunpack.c.h.b16 %v3185
      %v3382 = vunpack.c.l.b16 %v3186
      %v3383 = vunpack.c.h.b16 %v3186
      %v3384 = vunpack.c.l.b16 %v3187
      %v3385 = vunpack.c.h.b16 %v3187
      %v3386 = vunpack.c.l.b16 %v3188
      %v3387 = vunpack.c.h.b16 %v3188
      %v3388 = vunpack.c.l.b16 %v3189
      %v3389 = vunpack.c.h.b16 %v3189
      %v3390 = vunpack.c.l.b16 %v3190
      %v3391 = vunpack.c.h.b16 %v3190
      %v3392 = vunpack.c.l.b16 %v3191
      %v3393 = vunpack.c.h.b16 %v3191
      %v3394 = vunpack.c.l.b16 %v3192
      %v3395 = vunpack.c.h.b16 %v3192
      %v3396 = vunpack.c.l.b16 %v3193
      %v3397 = vunpack.c.h.b16 %v3193
      %v3398 = vpack.c.b16 %v3272, %v3270
      %v3399 = vpack.c.b16 %v3273, %v3271
      %v3400 = vpack.c.b16 %v3276, %v3274
      %v3401 = vpack.c.b16 %v3277, %v3275
      %v3402 = vpack.c.b16 %v3280, %v3278
      %v3403 = vpack.c.b16 %v3281, %v3279
      %v3404 = vpack.c.b16 %v3284, %v3282
      %v3405 = vpack.c.b16 %v3285, %v3283
      %v3406 = vpack.c.b16 %v3288, %v3286
      %v3407 = vpack.c.b16 %v3289, %v3287
      %v3408 = vpack.c.b16 %v3292, %v3290
      %v3409 = vpack.c.b16 %v3293, %v3291
      %v3410 = vpack.c.b16 %v3296, %v3294
      %v3411 = vpack.c.b16 %v3297, %v3295
      %v3412 = vpack.c.b16 %v3300, %v3298
      %v3413 = vpack.c.b16 %v3301, %v3299
      %v3414 = vpack.c.b16 %v3304, %v3302
      %v3415 = vpack.c.b16 %v3305, %v3303
      %v3416 = vpack.c.b16 %v3308, %v3306
      %v3417 = vpack.c.b16 %v3309, %v3307
      %v3418 = vpack.c.b16 %v3312, %v3310
      %v3419 = vpack.c.b16 %v3313, %v3311
      %v3420 = vpack.c.b16 %v3316, %v3314
      %v3421 = vpack.c.b16 %v3317, %v3315
      %v3422 = vpack.c.b16 %v3320, %v3318
      %v3423 = vpack.c.b16 %v3321, %v3319
      %v3424 = vpack.c.b16 %v3324, %v3322
      %v3425 = vpack.c.b16 %v3325, %v3323
      %v3426 = vpack.c.b16 %v3328, %v3326
      %v3427 = vpack.c.b16 %v3329, %v3327
      %v3428 = vpack.c.b16 %v3332, %v3330
      %v3429 = vpack.c.b16 %v3333, %v3331
      %v3430 = vpack.c.b16 %v3336, %v3334
      %v3431 = vpack.c.b16 %v3337, %v3335
      %v3432 = vpack.c.b16 %v3340, %v3338
      %v3433 = vpack.c.b16 %v3341, %v3339
      %v3434 = vpack.c.b16 %v3344, %v3342
      %v3435 = vpack.c.b16 %v3345, %v3343
      %v3436 = vpack.c.b16 %v3348, %v3346
      %v3437 = vpack.c.b16 %v3349, %v3347
      %v3438 = vpack.c.b16 %v3352, %v3350
      %v3439 = vpack.c.b16 %v3353, %v3351
      %v3440 = vpack.c.b16 %v3356, %v3354
      %v3441 = vpack.c.b16 %v3357, %v3355
      %v3442 = vpack.c.b16 %v3360, %v3358
      %v3443 = vpack.c.b16 %v3361, %v3359
      %v3444 = vpack.c.b16 %v3364, %v3362
      %v3445 = vpack.c.b16 %v3365, %v3363
      %v3446 = vpack.c.b16 %v3368, %v3366
      %v3447 = vpack.c.b16 %v3369, %v3367
      %v3448 = vpack.c.b16 %v3372, %v3370
      %v3449 = vpack.c.b16 %v3373, %v3371
      %v3450 = vpack.c.b16 %v3376, %v3374
      %v3451 = vpack.c.b16 %v3377, %v3375
      %v3452 = vpack.c.b16 %v3380, %v3378
      %v3453 = vpack.c.b16 %v3381, %v3379
      %v3454 = vpack.c.b16 %v3384, %v3382
      %v3455 = vpack.c.b16 %v3385, %v3383
      %v3456 = vpack.c.b16 %v3388, %v3386
      %v3457 = vpack.c.b16 %v3389, %v3387
      %v3458 = vpack.c.b16 %v3392, %v3390
      %v3459 = vpack.c.b16 %v3393, %v3391
      %v3460 = vpack.c.b16 %v3396, %v3394
      %v3461 = vpack.c.b16 %v3397, %v3395
      %3526 = vmatprep.subr.bf16.mxu0 %v3399
      %3527 = vmatpush1.bf16.msra.mxu0 %v3398
      %3528 = vmatprep.subr.bf16.mxu0 %v3401
      %3529 = vmatpush1.bf16.msra.mxu0 %v3400
      %3530 = vmatprep.subr.bf16.mxu0 %v3403
      %3531 = vmatpush1.bf16.msra.mxu0 %v3402
      %3532 = vmatprep.subr.bf16.mxu0 %v3405
      %3533 = vmatpush1.bf16.msra.mxu0 %v3404
      %3534 = vmatprep.subr.bf16.mxu0 %v3407
      %3535 = vmatpush1.bf16.msra.mxu0 %v3406
      %3536 = vmatprep.subr.bf16.mxu0 %v3409
      %3537 = vmatpush1.bf16.msra.mxu0 %v3408
      %3538 = vmatprep.subr.bf16.mxu0 %v3411
      %3539 = vmatpush1.bf16.msra.mxu0 %v3410
      %3540 = vmatprep.subr.bf16.mxu0 %v3413
      %3541 = vmatpush1.bf16.msra.mxu0 %v3412
      %3542 = vmatprep.subr.bf16.mxu0 %v3415
      %3543 = vmatpush1.bf16.msra.mxu0 %v3414
      %3544 = vmatprep.subr.bf16.mxu0 %v3417
      %3545 = vmatpush1.bf16.msra.mxu0 %v3416
      %3546 = vmatprep.subr.bf16.mxu0 %v3419
      %3547 = vmatpush1.bf16.msra.mxu0 %v3418
      %3548 = vmatprep.subr.bf16.mxu0 %v3421
      %3549 = vmatpush1.bf16.msra.mxu0 %v3420
      %3550 = vmatprep.subr.bf16.mxu0 %v3423
      %3551 = vmatpush1.bf16.msra.mxu0 %v3422
      %3552 = vmatprep.subr.bf16.mxu0 %v3425
      %3553 = vmatpush1.bf16.msra.mxu0 %v3424
      %3554 = vmatprep.subr.bf16.mxu0 %v3427
      %3555 = vmatpush1.bf16.msra.mxu0 %v3426
      %3556 = vmatprep.subr.bf16.mxu0 %v3429
      %3557 = vmatpush1.bf16.msra.mxu0 %v3428
      %3558 = vmatprep.mubr.bf16.mxu0 %v3127
      %3559 = vmatmul.mubr.bf16.gmra.mrb[0].mxu0 %v3126
      %v3560 = vpop.f32.mrb[0].mxu0
      %v3561 = vadd.f32 %v3199, %v3560
      %v3562 = vpop.f32.mrb[0].mxu0
      %v3563 = vadd.f32 %v3203, %v3562
      %v3564 = vpop.f32.mrb[0].mxu0
      %v3565 = vpop.f32.mrb[0].mxu0
      %3566 = vdwg.mxu0
      %3567 = vmatprep.subr.bf16.mxu0 %v3431
      %3568 = vmatpush1.bf16.msra.mxu0 %v3430
      %3569 = vmatprep.subr.bf16.mxu0 %v3433
      %3570 = vmatpush1.bf16.msra.mxu0 %v3432
      %3571 = vmatprep.subr.bf16.mxu0 %v3435
      %3572 = vmatpush1.bf16.msra.mxu0 %v3434
      %3573 = vmatprep.subr.bf16.mxu0 %v3437
      %3574 = vmatpush1.bf16.msra.mxu0 %v3436
      %3575 = vmatprep.subr.bf16.mxu0 %v3439
      %3576 = vmatpush1.bf16.msra.mxu0 %v3438
      %3577 = vmatprep.subr.bf16.mxu0 %v3441
      %3578 = vmatpush1.bf16.msra.mxu0 %v3440
      %3579 = vmatprep.subr.bf16.mxu0 %v3443
      %3580 = vmatpush1.bf16.msra.mxu0 %v3442
      %3581 = vmatprep.subr.bf16.mxu0 %v3445
      %3582 = vmatpush1.bf16.msra.mxu0 %v3444
      %3583 = vmatprep.subr.bf16.mxu0 %v3447
      %3584 = vmatpush1.bf16.msra.mxu0 %v3446
      %3585 = vmatprep.subr.bf16.mxu0 %v3449
      %3586 = vmatpush1.bf16.msra.mxu0 %v3448
      %3587 = vmatprep.subr.bf16.mxu0 %v3451
      %3588 = vmatpush1.bf16.msra.mxu0 %v3450
      %3589 = vmatprep.subr.bf16.mxu0 %v3453
      %3590 = vmatpush1.bf16.msra.mxu0 %v3452
      %3591 = vmatprep.subr.bf16.mxu0 %v3455
      %3592 = vmatpush1.bf16.msra.mxu0 %v3454
      %3593 = vmatprep.subr.bf16.mxu0 %v3457
      %3594 = vmatpush1.bf16.msra.mxu0 %v3456
      %3595 = vmatprep.subr.bf16.mxu0 %v3459
      %3596 = vmatpush1.bf16.msra.mxu0 %v3458
      %3597 = vmatprep.subr.bf16.mxu0 %v3461
      %3598 = vmatpush1.bf16.msra.mxu0 %v3460
      %3599 = vmatprep.mubr.bf16.mxu0 %v3129
      %3600 = vmatmul.mubr.bf16.gmra.mrb[0].mxu0 %v3128
      %v3601 = vpop.f32.mrb[0].mxu0
      %v3602 = vadd.f32 %v3561, %v3601
      %v3603 = vpop.f32.mrb[0].mxu0
      %v3604 = vadd.f32 %v3563, %v3603
      %v3605 = vpop.f32.mrb[0].mxu0
      %v3606 = vpop.f32.mrb[0].mxu0
      %3607 = vdwg.mxu0
      %v3608 = vmax.f32 %v3602, 0.0
      %v3609 = vmax.f32 %v3604, 0.0
      %v3610 = vpack.c.bf16 %v3608, %v3608
      %v3611 = vpack.c.bf16 %v3609, %v3609
      %v3612 = vld [vmem:[%s11] sm:$0xf]
      %v3613 = vld [vmem:[%s11 + $0x4] sm:$0xf]
      %v3614 = vld [vmem:[%s11 + $0x8] sm:$0xf]
      %v3615 = vld [vmem:[%s11 + $0xc] sm:$0xf]
      %v3616 = vld [vmem:[%s11 + $0x10] sm:$0xf]
      %v3617 = vld [vmem:[%s11 + $0x14] sm:$0xf]
      %v3618 = vld [vmem:[%s11 + $0x18] sm:$0xf]
      %v3619 = vld [vmem:[%s11 + $0x1c] sm:$0xf]
      %v3620 = vld [vmem:[%s11 + $0x20] sm:$0xf]
      %v3621 = vld [vmem:[%s11 + $0x24] sm:$0xf]
      %v3622 = vld [vmem:[%s11 + $0x28] sm:$0xf]
      %v3623 = vld [vmem:[%s11 + $0x2c] sm:$0xf]
      %v3624 = vld [vmem:[%s11 + $0x30] sm:$0xf]
      %v3625 = vld [vmem:[%s11 + $0x34] sm:$0xf]
      %v3626 = vld [vmem:[%s11 + $0x38] sm:$0xf]
      %v3627 = vld [vmem:[%s11 + $0x3c] sm:$0xf]
      %v3628 = vld [vmem:[%s11 + $0x40] sm:$0xf]
      %v3629 = vld [vmem:[%s11 + $0x44] sm:$0xf]
      %v3630 = vld [vmem:[%s11 + $0x48] sm:$0xf]
      %v3631 = vld [vmem:[%s11 + $0x4c] sm:$0xf]
      %v3632 = vld [vmem:[%s11 + $0x50] sm:$0xf]
      %v3633 = vld [vmem:[%s11 + $0x54] sm:$0xf]
      %v3634 = vld [vmem:[%s11 + $0x58] sm:$0xf]
      %v3635 = vld [vmem:[%s11 + $0x5c] sm:$0xf]
      %v3636 = vld [vmem:[%s11 + $0x60] sm:$0xf]
      %v3637 = vld [vmem:[%s11 + $0x64] sm:$0xf]
      %v3638 = vld [vmem:[%s11 + $0x68] sm:$0xf]
      %v3639 = vld [vmem:[%s11 + $0x6c] sm:$0xf]
      %v3640 = vld [vmem:[%s11 + $0x70] sm:$0xf]
      %v3641 = vld [vmem:[%s11 + $0x74] sm:$0xf]
      %v3642 = vld [vmem:[%s11 + $0x78] sm:$0xf]
      %v3643 = vld [vmem:[%s11 + $0x7c] sm:$0xf]
      %v3644 = vld [vmem:[%s12] sm:$0x1]
      %v3646 = vlaneseq
      %v3647 = vshrl.u32 %v3646, 7
      %v3648 = vsub.s32 0, %v3647
      %v3649 = vrot.slane %v3644, %v3648
      %v3683 = vunpack.c.l.b16 %v3612
      %v3684 = vunpack.c.l.b16 %v3613
      %v3685 = vunpack.c.l.b16 %v3614
      %v3686 = vunpack.c.l.b16 %v3615
      %v3687 = vunpack.c.l.b16 %v3616
      %v3688 = vunpack.c.l.b16 %v3617
      %v3689 = vunpack.c.l.b16 %v3618
      %v3690 = vunpack.c.l.b16 %v3619
      %v3691 = vunpack.c.l.b16 %v3620
      %v3692 = vunpack.c.l.b16 %v3621
      %v3693 = vunpack.c.l.b16 %v3622
      %v3694 = vunpack.c.l.b16 %v3623
      %v3695 = vunpack.c.l.b16 %v3624
      %v3696 = vunpack.c.l.b16 %v3625
      %v3697 = vunpack.c.l.b16 %v3626
      %v3698 = vunpack.c.l.b16 %v3627
      %v3699 = vunpack.c.l.b16 %v3628
      %v3700 = vunpack.c.l.b16 %v3629
      %v3701 = vunpack.c.l.b16 %v3630
      %v3702 = vunpack.c.l.b16 %v3631
      %v3703 = vunpack.c.l.b16 %v3632
      %v3704 = vunpack.c.l.b16 %v3633
      %v3705 = vunpack.c.l.b16 %v3634
      %v3706 = vunpack.c.l.b16 %v3635
      %v3707 = vunpack.c.l.b16 %v3636
      %v3708 = vunpack.c.l.b16 %v3637
      %v3709 = vunpack.c.l.b16 %v3638
      %v3710 = vunpack.c.l.b16 %v3639
      %v3711 = vunpack.c.l.b16 %v3640
      %v3712 = vunpack.c.l.b16 %v3641
      %v3713 = vunpack.c.l.b16 %v3642
      %v3714 = vunpack.c.l.b16 %v3643
      %v3715 = vpack.c.b16 %v3684, %v3683
      %v3716 = vpack.c.b16 %v3686, %v3685
      %v3717 = vpack.c.b16 %v3688, %v3687
      %v3718 = vpack.c.b16 %v3690, %v3689
      %v3719 = vpack.c.b16 %v3692, %v3691
      %v3720 = vpack.c.b16 %v3694, %v3693
      %v3721 = vpack.c.b16 %v3696, %v3695
      %v3722 = vpack.c.b16 %v3698, %v3697
      %v3723 = vpack.c.b16 %v3700, %v3699
      %v3724 = vpack.c.b16 %v3702, %v3701
      %v3725 = vpack.c.b16 %v3704, %v3703
      %v3726 = vpack.c.b16 %v3706, %v3705
      %v3727 = vpack.c.b16 %v3708, %v3707
      %v3728 = vpack.c.b16 %v3710, %v3709
      %v3729 = vpack.c.b16 %v3712, %v3711
      %v3730 = vpack.c.b16 %v3714, %v3713
      %3747 = vmatprep.subr.bf16.mxu0 0
      %3748 = vmatpush1.bf16.msra.mxu0 %v3715
      %3749 = vmatprep.subr.bf16.mxu0 0
      %3750 = vmatpush1.bf16.msra.mxu0 %v3716
      %3751 = vmatprep.subr.bf16.mxu0 0
      %3752 = vmatpush1.bf16.msra.mxu0 %v3717
      %3753 = vmatprep.subr.bf16.mxu0 0
      %3754 = vmatpush1.bf16.msra.mxu0 %v3718
      %3755 = vmatprep.subr.bf16.mxu0 0
      %3756 = vmatpush1.bf16.msra.mxu0 %v3719
      %3757 = vmatprep.subr.bf16.mxu0 0
      %3758 = vmatpush1.bf16.msra.mxu0 %v3720
      %3759 = vmatprep.subr.bf16.mxu0 0
      %3760 = vmatpush1.bf16.msra.mxu0 %v3721
      %3761 = vmatprep.subr.bf16.mxu0 0
      %3762 = vmatpush1.bf16.msra.mxu0 %v3722
      %3763 = vmatprep.subr.bf16.mxu0 0
      %3764 = vmatpush1.bf16.msra.mxu0 %v3723
      %3765 = vmatprep.subr.bf16.mxu0 0
      %3766 = vmatpush1.bf16.msra.mxu0 %v3724
      %3767 = vmatprep.subr.bf16.mxu0 0
      %3768 = vmatpush1.bf16.msra.mxu0 %v3725
      %3769 = vmatprep.subr.bf16.mxu0 0
      %3770 = vmatpush1.bf16.msra.mxu0 %v3726
      %3771 = vmatprep.subr.bf16.mxu0 0
      %3772 = vmatpush1.bf16.msra.mxu0 %v3727
      %3773 = vmatprep.subr.bf16.mxu0 0
      %3774 = vmatpush1.bf16.msra.mxu0 %v3728
      %3775 = vmatprep.subr.bf16.mxu0 0
      %3776 = vmatpush1.bf16.msra.mxu0 %v3729
      %3777 = vmatprep.subr.bf16.mxu0 0
      %3778 = vmatpush1.bf16.msra.mxu0 %v3730
      %3779 = vmatprep.mubr.bf16.mxu0 %v3611
      %3780 = vmatmul.mubr.bf16.gmra.mrb[0].mxu0 %v3610
      %v3781 = vpop.f32.mrb[0].mxu0
      %v3782 = vadd.f32 %v3649, %v3781
      %v3783 = vpop.f32.mrb[0].mxu0
      %v3784 = vpop.f32.mrb[0].mxu0
      %v3785 = vpop.f32.mrb[0].mxu0
      %3786 = vdwg.mxu0
      %v3787 = vld [vmem:[%s13] sm:$0x1]
      %v3789 = vlaneseq
      %v3790 = vshrl.u32 %v3789, 7
      %v3791 = vsub.s32 0, %v3790
      %v3792 = vrot.slane %v3787, %v3791
      %v3794 = vadd.f32 %v3782, %v3792
      %vm3795 = vcmask 123904
      %3796 = vst.msk [vmem:[#allocation9] sm:$0x3] %vm3795, %v3794
    $region77: #{tpu_custom_call.1} parent=1 // pred_fallthru
      _
    // Predicated region
    $region78: #{tpu_custom_call.1} parent=1 // pred_check
      _
    $region79: #{tpu_custom_call.1} parent=1 // pred_check_branch
      %3798 = sbr.rel (0) target = $region81
    $region80: #{tpu_custom_call.1} parent=1 // pred_region
      %s3800 = ssub.s32 32, 32
      %3801 = vsyncadd [#allocation5], %s3800
      %s3803 = sshll.u32 [#allocation9], 4
      %s3804 = int_to_ptr.vmem [resolvable:$true] %s3803
      %3806 = dma.vmem_to_hbm [thread:$0]  %s3804, 32, %s14, [#allocation5]
    $region81: #{tpu_custom_call.1} parent=1 // pred_fallthru
      _
    // Predicated region
    $region82: #{tpu_custom_call.1} parent=1 // pred_check
      _
    $region83: #{tpu_custom_call.1} parent=1 // pred_check_branch
      %3808 = sbr.rel (0) target = $region85
    $region84: #{tpu_custom_call.1} parent=1 // pred_region
      %3809 = dma.done [#allocation5], 32
    $region85: #{tpu_custom_call.1} parent=1 // pred_fallthru
      _
    %3810 = vsyncpa [#allocation4], 1
    %3811 = vsyncpa [#allocation7], 1
    %3812 = vsyncpa [#allocation5], 1

</llo_original>
